<compile_context>
chip_gen: v7x
topology: tpu7x:2x2x1
jax: 0.10.0
libtpu: 0.0.40
codegen_flags: <defaults>
</compile_context>

<pallas_src>
import functools

import jax
import jax.numpy as jnp
import numpy as np
from jax.experimental import pallas as pl
from jax.experimental.pallas import tpu as pltpu

EPS = 1e-5
VMEM_LIMIT = 48 * 1024 * 1024   # stays inside v7x's 64 MiB physical VMEM per TC


def _mm(a, b):
    return jnp.dot(a, b, preferred_element_type=jnp.float32)


def _pick_tile(n, target):
    """Largest divisor of n that is <= target (token-tile size)."""
    t = min(n, target)
    while n % t:
        t -= 1
    return t


# ----------------------------------------------------------------------------
# kernel 1: MaxPool2d(2) + conv_S(1x1) + conv_Y(1x1) + partial BN statistics
# ----------------------------------------------------------------------------
def pool_proj_kernel(s4_ref, y_ref, w_s_ref, w_y_ref,
                     z_s_ref, z_y_ref, stats_ref):
    c = w_s_ref.shape[0]
    s4 = s4_ref[...]                                    # (T, 4*C) pool-window packed
    pooled = jnp.maximum(jnp.maximum(s4[:, 0 * c:1 * c], s4[:, 1 * c:2 * c]),
                         jnp.maximum(s4[:, 2 * c:3 * c], s4[:, 3 * c:4 * c]))
    z_s = _mm(pooled, w_s_ref[...])                     # (T, E)
    z_y = _mm(y_ref[...], w_y_ref[...])                 # (T, E)
    z_s_ref[...] = z_s
    z_y_ref[...] = z_y
    # single-pass partial BN statistics (summed across tiles in cheap XLA glue)
    stats_ref[0, 0:1, :] = jnp.sum(z_s, axis=0, keepdims=True)
    stats_ref[0, 1:2, :] = jnp.sum(z_s * z_s, axis=0, keepdims=True)
    stats_ref[0, 2:3, :] = jnp.sum(z_y, axis=0, keepdims=True)
    stats_ref[0, 3:4, :] = jnp.sum(z_y * z_y, axis=0, keepdims=True)


# ----------------------------------------------------------------------------
# kernel 2: BN+ReLU, multi-head cross attention (q=k=y, v=s), output projection
#           accumulated over heads, fused upsample 1x1 conv + its BN stats.
#           grid = (B, num_heads): batch "parallel", heads "arbitrary".
# ----------------------------------------------------------------------------
def attn_upconv_kernel(z_s_ref, z_y_ref, stats_ref,
                       g_s_ref, b_s_ref, g_y_ref, b_y_ref,
                       wq_ref, wk_ref, wv_ref, wo_ref, w_up_ref,
                       z_up_ref, stats_up_ref,
                       s_tok_ref, y_tok_ref, acc_ref,
                       *, num_heads, n_tokens):
    h = pl.program_id(1)
    inv_n = 1.0 / n_tokens

    @pl.when(h == 0)
    def _():
        acc_ref[...] = jnp.zeros_like(acc_ref)
        stats = stats_ref[...]
        mean_s = stats[0:1] * inv_n
        var_s = stats[1:2] * inv_n - mean_s * mean_s
        mean_y = stats[2:3] * inv_n
        var_y = stats[3:4] * inv_n - mean_y * mean_y
        s_tok_ref[...] = jnp.maximum(
            (z_s_ref[0] - mean_s) * jax.lax.rsqrt(var_s + EPS) * g_s_ref[...]
            + b_s_ref[...], 0.0)
        y_tok_ref[...] = jnp.maximum(
            (z_y_ref[0] - mean_y) * jax.lax.rsqrt(var_y + EPS) * g_y_ref[...]
            + b_y_ref[...], 0.0)

    hd = wq_ref.shape[-1]
    scale = 1.0 / (hd ** 0.5)
    y_tok = y_tok_ref[...]
    q = _mm(y_tok, wq_ref[0]) * scale                   # (L, hd)
    k = _mm(y_tok, wk_ref[0])                           # (L, hd)
    v = _mm(s_tok_ref[...], wv_ref[0])                  # (L, hd)

    # TODO(synk): for L beyond a few thousand tokens switch to a KV-tiled
    # flash-attention (online softmax) loop instead of full (L, L) logits.
    logits = jax.lax.dot_general(q, k, (((1,), (1,)), ((), ())),
                                 preferred_element_type=jnp.float32)
    m = jnp.max(logits, axis=-1, keepdims=True)
    p = jnp.exp(logits - m)
    p = p * pl.reciprocal(jnp.sum(p, axis=-1, keepdims=True), approx=True)
    ctx = _mm(p, v)                                     # (L, hd)
    acc_ref[...] += _mm(ctx, wo_ref[0])                 # head-accumulated out-proj

    @pl.when(h == num_heads - 1)
    def _():
        z_up = _mm(acc_ref[...], w_up_ref[...])         # fused upsample 1x1 conv
        z_up_ref[0] = z_up
        stats_up_ref[0, 0:1, :] = jnp.sum(z_up, axis=0, keepdims=True)
        stats_up_ref[0, 1:2, :] = jnp.sum(z_up * z_up, axis=0, keepdims=True)


# ----------------------------------------------------------------------------
# kernel 3: BN + Sigmoid + ConvTranspose2d(2, stride 2) as (E -> 4E) matmul,
#           fused with the final multiply by s_enc (same packed layout).
# ----------------------------------------------------------------------------
def up_deconv_kernel(z_ref, stats_ref, g_ref, b_ref, w_dec_ref, senc_ref, o_ref,
                     *, n_tokens):
    inv_n = 1.0 / n_tokens
    stats = stats_ref[...]
    mean = stats[0:1] * inv_n
    var = stats[1:2] * inv_n - mean * mean
    a = jax.nn.sigmoid((z_ref[...] - mean) * jax.lax.rsqrt(var + EPS) * g_ref[...]
                       + b_ref[...])
    o_ref[...] = _mm(a, w_dec_ref[...]) * senc_ref[...]


# ----------------------------------------------------------------------------
# wrapper
# ----------------------------------------------------------------------------
def multi_head_cross_attention(s_nchw, y_nchw, p, *, num_heads, token_tile=1024):
    B, C, H, W = s_nchw.shape
    _, C_Y, Hy, Wy = y_nchw.shape
    Hp, Wp = H // 2, W // 2
    assert (Hy, Wy) == (Hp, Wp), "y must be at half the spatial size of s"
    E = C
    L = Hp * Wp
    N = B * L
    hd = E // num_heads

    # pool-window-packed layout of s: token n=(b,hp,wp), column (ki*2+kj)*C + c.
    # Built ONCE and shared by the max-pool (K1) and the deconv * s_enc multiply
    # (K3) — no 4x strided-slice copies of s.
    s_pack = (jnp.transpose(s_nchw, (0, 2, 3, 1))
              .reshape(B, Hp, 2, Wp, 2, C)
              .transpose(0, 1, 3, 2, 4, 5)
              .reshape(N, 4 * C))
    y_flat = jnp.transpose(y_nchw, (0, 2, 3, 1)).reshape(N, C_Y)

    TN = _pick_tile(N, token_tile)
    nt = N // TN

    # ---- K1: pool + 1x1 projections + partial BN stats (token-tiled) -------
    z_s, z_y, stats_part = pl.pallas_call(
        pool_proj_kernel,
        out_shape=(jax.ShapeDtypeStruct((N, E), jnp.float32),
                   jax.ShapeDtypeStruct((N, E), jnp.float32),
                   jax.ShapeDtypeStruct((nt, 4, E), jnp.float32)),
        grid=(nt,),
        in_specs=[pl.BlockSpec((TN, 4 * C), lambda i: (i, 0)),
                  pl.BlockSpec((TN, C_Y), lambda i: (i, 0)),
                  pl.BlockSpec((C, E), lambda i: (0, 0)),
                  pl.BlockSpec((C_Y, E), lambda i: (0, 0))],
        out_specs=(pl.BlockSpec((TN, E), lambda i: (i, 0)),
                   pl.BlockSpec((TN, E), lambda i: (i, 0)),
                   pl.BlockSpec((1, 4, E), lambda i: (i, 0, 0))),
        compiler_params=pltpu.CompilerParams(
            dimension_semantics=("parallel",),
            vmem_limit_bytes=VMEM_LIMIT),
    )(s_pack, y_flat, p["w_s"], p["w_y"])
    stats = jnp.sum(stats_part, axis=0)                 # (4, E) global BN stats

    # head-major attention weights (head slicing done by BlockSpec, not in-kernel)
    wq_h = p["wq_t"].reshape(E, num_heads, hd).transpose(1, 0, 2)
    wk_h = p["wk_t"].reshape(E, num_heads, hd).transpose(1, 0, 2)
    wv_h = p["wv_t"].reshape(E, num_heads, hd).transpose(1, 0, 2)
    wo_h = p["wo_t"].reshape(num_heads, hd, E)

    # ---- K2: BN+ReLU + MHA + output projection + upsample 1x1 conv ----------
    z_up3, stats_up_part = pl.pallas_call(
        functools.partial(attn_upconv_kernel, num_heads=num_heads, n_tokens=N),
        out_shape=(jax.ShapeDtypeStruct((B, L, E), jnp.float32),
                   jax.ShapeDtypeStruct((B, 2, E), jnp.float32)),
        grid=(B, num_heads),
        in_specs=[pl.BlockSpec((1, L, E), lambda b, h: (b, 0, 0)),   # z_s
                  pl.BlockSpec((1, L, E), lambda b, h: (b, 0, 0)),   # z_y
                  pl.BlockSpec((4, E), lambda b, h: (0, 0)),         # BN stats
                  pl.BlockSpec((1, E), lambda b, h: (0, 0)),         # gamma_s
                  pl.BlockSpec((1, E), lambda b, h: (0, 0)),         # beta_s
                  pl.BlockSpec((1, E), lambda b, h: (0, 0)),         # gamma_y
                  pl.BlockSpec((1, E), lambda b, h: (0, 0)),         # beta_y
                  pl.BlockSpec((1, E, hd), lambda b, h: (h, 0, 0)),  # Wq head
                  pl.BlockSpec((1, E, hd), lambda b, h: (h, 0, 0)),  # Wk head
                  pl.BlockSpec((1, E, hd), lambda b, h: (h, 0, 0)),  # Wv head
                  pl.BlockSpec((1, hd, E), lambda b, h: (h, 0, 0)),  # Wo head
                  pl.BlockSpec((E, E), lambda b, h: (0, 0))],        # W_up
        out_specs=(pl.BlockSpec((1, L, E), lambda b, h: (b, 0, 0)),
                   pl.BlockSpec((1, 2, E), lambda b, h: (b, 0, 0))),
        scratch_shapes=[pltpu.VMEM((L, E), jnp.float32),   # s_tok
                        pltpu.VMEM((L, E), jnp.float32),   # y_tok
                        pltpu.VMEM((L, E), jnp.float32)],  # head-accumulated proj
        compiler_params=pltpu.CompilerParams(
            dimension_semantics=("parallel", "arbitrary"),
            vmem_limit_bytes=VMEM_LIMIT),
    )(z_s.reshape(B, L, E), z_y.reshape(B, L, E), stats,
      p["bn_s_g"], p["bn_s_b"], p["bn_y_g"], p["bn_y_b"],
      wq_h, wk_h, wv_h, wo_h, p["w_up"])
    stats_up = jnp.sum(stats_up_part, axis=0)            # (2, E)

    # ---- K3: BN + Sigmoid + ConvTranspose2d(2,2) + multiply by s_enc --------
    # weight (Cin, Cout, 2, 2) -> (Cin, (ki*2+kj)*Cout + co): lane-dense 4*C output
    w_dec4 = jnp.transpose(p["w_dec"], (0, 2, 3, 1)).reshape(C, 4 * C)
    out_flat = pl.pallas_call(
        functools.partial(up_deconv_kernel, n_tokens=N),
        out_shape=jax.ShapeDtypeStruct((N, 4 * C), jnp.float32),
        grid=(nt,),
        in_specs=[pl.BlockSpec((TN, E), lambda i: (i, 0)),
                  pl.BlockSpec((2, E), lambda i: (0, 0)),
                  pl.BlockSpec((1, E), lambda i: (0, 0)),
                  pl.BlockSpec((1, E), lambda i: (0, 0)),
                  pl.BlockSpec((E, 4 * C), lambda i: (0, 0)),
                  pl.BlockSpec((TN, 4 * C), lambda i: (i, 0))],
        out_specs=pl.BlockSpec((TN, 4 * C), lambda i: (i, 0)),
        compiler_params=pltpu.CompilerParams(
            dimension_semantics=("parallel",),
            vmem_limit_bytes=VMEM_LIMIT),
    )(z_up3.reshape(N, E), stats_up, p["bn_up_g"], p["bn_up_b"], w_dec4, s_pack)

    out = (out_flat.reshape(B, Hp, Wp, 2, 2, C)
           .transpose(0, 1, 3, 2, 4, 5)
           .reshape(B, H, W, C)
           .transpose(0, 3, 1, 2))                       # back to NCHW
    return out


# ----------------------------------------------------------------------------
# pure-JAX reference (same math, no Pallas) for a correctness check
# ----------------------------------------------------------------------------
def reference(s_nchw, y_nchw, p, *, num_heads):
    B, C_S, H, W = s_nchw.shape
    Hp, Wp = H // 2, W // 2
    L, E = Hp * Wp, C_S
    N = B * L
    s_nhwc = jnp.transpose(s_nchw, (0, 2, 3, 1))
    y_nhwc = jnp.transpose(y_nchw, (0, 2, 3, 1))

    def bn(z, g, b):
        mu = z.mean(0, keepdims=True)
        var = ((z - mu) ** 2).mean(0, keepdims=True)
        return (z - mu) / jnp.sqrt(var + EPS) * g + b

    pooled = jnp.max(s_nhwc.reshape(B, Hp, 2, Wp, 2, C_S), axis=(2, 4)).reshape(N, C_S)
    s_tok = jnp.maximum(bn(pooled @ p["w_s"], p["bn_s_g"], p["bn_s_b"]), 0.0)
    y_tok = jnp.maximum(bn(y_nhwc.reshape(N, -1) @ p["w_y"], p["bn_y_g"], p["bn_y_b"]), 0.0)

    q = y_tok.reshape(B, L, E) @ p["wq_t"]
    k = y_tok.reshape(B, L, E) @ p["wk_t"]
    v = s_tok.reshape(B, L, E) @ p["wv_t"]
    hd = E // num_heads
    qh = q.reshape(B, L, num_heads, hd).transpose(0, 2, 1, 3) / jnp.sqrt(float(hd))
    kh = k.reshape(B, L, num_heads, hd).transpose(0, 2, 1, 3)
    vh = v.reshape(B, L, num_heads, hd).transpose(0, 2, 1, 3)
    a = jax.nn.softmax(jnp.einsum("bhqd,bhkd->bhqk", qh, kh), axis=-1)
    ctx = jnp.einsum("bhqk,bhkd->bhqd", a, vh).transpose(0, 2, 1, 3).reshape(B, L, E)
    attn = ctx @ p["wo_t"]

    up = jax.nn.sigmoid(bn(attn.reshape(N, E) @ p["w_up"], p["bn_up_g"], p["bn_up_b"]))
    w4 = jnp.transpose(p["w_dec"], (0, 2, 3, 1)).reshape(C_S, 4 * C_S)
    senc_r = (s_nhwc.reshape(B, Hp, 2, Wp, 2, C_S)
              .transpose(0, 1, 3, 2, 4, 5).reshape(N, 4 * C_S))
    out_flat = (up @ w4) * senc_r
    return (out_flat.reshape(B, Hp, Wp, 2, 2, C_S)
            .transpose(0, 1, 3, 2, 4, 5)
            .reshape(B, H, W, C_S)
            .transpose(0, 3, 1, 2))


# ----------------------------------------------------------------------------
if __name__ == "__main__":
    B, C_S, C_Y = 2, 32, 64
    H = W = 32
    Hp, Wp = H // 2, W // 2
    E, NUM_HEADS = C_S, 4

    key = jax.random.PRNGKey(0)
    ks = jax.random.split(key, 16)
    f32 = jnp.float32

    # deterministic synthetic parameters (conv weights stored as (Cin, Cout),
    # attention weights stored pre-transposed so kernels do x @ W^T).
    params = {
        "w_s":    0.3 * jax.random.normal(ks[0], (C_S, C_S), f32),
        "bn_s_g": 1.0 + 0.1 * jax.random.normal(ks[1], (1, C_S), f32),
        "bn_s_b": 0.1 * jax.random.normal(ks[2], (1, C_S), f32),
        "w_y":    0.3 * jax.random.normal(ks[3], (C_Y, C_S), f32),
        "bn_y_g": 1.0 + 0.1 * jax.random.normal(ks[4], (1, C_S), f32),
        "bn_y_b": 0.1 * jax.random.normal(ks[5], (1, C_S), f32),
        "wq_t":   0.3 * jax.random.normal(ks[6], (E, E), f32),
        "wk_t":   0.3 * jax.random.normal(ks[7], (E, E), f32),
        "wv_t":   0.3 * jax.random.normal(ks[8], (E, E), f32),
        "wo_t":   0.3 * jax.random.normal(ks[9], (E, E), f32),
        "w_up":   0.3 * jax.random.normal(ks[10], (C_S, C_S), f32),
        "bn_up_g": 1.0 + 0.1 * jax.random.normal(ks[11], (1, C_S), f32),
        "bn_up_b": 0.1 * jax.random.normal(ks[12], (1, C_S), f32),
        "w_dec":  0.3 * jax.random.normal(ks[13], (C_S, C_S, 2, 2), f32),
    }

    # PyTorch-style NCHW inputs: s (skip) full res, y half res.
    s = jax.random.normal(ks[14], (B, C_S, H, W), f32)
    y = jax.random.normal(ks[15], (B, C_Y, Hp, Wp), f32)

    with jax.default_matmul_precision("highest"):
        out = jax.block_until_ready(
            multi_head_cross_attention(s, y, params, num_heads=NUM_HEADS,
                                       token_tile=256))
        ref = jax.block_until_ready(reference(s, y, params, num_heads=NUM_HEADS))

    assert out.shape == s.shape, (out.shape, s.shape)
    np.testing.assert_allclose(np.asarray(out), np.asarray(ref), rtol=2e-3, atol=2e-3)
    print("KERNEL_OK")
</pallas_src>

<mosaic_0001>
module attributes {stable_mosaic.version = 11 : i64} {
  func.func @pool_proj_kernel(%arg0: i32, %arg1: memref<256x128xf32, #tpu.memory_space<vmem>>, %arg2: memref<256x64xf32, #tpu.memory_space<vmem>>, %arg3: memref<32x32xf32, #tpu.memory_space<vmem>>, %arg4: memref<64x32xf32, #tpu.memory_space<vmem>>, %arg5: memref<256x32xf32, #tpu.memory_space<vmem>>, %arg6: memref<256x32xf32, #tpu.memory_space<vmem>>, %arg7: memref<1x4x32xf32, #tpu.memory_space<vmem>>) attributes {dimension_semantics = [#tpu.dimension_semantics<parallel>], iteration_bounds = array<i64: 2>, scalar_prefetch = 0 : i64, scratch_operands = 0 : i64, tpu.core_type = #tpu.core_type<tc>, window_params = [{transform_indices = @transform_0, window_bounds = array<i64: 256, 128>}, {transform_indices = @transform_1, window_bounds = array<i64: 256, 64>}, {pipeline_mode = #tpu.pipeline_mode<synchronous>, transform_indices = @transform_2, window_bounds = array<i64: 32, 32>}, {pipeline_mode = #tpu.pipeline_mode<synchronous>, transform_indices = @transform_3, window_bounds = array<i64: 64, 32>}, {transform_indices = @transform_4, window_bounds = array<i64: 256, 32>}, {transform_indices = @transform_5, window_bounds = array<i64: 256, 32>}, {transform_indices = @transform_6, window_bounds = array<i64: 1, 4, 32>}]} {
    %c0 = arith.constant 0 : index
    %c0_0 = arith.constant 0 : index
    %0 = vector.load %arg1[%c0, %c0_0] : memref<256x128xf32, #tpu.memory_space<vmem>>, vector<256x128xf32>
    %1 = vector.extract_strided_slice %0 {offsets = [0, 0], sizes = [256, 32], strides = [1, 1]} : vector<256x128xf32> to vector<256x32xf32>
    %2 = vector.extract_strided_slice %0 {offsets = [0, 32], sizes = [256, 32], strides = [1, 1]} : vector<256x128xf32> to vector<256x32xf32>
    %3 = arith.maximumf %1, %2 : vector<256x32xf32>
    %4 = vector.extract_strided_slice %0 {offsets = [0, 64], sizes = [256, 32], strides = [1, 1]} : vector<256x128xf32> to vector<256x32xf32>
    %5 = vector.extract_strided_slice %0 {offsets = [0, 96], sizes = [256, 32], strides = [1, 1]} : vector<256x128xf32> to vector<256x32xf32>
    %6 = arith.maximumf %4, %5 : vector<256x32xf32>
    %7 = arith.maximumf %3, %6 : vector<256x32xf32>
    %c0_1 = arith.constant 0 : index
    %c0_2 = arith.constant 0 : index
    %8 = vector.load %arg3[%c0_1, %c0_2] : memref<32x32xf32, #tpu.memory_space<vmem>>, vector<32x32xf32>
    %cst = arith.constant dense<0.000000e+00> : vector<256x32xf32>
    %9 = tpu.matmul %7, %8, %cst {dimension_numbers = #tpu.dot_dimension_numbers<[1], [0], [0], [1], [0, 0, 1, 1], [], []>, precision = #tpu.contract_precision<fp32>} : vector<256x32xf32>, vector<32x32xf32>, vector<256x32xf32> -> vector<256x32xf32>
    %c0_3 = arith.constant 0 : index
    %c0_4 = arith.constant 0 : index
    %10 = vector.load %arg2[%c0_3, %c0_4] : memref<256x64xf32, #tpu.memory_space<vmem>>, vector<256x64xf32>
    %c0_5 = arith.constant 0 : index
    %c0_6 = arith.constant 0 : index
    %11 = vector.load %arg4[%c0_5, %c0_6] : memref<64x32xf32, #tpu.memory_space<vmem>>, vector<64x32xf32>
    %cst_7 = arith.constant dense<0.000000e+00> : vector<256x32xf32>
    %12 = tpu.matmul %10, %11, %cst_7 {dimension_numbers = #tpu.dot_dimension_numbers<[1], [0], [0], [1], [0, 0, 1, 1], [], []>, precision = #tpu.contract_precision<fp32>} : vector<256x64xf32>, vector<64x32xf32>, vector<256x32xf32> -> vector<256x32xf32>
    %c0_8 = arith.constant 0 : index
    %c0_9 = arith.constant 0 : index
    %13 = vector.load %arg5[%c0_8, %c0_9] : memref<256x32xf32, #tpu.memory_space<vmem>>, vector<256x32xf32>
    tpu.vector_store %arg5[%c0_8, %c0_9], %9 {strides = array<i32>} : memref<256x32xf32, #tpu.memory_space<vmem>>, vector<256x32xf32>,
    %c0_10 = arith.constant 0 : index
    %c0_11 = arith.constant 0 : index
    %14 = vector.load %arg6[%c0_10, %c0_11] : memref<256x32xf32, #tpu.memory_space<vmem>>, vector<256x32xf32>
    tpu.vector_store %arg6[%c0_10, %c0_11], %12 {strides = array<i32>} : memref<256x32xf32, #tpu.memory_space<vmem>>, vector<256x32xf32>,
    %cst_12 = arith.constant dense<0.000000e+00> : vector<32xf32>
    %15 = vector.multi_reduction <add>, %9, %cst_12 [0] : vector<256x32xf32> to vector<32xf32>
    %16 = vector.shape_cast %15 : vector<32xf32> to vector<1x32xf32>
    %c0_13 = arith.constant 0 : index
    %c0_14 = arith.constant 0 : index
    %c0_15 = arith.constant 0 : index
    %17 = vector.load %arg7[%c0_13, %c0_14, %c0_15] : memref<1x4x32xf32, #tpu.memory_space<vmem>>, vector<1x1x32xf32>
    %18 = vector.shape_cast %17 : vector<1x1x32xf32> to vector<1x32xf32>
    %19 = vector.shape_cast %16 : vector<1x32xf32> to vector<1x1x32xf32>
    tpu.vector_store %arg7[%c0_13, %c0_14, %c0_15], %19 {strides = array<i32>} : memref<1x4x32xf32, #tpu.memory_space<vmem>>, vector<1x1x32xf32>,
    %20 = arith.mulf %9, %9 : vector<256x32xf32>
    %cst_16 = arith.constant dense<0.000000e+00> : vector<32xf32>
    %21 = vector.multi_reduction <add>, %20, %cst_16 [0] : vector<256x32xf32> to vector<32xf32>
    %22 = vector.shape_cast %21 : vector<32xf32> to vector<1x32xf32>
    %c0_17 = arith.constant 0 : index
    %c1 = arith.constant 1 : index
    %c0_18 = arith.constant 0 : index
    %23 = vector.load %arg7[%c0_17, %c1, %c0_18] : memref<1x4x32xf32, #tpu.memory_space<vmem>>, vector<1x1x32xf32>
    %24 = vector.shape_cast %23 : vector<1x1x32xf32> to vector<1x32xf32>
    %25 = vector.shape_cast %22 : vector<1x32xf32> to vector<1x1x32xf32>
    tpu.vector_store %arg7[%c0_17, %c1, %c0_18], %25 {strides = array<i32>} : memref<1x4x32xf32, #tpu.memory_space<vmem>>, vector<1x1x32xf32>,
    %cst_19 = arith.constant dense<0.000000e+00> : vector<32xf32>
    %26 = vector.multi_reduction <add>, %12, %cst_19 [0] : vector<256x32xf32> to vector<32xf32>
    %27 = vector.shape_cast %26 : vector<32xf32> to vector<1x32xf32>
    %c0_20 = arith.constant 0 : index
    %c2 = arith.constant 2 : index
    %c0_21 = arith.constant 0 : index
    %28 = vector.load %arg7[%c0_20, %c2, %c0_21] : memref<1x4x32xf32, #tpu.memory_space<vmem>>, vector<1x1x32xf32>
    %29 = vector.shape_cast %28 : vector<1x1x32xf32> to vector<1x32xf32>
    %30 = vector.shape_cast %27 : vector<1x32xf32> to vector<1x1x32xf32>
    tpu.vector_store %arg7[%c0_20, %c2, %c0_21], %30 {strides = array<i32>} : memref<1x4x32xf32, #tpu.memory_space<vmem>>, vector<1x1x32xf32>,
    %31 = arith.mulf %12, %12 : vector<256x32xf32>
    %cst_22 = arith.constant dense<0.000000e+00> : vector<32xf32>
    %32 = vector.multi_reduction <add>, %31, %cst_22 [0] : vector<256x32xf32> to vector<32xf32>
    %33 = vector.shape_cast %32 : vector<32xf32> to vector<1x32xf32>
    %c0_23 = arith.constant 0 : index
    %c3 = arith.constant 3 : index
    %c0_24 = arith.constant 0 : index
    %34 = vector.load %arg7[%c0_23, %c3, %c0_24] : memref<1x4x32xf32, #tpu.memory_space<vmem>>, vector<1x1x32xf32>
    %35 = vector.shape_cast %34 : vector<1x1x32xf32> to vector<1x32xf32>
    %36 = vector.shape_cast %33 : vector<1x32xf32> to vector<1x1x32xf32>
    tpu.vector_store %arg7[%c0_23, %c3, %c0_24], %36 {strides = array<i32>} : memref<1x4x32xf32, #tpu.memory_space<vmem>>, vector<1x1x32xf32>,
    return
  }
  func.func @transform_0(%arg0: i32) -> (i32, i32) {
    %c0_i32 = arith.constant 0 : i32
    %c0_i32_0 = arith.constant 0 : i32
    return %arg0, %c0_i32 : i32, i32
  }
  func.func @transform_1(%arg0: i32) -> (i32, i32) {
    %c0_i32 = arith.constant 0 : i32
    %c0_i32_0 = arith.constant 0 : i32
    return %arg0, %c0_i32 : i32, i32
  }
  func.func @transform_2(%arg0: i32) -> (i32, i32) {
    %c0_i32 = arith.constant 0 : i32
    %c0_i32_0 = arith.constant 0 : i32
    %c0_i32_1 = arith.constant 0 : i32
    return %c0_i32, %c0_i32_0 : i32, i32
  }
  func.func @transform_3(%arg0: i32) -> (i32, i32) {
    %c0_i32 = arith.constant 0 : i32
    %c0_i32_0 = arith.constant 0 : i32
    %c0_i32_1 = arith.constant 0 : i32
    return %c0_i32, %c0_i32_0 : i32, i32
  }
  func.func @transform_4(%arg0: i32) -> (i32, i32) {
    %c0_i32 = arith.constant 0 : i32
    %c0_i32_0 = arith.constant 0 : i32
    return %arg0, %c0_i32 : i32, i32
  }
  func.func @transform_5(%arg0: i32) -> (i32, i32) {
    %c0_i32 = arith.constant 0 : i32
    %c0_i32_0 = arith.constant 0 : i32
    return %arg0, %c0_i32 : i32, i32
  }
  func.func @transform_6(%arg0: i32) -> (i32, i32, i32) {
    %c0_i32 = arith.constant 0 : i32
    %c0_i32_0 = arith.constant 0 : i32
    %c0_i32_1 = arith.constant 0 : i32
    return %arg0, %c0_i32, %c0_i32_0 : i32, i32, i32
  }
}

</mosaic_0001>

<llo_original>
// kernel: tpu_custom_call.1
$region0: #{tpu_custom_call.1}
  #allocation0 [shape = 'u32[]', space=smem, size = 0x4, offset = 0x4, fixed_abs, tag = 'smem constant byte address 0x4 - core index']
  #allocation1 [shape = 'u32[144,128]{1,0:T(1,128)}', space=vmem, size = 0x12000, scoped, tag = 'internal scratch']
  %s0 = inlined_call_operand.vmem [shape: f32[512,128], index: 0, kind: input, shape index: {}]
  %s1 = inlined_call_operand.vmem [shape: f32[512,64], index: 1, kind: input, shape index: {}]
  %s2 = inlined_call_operand.vmem [shape: f32[32,32], index: 2, kind: input, shape index: {}]
  %s3 = inlined_call_operand.vmem [shape: f32[64,32], index: 3, kind: input, shape index: {}]
  %s4 = inlined_call_operand.vmem [shape: f32[512,32], index: 4, kind: output, shape index: {0}]
  %s5 = inlined_call_operand.vmem [shape: f32[512,32], index: 5, kind: output, shape index: {1}]
  %s6 = inlined_call_operand.hbm [shape: f32[2,4,32], index: 6, kind: output, shape index: {2}]
  %7 = xla_tuple %s4, %s5, %s6
  %s8 = sld [smem:[#allocation0]]
  $region65: #{tpu_custom_call.1} parent=0
    _
  %s10 = ssub.s32 1, %s8
  %s11 = scalar_select 0, %s10, %s8
  $region1: #{tpu_custom_call.1} parent=0
    #allocation2 [shape = 'u8[4096]{0}', space=vmem, size = 0x1000, scoped, tag = 'output window, operand 2']
    #allocation3 [shape = 's32[2]{0}', space=sflag, size = 0x8, scoped, tag = 'scoped memory for tpu_custom_call.1']
    %12 = vsyncpa [#allocation3], 0
    %s13 = scalar_lea.sflag [#allocation3], 1
    %14 = vsyncpa %s13, 0
    loop: start=0, step=1, limit=4
    $region2: #{tpu_custom_call.1} parent=1 // loop_pre_header
      _
    $region3: #{tpu_custom_call.1} parent=1 // loop_header
      %s16 = sphi 0, %s20
      %p17 = scmp.ge.s32.totalorder %s16, 4
      %s26 = sphi 0, %s28
      %s29 = sphi 0, %s26
      %s30 = sphi 0, %s29
      %s46 = sphi 0, %s30
      %s52 = sphi 0, %s54
      %s55 = sphi 0, %s52
      %s56 = sphi 0, %s55
      %s72 = sphi 0, %s56
      %s76 = sphi 0, %s76
      %s78 = sphi 0, %s76
      %s79 = sphi 0, %s78
      %s93 = sphi 0, %s79
      %s97 = sphi 0, %s97
      %s99 = sphi 0, %s97
      %s100 = sphi 0, %s99
      %s114 = sphi 0, %s100
      %s120 = sphi 0, %s122
      %s123 = sphi 0, %s120
      %s124 = sphi 0, %s123
      %s140 = sphi 0, %s124
      %s146 = sphi 0, %s148
      %s149 = sphi 0, %s146
      %s150 = sphi 0, %s149
      %s166 = sphi 0, %s150
      %s172 = sphi 0, %s174
      %s175 = sphi 0, %s172
      %s176 = sphi 0, %s175
      %s192 = sphi 0, %s176
    $region4: #{tpu_custom_call.1} parent=1 // loop_header_branch
      %19 = sbr.rel (%p17) target = $region8
    $region5: #{tpu_custom_call.1} parent=1 // loop_body
      %s21 = ssub.s32 %s16, 1
      %s22 = ssub.s32 %s16, 2
      %s23 = sadd.s32 %s16, 1
      %s24 = ssub.s32 %s16, %s23
      %p25 = scmp.eq.s32.totalorder %s24, 0
      %s27 = sadd.s32 %s26, 1
      %s28 = scalar_select %p25, %s26, %s27
      %p31 = pneg %p25
      %p32 = scmp.eq.s32.totalorder %s16, 1
      %p33 = por %p31, %p32
      %p34 = scmp.ne.s32.totalorder %s26, %s29
      %p35 = scmp.eq.s32.totalorder %s16, 0
      %p36 = por %p34, %p35
      %p37 = scmp.ne.s32.totalorder %s26, %s29
      %p38 = scmp.eq.s32.totalorder %s21, 1
      %p39 = por %p37, %p38
      %p40 = scmp.ne.s32.totalorder %s29, %s30
      %p41 = scmp.eq.s32.totalorder %s21, 0
      %p42 = por %p40, %p41
      %p43 = scmp.ne.s32.totalorder %s29, %s30
      %p44 = scmp.eq.s32.totalorder %s22, 1
      %p45 = por %p43, %p44
      %p47 = scmp.ne.s32.totalorder %s30, %s46
      %p48 = scmp.eq.s32.totalorder %s22, 0
      %p49 = por %p47, %p48
      %s50 = ssub.s32 %s16, %s23
      %p51 = scmp.eq.s32.totalorder %s50, 0
      %s53 = sadd.s32 %s52, 1
      %s54 = scalar_select %p51, %s52, %s53
      %p57 = pneg %p51
      %p58 = scmp.eq.s32.totalorder %s16, 1
      %p59 = por %p57, %p58
      %p60 = scmp.ne.s32.totalorder %s52, %s55
      %p61 = scmp.eq.s32.totalorder %s16, 0
      %p62 = por %p60, %p61
      %p63 = scmp.ne.s32.totalorder %s52, %s55
      %p64 = scmp.eq.s32.totalorder %s21, 1
      %p65 = por %p63, %p64
      %p66 = scmp.ne.s32.totalorder %s55, %s56
      %p67 = scmp.eq.s32.totalorder %s21, 0
      %p68 = por %p66, %p67
      %p69 = scmp.ne.s32.totalorder %s55, %s56
      %p70 = scmp.eq.s32.totalorder %s22, 1
      %p71 = por %p69, %p70
      %p73 = scmp.ne.s32.totalorder %s56, %s72
      %p74 = scmp.eq.s32.totalorder %s22, 0
      %p75 = por %p73, %p74
      %s77 = sadd.s32 %s76, 1
      %p80 = scmp.eq.s32.totalorder %s16, 1
      %p81 = scmp.ne.s32.totalorder %s76, %s78
      %p82 = scmp.eq.s32.totalorder %s16, 0
      %p83 = por %p81, %p82
      %p84 = scmp.ne.s32.totalorder %s76, %s78
      %p85 = scmp.eq.s32.totalorder %s21, 1
      %p86 = por %p84, %p85
      %p87 = scmp.ne.s32.totalorder %s78, %s79
      %p88 = scmp.eq.s32.totalorder %s21, 0
      %p89 = por %p87, %p88
      %p90 = scmp.ne.s32.totalorder %s78, %s79
      %p91 = scmp.eq.s32.totalorder %s22, 1
      %p92 = por %p90, %p91
      %p94 = scmp.ne.s32.totalorder %s79, %s93
      %p95 = scmp.eq.s32.totalorder %s22, 0
      %p96 = por %p94, %p95
      %s98 = sadd.s32 %s97, 1
      %p101 = scmp.eq.s32.totalorder %s16, 1
      %p102 = scmp.ne.s32.totalorder %s97, %s99
      %p103 = scmp.eq.s32.totalorder %s16, 0
      %p104 = por %p102, %p103
      %p105 = scmp.ne.s32.totalorder %s97, %s99
      %p106 = scmp.eq.s32.totalorder %s21, 1
      %p107 = por %p105, %p106
      %p108 = scmp.ne.s32.totalorder %s99, %s100
      %p109 = scmp.eq.s32.totalorder %s21, 0
      %p110 = por %p108, %p109
      %p111 = scmp.ne.s32.totalorder %s99, %s100
      %p112 = scmp.eq.s32.totalorder %s22, 1
      %p113 = por %p111, %p112
      %p115 = scmp.ne.s32.totalorder %s100, %s114
      %p116 = scmp.eq.s32.totalorder %s22, 0
      %p117 = por %p115, %p116
      %s118 = ssub.s32 %s16, %s23
      %p119 = scmp.eq.s32.totalorder %s118, 0
      %s121 = sadd.s32 %s120, 1
      %s122 = scalar_select %p119, %s120, %s121
      %p125 = pneg %p119
      %p126 = scmp.eq.s32.totalorder %s16, 1
      %p127 = por %p125, %p126
      %p128 = scmp.ne.s32.totalorder %s120, %s123
      %p129 = scmp.eq.s32.totalorder %s16, 0
      %p130 = por %p128, %p129
      %p131 = scmp.ne.s32.totalorder %s120, %s123
      %p132 = scmp.eq.s32.totalorder %s21, 1
      %p133 = por %p131, %p132
      %p134 = scmp.ne.s32.totalorder %s123, %s124
      %p135 = scmp.eq.s32.totalorder %s21, 0
      %p136 = por %p134, %p135
      %p137 = scmp.ne.s32.totalorder %s123, %s124
      %p138 = scmp.eq.s32.totalorder %s22, 1
      %p139 = por %p137, %p138
      %p141 = scmp.ne.s32.totalorder %s124, %s140
      %p142 = scmp.eq.s32.totalorder %s22, 0
      %p143 = por %p141, %p142
      %s144 = ssub.s32 %s16, %s23
      %p145 = scmp.eq.s32.totalorder %s144, 0
      %s147 = sadd.s32 %s146, 1
      %s148 = scalar_select %p145, %s146, %s147
      %p151 = pneg %p145
      %p152 = scmp.eq.s32.totalorder %s16, 1
      %p153 = por %p151, %p152
      %p154 = scmp.ne.s32.totalorder %s146, %s149
      %p155 = scmp.eq.s32.totalorder %s16, 0
      %p156 = por %p154, %p155
      %p157 = scmp.ne.s32.totalorder %s146, %s149
      %p158 = scmp.eq.s32.totalorder %s21, 1
      %p159 = por %p157, %p158
      %p160 = scmp.ne.s32.totalorder %s149, %s150
      %p161 = scmp.eq.s32.totalorder %s21, 0
      %p162 = por %p160, %p161
      %p163 = scmp.ne.s32.totalorder %s149, %s150
      %p164 = scmp.eq.s32.totalorder %s22, 1
      %p165 = por %p163, %p164
      %p167 = scmp.ne.s32.totalorder %s150, %s166
      %p168 = scmp.eq.s32.totalorder %s22, 0
      %p169 = por %p167, %p168
      %s170 = ssub.s32 %s16, %s23
      %p171 = scmp.eq.s32.totalorder %s170, 0
      %s173 = sadd.s32 %s172, 1
      %s174 = scalar_select %p171, %s172, %s173
      %p177 = pneg %p171
      %p178 = scmp.eq.s32.totalorder %s16, 1
      %p179 = por %p177, %p178
      %p180 = scmp.ne.s32.totalorder %s172, %s175
      %p181 = scmp.eq.s32.totalorder %s16, 0
      %p182 = por %p180, %p181
      %p183 = scmp.ne.s32.totalorder %s172, %s175
      %p184 = scmp.eq.s32.totalorder %s21, 1
      %p185 = por %p183, %p184
      %p186 = scmp.ne.s32.totalorder %s175, %s176
      %p187 = scmp.eq.s32.totalorder %s21, 0
      %p188 = por %p186, %p187
      %p189 = scmp.ne.s32.totalorder %s175, %s176
      %p190 = scmp.eq.s32.totalorder %s22, 1
      %p191 = por %p189, %p190
      %p193 = scmp.ne.s32.totalorder %s176, %s192
      %p194 = scmp.eq.s32.totalorder %s22, 0
      %p195 = por %p193, %p194
      %p196 = scmp.le.s32.totalorder 1, %s16
      %p197 = scmp.lt.s32.totalorder %s16, 3
      %p198 = pnand %p196, %p197
      %p199 = pneg %p198
      // Predicated region
      $region9: #{tpu_custom_call.1} parent=5 // pred_check
        _
      $region10: #{tpu_custom_call.1} parent=5 // pred_check_branch
        %201 = sbr.rel (%p198) target = $region12
      $region11: #{tpu_custom_call.1} parent=5 // pred_region
        %s202 = ssub.s32 %s16, 1
        // Predicated region
        $region13: #{tpu_custom_call.1} parent=11 // pred_check
          %p203 = pneg %p89
        $region14: #{tpu_custom_call.1} parent=11 // pred_check_branch
          %205 = sbr.rel (%p203) target = $region16
        $region15: #{tpu_custom_call.1} parent=11 // pred_region
          _
        $region16: #{tpu_custom_call.1} parent=11 // pred_fallthru
          _
        // Predicated region
        $region17: #{tpu_custom_call.1} parent=11 // pred_check
          %p206 = pneg %p110
        $region18: #{tpu_custom_call.1} parent=11 // pred_check_branch
          %208 = sbr.rel (%p206) target = $region20
        $region19: #{tpu_custom_call.1} parent=11 // pred_region
          _
        $region20: #{tpu_custom_call.1} parent=11 // pred_fallthru
          _
      $region12: #{tpu_custom_call.1} parent=5 // pred_fallthru
        _
      %p209 = scmp.lt.s32.totalorder %s16, 2
      // Predicated region
      $region21: #{tpu_custom_call.1} parent=5 // pred_check
        %p210 = pneg %p209
      $region22: #{tpu_custom_call.1} parent=5 // pred_check_branch
        %212 = sbr.rel (%p210) target = $region24
      $region23: #{tpu_custom_call.1} parent=5 // pred_region
        // Predicated region
        $region25: #{tpu_custom_call.1} parent=23 // pred_check
          %p213 = pneg %p36
        $region26: #{tpu_custom_call.1} parent=23 // pred_check_branch
          %215 = sbr.rel (%p213) target = $region28
        $region27: #{tpu_custom_call.1} parent=23 // pred_region
          %s216 = smul.u32 32, %s16
          %p217 = scmp.lt.s32.totalorder %s216, 63
          %s218 = scalar_select %p217, %s216, 63
          %s219 = smul.addr %s218, 8
          %s220 = scalar_lea.vmem %s0, %s219
          %s221 = smul.u32 32, %s16
        $region28: #{tpu_custom_call.1} parent=23 // pred_fallthru
          _
        // Predicated region
        $region29: #{tpu_custom_call.1} parent=23 // pred_check
          %p222 = pneg %p62
        $region30: #{tpu_custom_call.1} parent=23 // pred_check_branch
          %224 = sbr.rel (%p222) target = $region32
        $region31: #{tpu_custom_call.1} parent=23 // pred_region
          %s225 = smul.u32 32, %s16
          %p226 = scmp.lt.s32.totalorder %s225, 63
          %s227 = scalar_select %p226, %s225, 63
          %s228 = smul.addr %s227, 8
          %s229 = scalar_lea.vmem %s1, %s228
          %s230 = smul.u32 32, %s16
        $region32: #{tpu_custom_call.1} parent=23 // pred_fallthru
          _
      $region24: #{tpu_custom_call.1} parent=5 // pred_fallthru
        _
      %p231 = scmp.le.s32.totalorder 1, %s16
      %p232 = scmp.lt.s32.totalorder %s16, 3
      %p233 = pnand %p231, %p232
      %p234 = pneg %p233
      // Predicated region
      $region33: #{tpu_custom_call.1} parent=5 // pred_check
        _
      $region34: #{tpu_custom_call.1} parent=5 // pred_check_branch
        %236 = sbr.rel (%p233) target = $region36
      $region35: #{tpu_custom_call.1} parent=5 // pred_region
        %s237 = ssub.s32 %s16, 1
        %s238 = smul.u32 32, %s21
        %p239 = scmp.lt.s32.totalorder %s238, 63
        %s240 = scalar_select %p239, %s238, 63
        %s241 = smul.addr %s240, 8
        %s242 = scalar_lea.vmem %s0, %s241
        %p243 = pneg %p42
        %p244 = pneg %p39
        %s245 = smul.u32 32, %s21
        %p246 = scmp.lt.s32.totalorder %s245, 63
        %s247 = scalar_select %p246, %s245, 63
        %s248 = smul.addr %s247, 8
        %s249 = scalar_lea.vmem %s1, %s248
        %p250 = pneg %p68
        %p251 = pneg %p65
        %p252 = pneg %p89
        %p253 = pneg %p86
        %p254 = pneg %p110
        %p255 = pneg %p107
        %p256 = pneg %p136
        %p257 = pneg %p133
        %s258 = smul.u32 32, %s21
        %p259 = scmp.lt.s32.totalorder %s258, 63
        %s260 = scalar_select %p259, %s258, 63
        %s261 = smul.addr %s260, 8
        %s262 = scalar_lea.vmem %s4, %s261
        %p263 = pneg %p162
        %p264 = pneg %p159
        %s265 = smul.u32 32, %s21
        %p266 = scmp.lt.s32.totalorder %s265, 63
        %s267 = scalar_select %p266, %s265, 63
        %s268 = smul.addr %s267, 8
        %s269 = scalar_lea.vmem %s5, %s268
        %p270 = pneg %p188
        %p271 = pneg %p185
        %s272 = sand.u32 %s175, 1
        %s273 = scalar_lea.sflag [#allocation3], %s272
        %s274 = sand.u32 %s175, 1
        %s275 = smul.addr %s274, 4
        %s276 = scalar_lea.vmem [#allocation2], %s275
        %s277 = smul.u32 32, %s21
        %p278 = scmp.lt.s32.totalorder %s277, 63
        %s279 = scalar_select %p278, %s277, 63
        %s280 = smul.addr %s279, 8
        %s281 = scalar_lea.vmem %s0, %s280
        %s282 = smul.u32 32, %s21
        %s283 = smul.u32 32, %s21
        %p284 = scmp.lt.s32.totalorder %s283, 63
        %s285 = scalar_select %p284, %s283, 63
        %s286 = smul.addr %s285, 8
        %s287 = scalar_lea.vmem %s1, %s286
        %s288 = smul.u32 32, %s21
        %s289 = smul.u32 32, %s21
        %p290 = scmp.lt.s32.totalorder %s289, 63
        %s291 = scalar_select %p290, %s289, 63
        %s292 = smul.addr %s291, 8
        %s293 = scalar_lea.vmem %s4, %s292
        %s294 = smul.u32 32, %s21
        %s295 = smul.u32 32, %s21
        %p296 = scmp.lt.s32.totalorder %s295, 63
        %s297 = scalar_select %p296, %s295, 63
        %s298 = smul.addr %s297, 8
        %s299 = scalar_lea.vmem %s5, %s298
        %s300 = smul.u32 32, %s21
        %v301 = vld [vmem:[%s281] sm:$0xff]
        %v302 = vld [vmem:[%s281 + $0x8] sm:$0xff]
        %v303 = vld [vmem:[%s281 + $0x10] sm:$0xff]
        %v304 = vld [vmem:[%s281 + $0x18] sm:$0xff]
        %v305 = vld [vmem:[%s281 + $0x20] sm:$0xff]
        %v306 = vld [vmem:[%s281 + $0x28] sm:$0xff]
        %v307 = vld [vmem:[%s281 + $0x30] sm:$0xff]
        %v308 = vld [vmem:[%s281 + $0x38] sm:$0xff]
        %v309 = vld [vmem:[%s281 + $0x40] sm:$0xff]
        %v310 = vld [vmem:[%s281 + $0x48] sm:$0xff]
        %v311 = vld [vmem:[%s281 + $0x50] sm:$0xff]
        %v312 = vld [vmem:[%s281 + $0x58] sm:$0xff]
        %v313 = vld [vmem:[%s281 + $0x60] sm:$0xff]
        %v314 = vld [vmem:[%s281 + $0x68] sm:$0xff]
        %v315 = vld [vmem:[%s281 + $0x70] sm:$0xff]
        %v316 = vld [vmem:[%s281 + $0x78] sm:$0xff]
        %v317 = vld [vmem:[%s281 + $0x80] sm:$0xff]
        %v318 = vld [vmem:[%s281 + $0x88] sm:$0xff]
        %v319 = vld [vmem:[%s281 + $0x90] sm:$0xff]
        %v320 = vld [vmem:[%s281 + $0x98] sm:$0xff]
        %v321 = vld [vmem:[%s281 + $0xa0] sm:$0xff]
        %v322 = vld [vmem:[%s281 + $0xa8] sm:$0xff]
        %v323 = vld [vmem:[%s281 + $0xb0] sm:$0xff]
        %v324 = vld [vmem:[%s281 + $0xb8] sm:$0xff]
        %v325 = vld [vmem:[%s281 + $0xc0] sm:$0xff]
        %v326 = vld [vmem:[%s281 + $0xc8] sm:$0xff]
        %v327 = vld [vmem:[%s281 + $0xd0] sm:$0xff]
        %v328 = vld [vmem:[%s281 + $0xd8] sm:$0xff]
        %v329 = vld [vmem:[%s281 + $0xe0] sm:$0xff]
        %v330 = vld [vmem:[%s281 + $0xe8] sm:$0xff]
        %v331 = vld [vmem:[%s281 + $0xf0] sm:$0xff]
        %v332 = vld [vmem:[%s281 + $0xf8] sm:$0xff]
        %365 = vrot.lane.b32.xlu0 %v301, 96
        %v366 = vpop.permute.xlu0 %365
        %367 = vrot.lane.b32.xlu0 %v302, 96
        %v368 = vpop.permute.xlu0 %367
        %369 = vrot.lane.b32.xlu0 %v303, 96
        %v370 = vpop.permute.xlu0 %369
        %371 = vrot.lane.b32.xlu0 %v304, 96
        %v372 = vpop.permute.xlu0 %371
        %373 = vrot.lane.b32.xlu0 %v305, 96
        %v374 = vpop.permute.xlu0 %373
        %375 = vrot.lane.b32.xlu0 %v306, 96
        %v376 = vpop.permute.xlu0 %375
        %377 = vrot.lane.b32.xlu0 %v307, 96
        %v378 = vpop.permute.xlu0 %377
        %379 = vrot.lane.b32.xlu0 %v308, 96
        %v380 = vpop.permute.xlu0 %379
        %381 = vrot.lane.b32.xlu0 %v309, 96
        %v382 = vpop.permute.xlu0 %381
        %383 = vrot.lane.b32.xlu0 %v310, 96
        %v384 = vpop.permute.xlu0 %383
        %385 = vrot.lane.b32.xlu0 %v311, 96
        %v386 = vpop.permute.xlu0 %385
        %387 = vrot.lane.b32.xlu0 %v312, 96
        %v388 = vpop.permute.xlu0 %387
        %389 = vrot.lane.b32.xlu0 %v313, 96
        %v390 = vpop.permute.xlu0 %389
        %391 = vrot.lane.b32.xlu0 %v314, 96
        %v392 = vpop.permute.xlu0 %391
        %393 = vrot.lane.b32.xlu0 %v315, 96
        %v394 = vpop.permute.xlu0 %393
        %395 = vrot.lane.b32.xlu0 %v316, 96
        %v396 = vpop.permute.xlu0 %395
        %397 = vrot.lane.b32.xlu0 %v317, 96
        %v398 = vpop.permute.xlu0 %397
        %399 = vrot.lane.b32.xlu0 %v318, 96
        %v400 = vpop.permute.xlu0 %399
        %401 = vrot.lane.b32.xlu0 %v319, 96
        %v402 = vpop.permute.xlu0 %401
        %403 = vrot.lane.b32.xlu0 %v320, 96
        %v404 = vpop.permute.xlu0 %403
        %405 = vrot.lane.b32.xlu0 %v321, 96
        %v406 = vpop.permute.xlu0 %405
        %407 = vrot.lane.b32.xlu0 %v322, 96
        %v408 = vpop.permute.xlu0 %407
        %409 = vrot.lane.b32.xlu0 %v323, 96
        %v410 = vpop.permute.xlu0 %409
        %411 = vrot.lane.b32.xlu0 %v324, 96
        %v412 = vpop.permute.xlu0 %411
        %413 = vrot.lane.b32.xlu0 %v325, 96
        %v414 = vpop.permute.xlu0 %413
        %415 = vrot.lane.b32.xlu0 %v326, 96
        %v416 = vpop.permute.xlu0 %415
        %417 = vrot.lane.b32.xlu0 %v327, 96
        %v418 = vpop.permute.xlu0 %417
        %419 = vrot.lane.b32.xlu0 %v328, 96
        %v420 = vpop.permute.xlu0 %419
        %421 = vrot.lane.b32.xlu0 %v329, 96
        %v422 = vpop.permute.xlu0 %421
        %423 = vrot.lane.b32.xlu0 %v330, 96
        %v424 = vpop.permute.xlu0 %423
        %425 = vrot.lane.b32.xlu0 %v331, 96
        %v426 = vpop.permute.xlu0 %425
        %427 = vrot.lane.b32.xlu0 %v332, 96
        %v428 = vpop.permute.xlu0 %427
        %v461 = vmax.f32 %v301, %v366
        %v462 = vmax.f32 %v302, %v368
        %v463 = vmax.f32 %v303, %v370
        %v464 = vmax.f32 %v304, %v372
        %v465 = vmax.f32 %v305, %v374
        %v466 = vmax.f32 %v306, %v376
        %v467 = vmax.f32 %v307, %v378
        %v468 = vmax.f32 %v308, %v380
        %v469 = vmax.f32 %v309, %v382
        %v470 = vmax.f32 %v310, %v384
        %v471 = vmax.f32 %v311, %v386
        %v472 = vmax.f32 %v312, %v388
        %v473 = vmax.f32 %v313, %v390
        %v474 = vmax.f32 %v314, %v392
        %v475 = vmax.f32 %v315, %v394
        %v476 = vmax.f32 %v316, %v396
        %v477 = vmax.f32 %v317, %v398
        %v478 = vmax.f32 %v318, %v400
        %v479 = vmax.f32 %v319, %v402
        %v480 = vmax.f32 %v320, %v404
        %v481 = vmax.f32 %v321, %v406
        %v482 = vmax.f32 %v322, %v408
        %v483 = vmax.f32 %v323, %v410
        %v484 = vmax.f32 %v324, %v412
        %v485 = vmax.f32 %v325, %v414
        %v486 = vmax.f32 %v326, %v416
        %v487 = vmax.f32 %v327, %v418
        %v488 = vmax.f32 %v328, %v420
        %v489 = vmax.f32 %v329, %v422
        %v490 = vmax.f32 %v330, %v424
        %v491 = vmax.f32 %v331, %v426
        %v492 = vmax.f32 %v332, %v428
        %525 = vrot.lane.b32.xlu0 %v461, 64
        %v526 = vpop.permute.xlu0 %525
        %527 = vrot.lane.b32.xlu0 %v462, 64
        %v528 = vpop.permute.xlu0 %527
        %529 = vrot.lane.b32.xlu0 %v463, 64
        %v530 = vpop.permute.xlu0 %529
        %531 = vrot.lane.b32.xlu0 %v464, 64
        %v532 = vpop.permute.xlu0 %531
        %533 = vrot.lane.b32.xlu0 %v465, 64
        %v534 = vpop.permute.xlu0 %533
        %535 = vrot.lane.b32.xlu0 %v466, 64
        %v536 = vpop.permute.xlu0 %535
        %537 = vrot.lane.b32.xlu0 %v467, 64
        %v538 = vpop.permute.xlu0 %537
        %539 = vrot.lane.b32.xlu0 %v468, 64
        %v540 = vpop.permute.xlu0 %539
        %541 = vrot.lane.b32.xlu0 %v469, 64
        %v542 = vpop.permute.xlu0 %541
        %543 = vrot.lane.b32.xlu0 %v470, 64
        %v544 = vpop.permute.xlu0 %543
        %545 = vrot.lane.b32.xlu0 %v471, 64
        %v546 = vpop.permute.xlu0 %545
        %547 = vrot.lane.b32.xlu0 %v472, 64
        %v548 = vpop.permute.xlu0 %547
        %549 = vrot.lane.b32.xlu0 %v473, 64
        %v550 = vpop.permute.xlu0 %549
        %551 = vrot.lane.b32.xlu0 %v474, 64
        %v552 = vpop.permute.xlu0 %551
        %553 = vrot.lane.b32.xlu0 %v475, 64
        %v554 = vpop.permute.xlu0 %553
        %555 = vrot.lane.b32.xlu0 %v476, 64
        %v556 = vpop.permute.xlu0 %555
        %557 = vrot.lane.b32.xlu0 %v477, 64
        %v558 = vpop.permute.xlu0 %557
        %559 = vrot.lane.b32.xlu0 %v478, 64
        %v560 = vpop.permute.xlu0 %559
        %561 = vrot.lane.b32.xlu0 %v479, 64
        %v562 = vpop.permute.xlu0 %561
        %563 = vrot.lane.b32.xlu0 %v480, 64
        %v564 = vpop.permute.xlu0 %563
        %565 = vrot.lane.b32.xlu0 %v481, 64
        %v566 = vpop.permute.xlu0 %565
        %567 = vrot.lane.b32.xlu0 %v482, 64
        %v568 = vpop.permute.xlu0 %567
        %569 = vrot.lane.b32.xlu0 %v483, 64
        %v570 = vpop.permute.xlu0 %569
        %571 = vrot.lane.b32.xlu0 %v484, 64
        %v572 = vpop.permute.xlu0 %571
        %573 = vrot.lane.b32.xlu0 %v485, 64
        %v574 = vpop.permute.xlu0 %573
        %575 = vrot.lane.b32.xlu0 %v486, 64
        %v576 = vpop.permute.xlu0 %575
        %577 = vrot.lane.b32.xlu0 %v487, 64
        %v578 = vpop.permute.xlu0 %577
        %579 = vrot.lane.b32.xlu0 %v488, 64
        %v580 = vpop.permute.xlu0 %579
        %581 = vrot.lane.b32.xlu0 %v489, 64
        %v582 = vpop.permute.xlu0 %581
        %583 = vrot.lane.b32.xlu0 %v490, 64
        %v584 = vpop.permute.xlu0 %583
        %585 = vrot.lane.b32.xlu0 %v491, 64
        %v586 = vpop.permute.xlu0 %585
        %587 = vrot.lane.b32.xlu0 %v492, 64
        %v588 = vpop.permute.xlu0 %587
        %v621 = vmax.f32 %v461, %v526
        %v622 = vmax.f32 %v462, %v528
        %v623 = vmax.f32 %v463, %v530
        %v624 = vmax.f32 %v464, %v532
        %v625 = vmax.f32 %v465, %v534
        %v626 = vmax.f32 %v466, %v536
        %v627 = vmax.f32 %v467, %v538
        %v628 = vmax.f32 %v468, %v540
        %v629 = vmax.f32 %v469, %v542
        %v630 = vmax.f32 %v470, %v544
        %v631 = vmax.f32 %v471, %v546
        %v632 = vmax.f32 %v472, %v548
        %v633 = vmax.f32 %v473, %v550
        %v634 = vmax.f32 %v474, %v552
        %v635 = vmax.f32 %v475, %v554
        %v636 = vmax.f32 %v476, %v556
        %v637 = vmax.f32 %v477, %v558
        %v638 = vmax.f32 %v478, %v560
        %v639 = vmax.f32 %v479, %v562
        %v640 = vmax.f32 %v480, %v564
        %v641 = vmax.f32 %v481, %v566
        %v642 = vmax.f32 %v482, %v568
        %v643 = vmax.f32 %v483, %v570
        %v644 = vmax.f32 %v484, %v572
        %v645 = vmax.f32 %v485, %v574
        %v646 = vmax.f32 %v486, %v576
        %v647 = vmax.f32 %v487, %v578
        %v648 = vmax.f32 %v488, %v580
        %v649 = vmax.f32 %v489, %v582
        %v650 = vmax.f32 %v490, %v584
        %v651 = vmax.f32 %v491, %v586
        %v652 = vmax.f32 %v492, %v588
        %v653 = vld [vmem:[%s2] sm:$0xff]
        %v654 = vld [vmem:[%s2 + $0x8] sm:$0xff]
        %v655 = vld [vmem:[%s2 + $0x10] sm:$0xff]
        %v656 = vld [vmem:[%s2 + $0x18] sm:$0xff]
        %vm657 = vcmask 261120
        %v659 = vsel %vm657, %v621, 0
        %v662 = vsel %vm657, %v622, 0
        %v665 = vsel %vm657, %v623, 0
        %v668 = vsel %vm657, %v624, 0
        %v671 = vsel %vm657, %v625, 0
        %v674 = vsel %vm657, %v626, 0
        %v677 = vsel %vm657, %v627, 0
        %v680 = vsel %vm657, %v628, 0
        %v683 = vsel %vm657, %v629, 0
        %v686 = vsel %vm657, %v630, 0
        %v689 = vsel %vm657, %v631, 0
        %v692 = vsel %vm657, %v632, 0
        %v695 = vsel %vm657, %v633, 0
        %v698 = vsel %vm657, %v634, 0
        %v701 = vsel %vm657, %v635, 0
        %v704 = vsel %vm657, %v636, 0
        %v707 = vsel %vm657, %v637, 0
        %v710 = vsel %vm657, %v638, 0
        %v713 = vsel %vm657, %v639, 0
        %v716 = vsel %vm657, %v640, 0
        %v719 = vsel %vm657, %v641, 0
        %v722 = vsel %vm657, %v642, 0
        %v725 = vsel %vm657, %v643, 0
        %v728 = vsel %vm657, %v644, 0
        %v731 = vsel %vm657, %v645, 0
        %v734 = vsel %vm657, %v646, 0
        %v737 = vsel %vm657, %v647, 0
        %v740 = vsel %vm657, %v648, 0
        %v743 = vsel %vm657, %v649, 0
        %v746 = vsel %vm657, %v650, 0
        %v749 = vsel %vm657, %v651, 0
        %v752 = vsel %vm657, %v652, 0
        %754 = vmatprep.subr.mxu0 0.0
        %v755 = vand.u32 %v653, 4294901760
        %756 = vmatpush1.msra.mxu0 %v755
        %757 = vmatprep.subr.mxu0 0.0
        %v758 = vand.u32 %v654, 4294901760
        %759 = vmatpush1.msra.mxu0 %v758
        %760 = vmatprep.subr.mxu0 0.0
        %v761 = vand.u32 %v655, 4294901760
        %762 = vmatpush1.msra.mxu0 %v761
        %763 = vmatprep.subr.mxu0 0.0
        %v764 = vand.u32 %v656, 4294901760
        %765 = vmatpush1.msra.mxu0 %v764
        %766 = vmatprep.subr.mxu0 0.0
        %767 = vmatpush1.msra.mxu0 0.0
        %768 = vmatprep.subr.mxu0 0.0
        %769 = vmatpush1.msra.mxu0 0.0
        %770 = vmatprep.subr.mxu0 0.0
        %771 = vmatpush1.msra.mxu0 0.0
        %772 = vmatprep.subr.mxu0 0.0
        %773 = vmatpush1.msra.mxu0 0.0
        %774 = vmatprep.subr.mxu0 0.0
        %775 = vmatpush1.msra.mxu0 0.0
        %776 = vmatprep.subr.mxu0 0.0
        %777 = vmatpush1.msra.mxu0 0.0
        %778 = vmatprep.subr.mxu0 0.0
        %779 = vmatpush1.msra.mxu0 0.0
        %780 = vmatprep.subr.mxu0 0.0
        %781 = vmatpush1.msra.mxu0 0.0
        %782 = vmatprep.subr.mxu0 0.0
        %783 = vmatpush1.msra.mxu0 0.0
        %784 = vmatprep.subr.mxu0 0.0
        %785 = vmatpush1.msra.mxu0 0.0
        %786 = vmatprep.subr.mxu0 0.0
        %787 = vmatpush1.msra.mxu0 0.0
        %788 = vmatprep.subr.mxu0 0.0
        %789 = vmatpush1.msra.mxu0 0.0
        %790 = vmatprep.subr.mxu0 0.0
        %791 = vmatpush1.msra.mxu0 0.0
        %792 = vmatprep.subr.mxu0 0.0
        %793 = vmatpush1.msra.mxu0 0.0
        %794 = vmatprep.subr.mxu0 0.0
        %795 = vmatpush1.msra.mxu0 0.0
        %796 = vmatprep.subr.mxu0 0.0
        %797 = vmatpush1.msra.mxu0 0.0
        %798 = vmatprep.subr.mxu0 0.0
        %799 = vmatpush1.msra.mxu0 0.0
        %800 = vmatprep.subr.mxu0 0.0
        %801 = vmatpush1.msra.mxu0 0.0
        %802 = vmatprep.subr.mxu0 0.0
        %803 = vmatpush1.msra.mxu0 0.0
        %804 = vmatprep.subr.mxu0 0.0
        %805 = vmatpush1.msra.mxu0 0.0
        %806 = vmatprep.subr.mxu0 0.0
        %807 = vmatpush1.msra.mxu0 0.0
        %808 = vmatprep.subr.mxu0 0.0
        %809 = vmatpush1.msra.mxu0 0.0
        %810 = vmatprep.subr.mxu0 0.0
        %811 = vmatpush1.msra.mxu0 0.0
        %812 = vmatprep.subr.mxu0 0.0
        %813 = vmatpush1.msra.mxu0 0.0
        %814 = vmatprep.subr.mxu0 0.0
        %815 = vmatpush1.msra.mxu0 0.0
        %816 = vmatprep.subr.mxu0 0.0
        %817 = vmatpush1.msra.mxu0 0.0
        %818 = vmatprep.subr.mxu0 0.0
        %819 = vmatpush1.msra.mxu0 0.0
        %820 = vmatprep.subr.mxu0 0.0
        %821 = vmatpush1.msra.mxu0 0.0
        %822 = vmatprep.mubr.f32.mxu0 0.0
        %v823 = vand.u32 %v659, 4294901760
        %v824 = vsub.f32 %v659, %v823
        %v825 = vand.u32 %v824, 4294901760
        %v826 = vsub.f32 %v824, %v825
        %v827 = vand.u32 %v826, 4294901760
        %828 = vmatmul.mubr.f32.gmra.mrb[0].mxu0 %v827
        %v829 = vpop.f32.mrb[0].mxu0
        %v830 = vadd.f32 0.0, %v829
        %v831 = vpop.f32.mrb[0].mxu0
        %832 = vmatprep.mubr.f32.mxu0 0.0
        %v833 = vand.u32 %v662, 4294901760
        %v834 = vsub.f32 %v662, %v833
        %v835 = vand.u32 %v834, 4294901760
        %v836 = vsub.f32 %v834, %v835
        %v837 = vand.u32 %v836, 4294901760
        %838 = vmatmul.mubr.f32.gmra.mrb[0].mxu0 %v837
        %v839 = vpop.f32.mrb[0].mxu0
        %v840 = vadd.f32 0.0, %v839
        %v841 = vpop.f32.mrb[0].mxu0
        %842 = vmatprep.mubr.f32.mxu0 0.0
        %v843 = vand.u32 %v665, 4294901760
        %v844 = vsub.f32 %v665, %v843
        %v845 = vand.u32 %v844, 4294901760
        %v846 = vsub.f32 %v844, %v845
        %v847 = vand.u32 %v846, 4294901760
        %848 = vmatmul.mubr.f32.gmra.mrb[0].mxu0 %v847
        %v849 = vpop.f32.mrb[0].mxu0
        %v850 = vadd.f32 0.0, %v849
        %v851 = vpop.f32.mrb[0].mxu0
        %852 = vmatprep.mubr.f32.mxu0 0.0
        %v853 = vand.u32 %v668, 4294901760
        %v854 = vsub.f32 %v668, %v853
        %v855 = vand.u32 %v854, 4294901760
        %v856 = vsub.f32 %v854, %v855
        %v857 = vand.u32 %v856, 4294901760
        %858 = vmatmul.mubr.f32.gmra.mrb[0].mxu0 %v857
        %v859 = vpop.f32.mrb[0].mxu0
        %v860 = vadd.f32 0.0, %v859
        %v861 = vpop.f32.mrb[0].mxu0
        %862 = vmatprep.mubr.f32.mxu0 0.0
        %v863 = vand.u32 %v671, 4294901760
        %v864 = vsub.f32 %v671, %v863
        %v865 = vand.u32 %v864, 4294901760
        %v866 = vsub.f32 %v864, %v865
        %v867 = vand.u32 %v866, 4294901760
        %868 = vmatmul.mubr.f32.gmra.mrb[0].mxu0 %v867
        %v869 = vpop.f32.mrb[0].mxu0
        %v870 = vadd.f32 0.0, %v869
        %v871 = vpop.f32.mrb[0].mxu0
        %872 = vmatprep.mubr.f32.mxu0 0.0
        %v873 = vand.u32 %v674, 4294901760
        %v874 = vsub.f32 %v674, %v873
        %v875 = vand.u32 %v874, 4294901760
        %v876 = vsub.f32 %v874, %v875
        %v877 = vand.u32 %v876, 4294901760
        %878 = vmatmul.mubr.f32.gmra.mrb[0].mxu0 %v877
        %v879 = vpop.f32.mrb[0].mxu0
        %v880 = vadd.f32 0.0, %v879
        %v881 = vpop.f32.mrb[0].mxu0
        %882 = vmatprep.mubr.f32.mxu0 0.0
        %v883 = vand.u32 %v677, 4294901760
        %v884 = vsub.f32 %v677, %v883
        %v885 = vand.u32 %v884, 4294901760
        %v886 = vsub.f32 %v884, %v885
        %v887 = vand.u32 %v886, 4294901760
        %888 = vmatmul.mubr.f32.gmra.mrb[0].mxu0 %v887
        %v889 = vpop.f32.mrb[0].mxu0
        %v890 = vadd.f32 0.0, %v889
        %v891 = vpop.f32.mrb[0].mxu0
        %892 = vmatprep.mubr.f32.mxu0 0.0
        %v893 = vand.u32 %v680, 4294901760
        %v894 = vsub.f32 %v680, %v893
        %v895 = vand.u32 %v894, 4294901760
        %v896 = vsub.f32 %v894, %v895
        %v897 = vand.u32 %v896, 4294901760
        %898 = vmatmul.mubr.f32.gmra.mrb[0].mxu0 %v897
        %v899 = vpop.f32.mrb[0].mxu0
        %v900 = vadd.f32 0.0, %v899
        %v901 = vpop.f32.mrb[0].mxu0
        %902 = vmatprep.mubr.f32.mxu0 0.0
        %v903 = vand.u32 %v683, 4294901760
        %v904 = vsub.f32 %v683, %v903
        %v905 = vand.u32 %v904, 4294901760
        %v906 = vsub.f32 %v904, %v905
        %v907 = vand.u32 %v906, 4294901760
        %908 = vmatmul.mubr.f32.gmra.mrb[0].mxu0 %v907
        %v909 = vpop.f32.mrb[0].mxu0
        %v910 = vadd.f32 0.0, %v909
        %v911 = vpop.f32.mrb[0].mxu0
        %912 = vmatprep.mubr.f32.mxu0 0.0
        %v913 = vand.u32 %v686, 4294901760
        %v914 = vsub.f32 %v686, %v913
        %v915 = vand.u32 %v914, 4294901760
        %v916 = vsub.f32 %v914, %v915
        %v917 = vand.u32 %v916, 4294901760
        %918 = vmatmul.mubr.f32.gmra.mrb[0].mxu0 %v917
        %v919 = vpop.f32.mrb[0].mxu0
        %v920 = vadd.f32 0.0, %v919
        %v921 = vpop.f32.mrb[0].mxu0
        %922 = vmatprep.mubr.f32.mxu0 0.0
        %v923 = vand.u32 %v689, 4294901760
        %v924 = vsub.f32 %v689, %v923
        %v925 = vand.u32 %v924, 4294901760
        %v926 = vsub.f32 %v924, %v925
        %v927 = vand.u32 %v926, 4294901760
        %928 = vmatmul.mubr.f32.gmra.mrb[0].mxu0 %v927
        %v929 = vpop.f32.mrb[0].mxu0
        %v930 = vadd.f32 0.0, %v929
        %v931 = vpop.f32.mrb[0].mxu0
        %932 = vmatprep.mubr.f32.mxu0 0.0
        %v933 = vand.u32 %v692, 4294901760
        %v934 = vsub.f32 %v692, %v933
        %v935 = vand.u32 %v934, 4294901760
        %v936 = vsub.f32 %v934, %v935
        %v937 = vand.u32 %v936, 4294901760
        %938 = vmatmul.mubr.f32.gmra.mrb[0].mxu0 %v937
        %v939 = vpop.f32.mrb[0].mxu0
        %v940 = vadd.f32 0.0, %v939
        %v941 = vpop.f32.mrb[0].mxu0
        %942 = vmatprep.mubr.f32.mxu0 0.0
        %v943 = vand.u32 %v695, 4294901760
        %v944 = vsub.f32 %v695, %v943
        %v945 = vand.u32 %v944, 4294901760
        %v946 = vsub.f32 %v944, %v945
        %v947 = vand.u32 %v946, 4294901760
        %948 = vmatmul.mubr.f32.gmra.mrb[0].mxu0 %v947
        %v949 = vpop.f32.mrb[0].mxu0
        %v950 = vadd.f32 0.0, %v949
        %v951 = vpop.f32.mrb[0].mxu0
        %952 = vmatprep.mubr.f32.mxu0 0.0
        %v953 = vand.u32 %v698, 4294901760
        %v954 = vsub.f32 %v698, %v953
        %v955 = vand.u32 %v954, 4294901760
        %v956 = vsub.f32 %v954, %v955
        %v957 = vand.u32 %v956, 4294901760
        %958 = vmatmul.mubr.f32.gmra.mrb[0].mxu0 %v957
        %v959 = vpop.f32.mrb[0].mxu0
        %v960 = vadd.f32 0.0, %v959
        %v961 = vpop.f32.mrb[0].mxu0
        %962 = vmatprep.mubr.f32.mxu0 0.0
        %v963 = vand.u32 %v701, 4294901760
        %v964 = vsub.f32 %v701, %v963
        %v965 = vand.u32 %v964, 4294901760
        %v966 = vsub.f32 %v964, %v965
        %v967 = vand.u32 %v966, 4294901760
        %968 = vmatmul.mubr.f32.gmra.mrb[0].mxu0 %v967
        %v969 = vpop.f32.mrb[0].mxu0
        %v970 = vadd.f32 0.0, %v969
        %v971 = vpop.f32.mrb[0].mxu0
        %972 = vmatprep.mubr.f32.mxu0 0.0
        %v973 = vand.u32 %v704, 4294901760
        %v974 = vsub.f32 %v704, %v973
        %v975 = vand.u32 %v974, 4294901760
        %v976 = vsub.f32 %v974, %v975
        %v977 = vand.u32 %v976, 4294901760
        %978 = vmatmul.mubr.f32.gmra.mrb[0].mxu0 %v977
        %v979 = vpop.f32.mrb[0].mxu0
        %v980 = vadd.f32 0.0, %v979
        %v981 = vpop.f32.mrb[0].mxu0
        %982 = vmatprep.mubr.f32.mxu0 0.0
        %v983 = vand.u32 %v707, 4294901760
        %v984 = vsub.f32 %v707, %v983
        %v985 = vand.u32 %v984, 4294901760
        %v986 = vsub.f32 %v984, %v985
        %v987 = vand.u32 %v986, 4294901760
        %988 = vmatmul.mubr.f32.gmra.mrb[0].mxu0 %v987
        %v989 = vpop.f32.mrb[0].mxu0
        %v990 = vadd.f32 0.0, %v989
        %v991 = vpop.f32.mrb[0].mxu0
        %992 = vmatprep.mubr.f32.mxu0 0.0
        %v993 = vand.u32 %v710, 4294901760
        %v994 = vsub.f32 %v710, %v993
        %v995 = vand.u32 %v994, 4294901760
        %v996 = vsub.f32 %v994, %v995
        %v997 = vand.u32 %v996, 4294901760
        %998 = vmatmul.mubr.f32.gmra.mrb[0].mxu0 %v997
        %v999 = vpop.f32.mrb[0].mxu0
        %v1000 = vadd.f32 0.0, %v999
        %v1001 = vpop.f32.mrb[0].mxu0
        %1002 = vmatprep.mubr.f32.mxu0 0.0
        %v1003 = vand.u32 %v713, 4294901760
        %v1004 = vsub.f32 %v713, %v1003
        %v1005 = vand.u32 %v1004, 4294901760
        %v1006 = vsub.f32 %v1004, %v1005
        %v1007 = vand.u32 %v1006, 4294901760
        %1008 = vmatmul.mubr.f32.gmra.mrb[0].mxu0 %v1007
        %v1009 = vpop.f32.mrb[0].mxu0
        %v1010 = vadd.f32 0.0, %v1009
        %v1011 = vpop.f32.mrb[0].mxu0
        %1012 = vmatprep.mubr.f32.mxu0 0.0
        %v1013 = vand.u32 %v716, 4294901760
        %v1014 = vsub.f32 %v716, %v1013
        %v1015 = vand.u32 %v1014, 4294901760
        %v1016 = vsub.f32 %v1014, %v1015
        %v1017 = vand.u32 %v1016, 4294901760
        %1018 = vmatmul.mubr.f32.gmra.mrb[0].mxu0 %v1017
        %v1019 = vpop.f32.mrb[0].mxu0
        %v1020 = vadd.f32 0.0, %v1019
        %v1021 = vpop.f32.mrb[0].mxu0
        %1022 = vmatprep.mubr.f32.mxu0 0.0
        %v1023 = vand.u32 %v719, 4294901760
        %v1024 = vsub.f32 %v719, %v1023
        %v1025 = vand.u32 %v1024, 4294901760
        %v1026 = vsub.f32 %v1024, %v1025
        %v1027 = vand.u32 %v1026, 4294901760
        %1028 = vmatmul.mubr.f32.gmra.mrb[0].mxu0 %v1027
        %v1029 = vpop.f32.mrb[0].mxu0
        %v1030 = vadd.f32 0.0, %v1029
        %v1031 = vpop.f32.mrb[0].mxu0
        %1032 = vmatprep.mubr.f32.mxu0 0.0
        %v1033 = vand.u32 %v722, 4294901760
        %v1034 = vsub.f32 %v722, %v1033
        %v1035 = vand.u32 %v1034, 4294901760
        %v1036 = vsub.f32 %v1034, %v1035
        %v1037 = vand.u32 %v1036, 4294901760
        %1038 = vmatmul.mubr.f32.gmra.mrb[0].mxu0 %v1037
        %v1039 = vpop.f32.mrb[0].mxu0
        %v1040 = vadd.f32 0.0, %v1039
        %v1041 = vpop.f32.mrb[0].mxu0
        %1042 = vmatprep.mubr.f32.mxu0 0.0
        %v1043 = vand.u32 %v725, 4294901760
        %v1044 = vsub.f32 %v725, %v1043
        %v1045 = vand.u32 %v1044, 4294901760
        %v1046 = vsub.f32 %v1044, %v1045
        %v1047 = vand.u32 %v1046, 4294901760
        %1048 = vmatmul.mubr.f32.gmra.mrb[0].mxu0 %v1047
        %v1049 = vpop.f32.mrb[0].mxu0
        %v1050 = vadd.f32 0.0, %v1049
        %v1051 = vpop.f32.mrb[0].mxu0
        %1052 = vmatprep.mubr.f32.mxu0 0.0
        %v1053 = vand.u32 %v728, 4294901760
        %v1054 = vsub.f32 %v728, %v1053
        %v1055 = vand.u32 %v1054, 4294901760
        %v1056 = vsub.f32 %v1054, %v1055
        %v1057 = vand.u32 %v1056, 4294901760
        %1058 = vmatmul.mubr.f32.gmra.mrb[0].mxu0 %v1057
        %v1059 = vpop.f32.mrb[0].mxu0
        %v1060 = vadd.f32 0.0, %v1059
        %v1061 = vpop.f32.mrb[0].mxu0
        %1062 = vmatprep.mubr.f32.mxu0 0.0
        %v1063 = vand.u32 %v731, 4294901760
        %v1064 = vsub.f32 %v731, %v1063
        %v1065 = vand.u32 %v1064, 4294901760
        %v1066 = vsub.f32 %v1064, %v1065
        %v1067 = vand.u32 %v1066, 4294901760
        %1068 = vmatmul.mubr.f32.gmra.mrb[0].mxu0 %v1067
        %v1069 = vpop.f32.mrb[0].mxu0
        %v1070 = vadd.f32 0.0, %v1069
        %v1071 = vpop.f32.mrb[0].mxu0
        %1072 = vmatprep.mubr.f32.mxu0 0.0
        %v1073 = vand.u32 %v734, 4294901760
        %v1074 = vsub.f32 %v734, %v1073
        %v1075 = vand.u32 %v1074, 4294901760
        %v1076 = vsub.f32 %v1074, %v1075
        %v1077 = vand.u32 %v1076, 4294901760
        %1078 = vmatmul.mubr.f32.gmra.mrb[0].mxu0 %v1077
        %v1079 = vpop.f32.mrb[0].mxu0
        %v1080 = vadd.f32 0.0, %v1079
        %v1081 = vpop.f32.mrb[0].mxu0
        %1082 = vmatprep.mubr.f32.mxu0 0.0
        %v1083 = vand.u32 %v737, 4294901760
        %v1084 = vsub.f32 %v737, %v1083
        %v1085 = vand.u32 %v1084, 4294901760
        %v1086 = vsub.f32 %v1084, %v1085
        %v1087 = vand.u32 %v1086, 4294901760
        %1088 = vmatmul.mubr.f32.gmra.mrb[0].mxu0 %v1087
        %v1089 = vpop.f32.mrb[0].mxu0
        %v1090 = vadd.f32 0.0, %v1089
        %v1091 = vpop.f32.mrb[0].mxu0
        %1092 = vmatprep.mubr.f32.mxu0 0.0
        %v1093 = vand.u32 %v740, 4294901760
        %v1094 = vsub.f32 %v740, %v1093
        %v1095 = vand.u32 %v1094, 4294901760
        %v1096 = vsub.f32 %v1094, %v1095
        %v1097 = vand.u32 %v1096, 4294901760
        %1098 = vmatmul.mubr.f32.gmra.mrb[0].mxu0 %v1097
        %v1099 = vpop.f32.mrb[0].mxu0
        %v1100 = vadd.f32 0.0, %v1099
        %v1101 = vpop.f32.mrb[0].mxu0
        %1102 = vmatprep.mubr.f32.mxu0 0.0
        %v1103 = vand.u32 %v743, 4294901760
        %v1104 = vsub.f32 %v743, %v1103
        %v1105 = vand.u32 %v1104, 4294901760
        %v1106 = vsub.f32 %v1104, %v1105
        %v1107 = vand.u32 %v1106, 4294901760
        %1108 = vmatmul.mubr.f32.gmra.mrb[0].mxu0 %v1107
        %v1109 = vpop.f32.mrb[0].mxu0
        %v1110 = vadd.f32 0.0, %v1109
        %v1111 = vpop.f32.mrb[0].mxu0
        %1112 = vmatprep.mubr.f32.mxu0 0.0
        %v1113 = vand.u32 %v746, 4294901760
        %v1114 = vsub.f32 %v746, %v1113
        %v1115 = vand.u32 %v1114, 4294901760
        %v1116 = vsub.f32 %v1114, %v1115
        %v1117 = vand.u32 %v1116, 4294901760
        %1118 = vmatmul.mubr.f32.gmra.mrb[0].mxu0 %v1117
        %v1119 = vpop.f32.mrb[0].mxu0
        %v1120 = vadd.f32 0.0, %v1119
        %v1121 = vpop.f32.mrb[0].mxu0
        %1122 = vmatprep.mubr.f32.mxu0 0.0
        %v1123 = vand.u32 %v749, 4294901760
        %v1124 = vsub.f32 %v749, %v1123
        %v1125 = vand.u32 %v1124, 4294901760
        %v1126 = vsub.f32 %v1124, %v1125
        %v1127 = vand.u32 %v1126, 4294901760
        %1128 = vmatmul.mubr.f32.gmra.mrb[0].mxu0 %v1127
        %v1129 = vpop.f32.mrb[0].mxu0
        %v1130 = vadd.f32 0.0, %v1129
        %v1131 = vpop.f32.mrb[0].mxu0
        %1132 = vmatprep.mubr.f32.mxu0 0.0
        %v1133 = vand.u32 %v752, 4294901760
        %v1134 = vsub.f32 %v752, %v1133
        %v1135 = vand.u32 %v1134, 4294901760
        %v1136 = vsub.f32 %v1134, %v1135
        %v1137 = vand.u32 %v1136, 4294901760
        %1138 = vmatmul.mubr.f32.gmra.mrb[0].mxu0 %v1137
        %v1139 = vpop.f32.mrb[0].mxu0
        %v1140 = vadd.f32 0.0, %v1139
        %v1141 = vpop.f32.mrb[0].mxu0
        %1142 = vdwg.mxu0
        %1143 = vmatprep.subr.mxu0 0.0
        %v1144 = vand.u32 %v653, 4294901760
        %v1145 = vsub.f32 %v653, %v1144
        %v1146 = vand.u32 %v1145, 4294901760
        %v1147 = vsub.f32 %v1145, %v1146
        %v1148 = vand.u32 %v1147, 4294901760
        %1149 = vmatpush1.msra.mxu0 %v1148
        %1150 = vmatprep.subr.mxu0 0.0
        %v1151 = vand.u32 %v654, 4294901760
        %v1152 = vsub.f32 %v654, %v1151
        %v1153 = vand.u32 %v1152, 4294901760
        %v1154 = vsub.f32 %v1152, %v1153
        %v1155 = vand.u32 %v1154, 4294901760
        %1156 = vmatpush1.msra.mxu0 %v1155
        %1157 = vmatprep.subr.mxu0 0.0
        %v1158 = vand.u32 %v655, 4294901760
        %v1159 = vsub.f32 %v655, %v1158
        %v1160 = vand.u32 %v1159, 4294901760
        %v1161 = vsub.f32 %v1159, %v1160
        %v1162 = vand.u32 %v1161, 4294901760
        %1163 = vmatpush1.msra.mxu0 %v1162
        %1164 = vmatprep.subr.mxu0 0.0
        %v1165 = vand.u32 %v656, 4294901760
        %v1166 = vsub.f32 %v656, %v1165
        %v1167 = vand.u32 %v1166, 4294901760
        %v1168 = vsub.f32 %v1166, %v1167
        %v1169 = vand.u32 %v1168, 4294901760
        %1170 = vmatpush1.msra.mxu0 %v1169
        %1171 = vmatprep.subr.mxu0 0.0
        %1172 = vmatpush1.msra.mxu0 0.0
        %1173 = vmatprep.subr.mxu0 0.0
        %1174 = vmatpush1.msra.mxu0 0.0
        %1175 = vmatprep.subr.mxu0 0.0
        %1176 = vmatpush1.msra.mxu0 0.0
        %1177 = vmatprep.subr.mxu0 0.0
        %1178 = vmatpush1.msra.mxu0 0.0
        %1179 = vmatprep.subr.mxu0 0.0
        %1180 = vmatpush1.msra.mxu0 0.0
        %1181 = vmatprep.subr.mxu0 0.0
        %1182 = vmatpush1.msra.mxu0 0.0
        %1183 = vmatprep.subr.mxu0 0.0
        %1184 = vmatpush1.msra.mxu0 0.0
        %1185 = vmatprep.subr.mxu0 0.0
        %1186 = vmatpush1.msra.mxu0 0.0
        %1187 = vmatprep.subr.mxu0 0.0
        %1188 = vmatpush1.msra.mxu0 0.0
        %1189 = vmatprep.subr.mxu0 0.0
        %1190 = vmatpush1.msra.mxu0 0.0
        %1191 = vmatprep.subr.mxu0 0.0
        %1192 = vmatpush1.msra.mxu0 0.0
        %1193 = vmatprep.subr.mxu0 0.0
        %1194 = vmatpush1.msra.mxu0 0.0
        %1195 = vmatprep.subr.mxu0 0.0
        %1196 = vmatpush1.msra.mxu0 0.0
        %1197 = vmatprep.subr.mxu0 0.0
        %1198 = vmatpush1.msra.mxu0 0.0
        %1199 = vmatprep.subr.mxu0 0.0
        %1200 = vmatpush1.msra.mxu0 0.0
        %1201 = vmatprep.subr.mxu0 0.0
        %1202 = vmatpush1.msra.mxu0 0.0
        %1203 = vmatprep.subr.mxu0 0.0
        %1204 = vmatpush1.msra.mxu0 0.0
        %1205 = vmatprep.subr.mxu0 0.0
        %1206 = vmatpush1.msra.mxu0 0.0
        %1207 = vmatprep.subr.mxu0 0.0
        %1208 = vmatpush1.msra.mxu0 0.0
        %1209 = vmatprep.subr.mxu0 0.0
        %1210 = vmatpush1.msra.mxu0 0.0
        %1211 = vmatprep.subr.mxu0 0.0
        %1212 = vmatpush1.msra.mxu0 0.0
        %1213 = vmatprep.subr.mxu0 0.0
        %1214 = vmatpush1.msra.mxu0 0.0
        %1215 = vmatprep.subr.mxu0 0.0
        %1216 = vmatpush1.msra.mxu0 0.0
        %1217 = vmatprep.subr.mxu0 0.0
        %1218 = vmatpush1.msra.mxu0 0.0
        %1219 = vmatprep.subr.mxu0 0.0
        %1220 = vmatpush1.msra.mxu0 0.0
        %1221 = vmatprep.subr.mxu0 0.0
        %1222 = vmatpush1.msra.mxu0 0.0
        %1223 = vmatprep.subr.mxu0 0.0
        %1224 = vmatpush1.msra.mxu0 0.0
        %1225 = vmatprep.subr.mxu0 0.0
        %1226 = vmatpush1.msra.mxu0 0.0
        %1227 = vmatprep.mubr.f32.mxu0 0.0
        %v1228 = vand.u32 %v659, 4294901760
        %1229 = vmatmul.mubr.f32.gmra.mrb[0].mxu0 %v1228
        %v1230 = vpop.f32.mrb[0].mxu0
        %v1231 = vadd.f32 %v830, %v1230
        %v1232 = vpop.f32.mrb[0].mxu0
        %1233 = vmatprep.mubr.f32.mxu0 0.0
        %v1234 = vand.u32 %v662, 4294901760
        %1235 = vmatmul.mubr.f32.gmra.mrb[0].mxu0 %v1234
        %v1236 = vpop.f32.mrb[0].mxu0
        %v1237 = vadd.f32 %v840, %v1236
        %v1238 = vpop.f32.mrb[0].mxu0
        %1239 = vmatprep.mubr.f32.mxu0 0.0
        %v1240 = vand.u32 %v665, 4294901760
        %1241 = vmatmul.mubr.f32.gmra.mrb[0].mxu0 %v1240
        %v1242 = vpop.f32.mrb[0].mxu0
        %v1243 = vadd.f32 %v850, %v1242
        %v1244 = vpop.f32.mrb[0].mxu0
        %1245 = vmatprep.mubr.f32.mxu0 0.0
        %v1246 = vand.u32 %v668, 4294901760
        %1247 = vmatmul.mubr.f32.gmra.mrb[0].mxu0 %v1246
        %v1248 = vpop.f32.mrb[0].mxu0
        %v1249 = vadd.f32 %v860, %v1248
        %v1250 = vpop.f32.mrb[0].mxu0
        %1251 = vmatprep.mubr.f32.mxu0 0.0
        %v1252 = vand.u32 %v671, 4294901760
        %1253 = vmatmul.mubr.f32.gmra.mrb[0].mxu0 %v1252
        %v1254 = vpop.f32.mrb[0].mxu0
        %v1255 = vadd.f32 %v870, %v1254
        %v1256 = vpop.f32.mrb[0].mxu0
        %1257 = vmatprep.mubr.f32.mxu0 0.0
        %v1258 = vand.u32 %v674, 4294901760
        %1259 = vmatmul.mubr.f32.gmra.mrb[0].mxu0 %v1258
        %v1260 = vpop.f32.mrb[0].mxu0
        %v1261 = vadd.f32 %v880, %v1260
        %v1262 = vpop.f32.mrb[0].mxu0
        %1263 = vmatprep.mubr.f32.mxu0 0.0
        %v1264 = vand.u32 %v677, 4294901760
        %1265 = vmatmul.mubr.f32.gmra.mrb[0].mxu0 %v1264
        %v1266 = vpop.f32.mrb[0].mxu0
        %v1267 = vadd.f32 %v890, %v1266
        %v1268 = vpop.f32.mrb[0].mxu0
        %1269 = vmatprep.mubr.f32.mxu0 0.0
        %v1270 = vand.u32 %v680, 4294901760
        %1271 = vmatmul.mubr.f32.gmra.mrb[0].mxu0 %v1270
        %v1272 = vpop.f32.mrb[0].mxu0
        %v1273 = vadd.f32 %v900, %v1272
        %v1274 = vpop.f32.mrb[0].mxu0
        %1275 = vmatprep.mubr.f32.mxu0 0.0
        %v1276 = vand.u32 %v683, 4294901760
        %1277 = vmatmul.mubr.f32.gmra.mrb[0].mxu0 %v1276
        %v1278 = vpop.f32.mrb[0].mxu0
        %v1279 = vadd.f32 %v910, %v1278
        %v1280 = vpop.f32.mrb[0].mxu0
        %1281 = vmatprep.mubr.f32.mxu0 0.0
        %v1282 = vand.u32 %v686, 4294901760
        %1283 = vmatmul.mubr.f32.gmra.mrb[0].mxu0 %v1282
        %v1284 = vpop.f32.mrb[0].mxu0
        %v1285 = vadd.f32 %v920, %v1284
        %v1286 = vpop.f32.mrb[0].mxu0
        %1287 = vmatprep.mubr.f32.mxu0 0.0
        %v1288 = vand.u32 %v689, 4294901760
        %1289 = vmatmul.mubr.f32.gmra.mrb[0].mxu0 %v1288
        %v1290 = vpop.f32.mrb[0].mxu0
        %v1291 = vadd.f32 %v930, %v1290
        %v1292 = vpop.f32.mrb[0].mxu0
        %1293 = vmatprep.mubr.f32.mxu0 0.0
        %v1294 = vand.u32 %v692, 4294901760
        %1295 = vmatmul.mubr.f32.gmra.mrb[0].mxu0 %v1294
        %v1296 = vpop.f32.mrb[0].mxu0
        %v1297 = vadd.f32 %v940, %v1296
        %v1298 = vpop.f32.mrb[0].mxu0
        %1299 = vmatprep.mubr.f32.mxu0 0.0
        %v1300 = vand.u32 %v695, 4294901760
        %1301 = vmatmul.mubr.f32.gmra.mrb[0].mxu0 %v1300
        %v1302 = vpop.f32.mrb[0].mxu0
        %v1303 = vadd.f32 %v950, %v1302
        %v1304 = vpop.f32.mrb[0].mxu0
        %1305 = vmatprep.mubr.f32.mxu0 0.0
        %v1306 = vand.u32 %v698, 4294901760
        %1307 = vmatmul.mubr.f32.gmra.mrb[0].mxu0 %v1306
        %v1308 = vpop.f32.mrb[0].mxu0
        %v1309 = vadd.f32 %v960, %v1308
        %v1310 = vpop.f32.mrb[0].mxu0
        %1311 = vmatprep.mubr.f32.mxu0 0.0
        %v1312 = vand.u32 %v701, 4294901760
        %1313 = vmatmul.mubr.f32.gmra.mrb[0].mxu0 %v1312
        %v1314 = vpop.f32.mrb[0].mxu0
        %v1315 = vadd.f32 %v970, %v1314
        %v1316 = vpop.f32.mrb[0].mxu0
        %1317 = vmatprep.mubr.f32.mxu0 0.0
        %v1318 = vand.u32 %v704, 4294901760
        %1319 = vmatmul.mubr.f32.gmra.mrb[0].mxu0 %v1318
        %v1320 = vpop.f32.mrb[0].mxu0
        %v1321 = vadd.f32 %v980, %v1320
        %v1322 = vpop.f32.mrb[0].mxu0
        %1323 = vmatprep.mubr.f32.mxu0 0.0
        %v1324 = vand.u32 %v707, 4294901760
        %1325 = vmatmul.mubr.f32.gmra.mrb[0].mxu0 %v1324
        %v1326 = vpop.f32.mrb[0].mxu0
        %v1327 = vadd.f32 %v990, %v1326
        %v1328 = vpop.f32.mrb[0].mxu0
        %1329 = vmatprep.mubr.f32.mxu0 0.0
        %v1330 = vand.u32 %v710, 4294901760
        %1331 = vmatmul.mubr.f32.gmra.mrb[0].mxu0 %v1330
        %v1332 = vpop.f32.mrb[0].mxu0
        %v1333 = vadd.f32 %v1000, %v1332
        %v1334 = vpop.f32.mrb[0].mxu0
        %1335 = vmatprep.mubr.f32.mxu0 0.0
        %v1336 = vand.u32 %v713, 4294901760
        %1337 = vmatmul.mubr.f32.gmra.mrb[0].mxu0 %v1336
        %v1338 = vpop.f32.mrb[0].mxu0
        %v1339 = vadd.f32 %v1010, %v1338
        %v1340 = vpop.f32.mrb[0].mxu0
        %1341 = vmatprep.mubr.f32.mxu0 0.0
        %v1342 = vand.u32 %v716, 4294901760
        %1343 = vmatmul.mubr.f32.gmra.mrb[0].mxu0 %v1342
        %v1344 = vpop.f32.mrb[0].mxu0
        %v1345 = vadd.f32 %v1020, %v1344
        %v1346 = vpop.f32.mrb[0].mxu0
        %1347 = vmatprep.mubr.f32.mxu0 0.0
        %v1348 = vand.u32 %v719, 4294901760
        %1349 = vmatmul.mubr.f32.gmra.mrb[0].mxu0 %v1348
        %v1350 = vpop.f32.mrb[0].mxu0
        %v1351 = vadd.f32 %v1030, %v1350
        %v1352 = vpop.f32.mrb[0].mxu0
        %1353 = vmatprep.mubr.f32.mxu0 0.0
        %v1354 = vand.u32 %v722, 4294901760
        %1355 = vmatmul.mubr.f32.gmra.mrb[0].mxu0 %v1354
        %v1356 = vpop.f32.mrb[0].mxu0
        %v1357 = vadd.f32 %v1040, %v1356
        %v1358 = vpop.f32.mrb[0].mxu0
        %1359 = vmatprep.mubr.f32.mxu0 0.0
        %v1360 = vand.u32 %v725, 4294901760
        %1361 = vmatmul.mubr.f32.gmra.mrb[0].mxu0 %v1360
        %v1362 = vpop.f32.mrb[0].mxu0
        %v1363 = vadd.f32 %v1050, %v1362
        %v1364 = vpop.f32.mrb[0].mxu0
        %1365 = vmatprep.mubr.f32.mxu0 0.0
        %v1366 = vand.u32 %v728, 4294901760
        %1367 = vmatmul.mubr.f32.gmra.mrb[0].mxu0 %v1366
        %v1368 = vpop.f32.mrb[0].mxu0
        %v1369 = vadd.f32 %v1060, %v1368
        %v1370 = vpop.f32.mrb[0].mxu0
        %1371 = vmatprep.mubr.f32.mxu0 0.0
        %v1372 = vand.u32 %v731, 4294901760
        %1373 = vmatmul.mubr.f32.gmra.mrb[0].mxu0 %v1372
        %v1374 = vpop.f32.mrb[0].mxu0
        %v1375 = vadd.f32 %v1070, %v1374
        %v1376 = vpop.f32.mrb[0].mxu0
        %1377 = vmatprep.mubr.f32.mxu0 0.0
        %v1378 = vand.u32 %v734, 4294901760
        %1379 = vmatmul.mubr.f32.gmra.mrb[0].mxu0 %v1378
        %v1380 = vpop.f32.mrb[0].mxu0
        %v1381 = vadd.f32 %v1080, %v1380
        %v1382 = vpop.f32.mrb[0].mxu0
        %1383 = vmatprep.mubr.f32.mxu0 0.0
        %v1384 = vand.u32 %v737, 4294901760
        %1385 = vmatmul.mubr.f32.gmra.mrb[0].mxu0 %v1384
        %v1386 = vpop.f32.mrb[0].mxu0
        %v1387 = vadd.f32 %v1090, %v1386
        %v1388 = vpop.f32.mrb[0].mxu0
        %1389 = vmatprep.mubr.f32.mxu0 0.0
        %v1390 = vand.u32 %v740, 4294901760
        %1391 = vmatmul.mubr.f32.gmra.mrb[0].mxu0 %v1390
        %v1392 = vpop.f32.mrb[0].mxu0
        %v1393 = vadd.f32 %v1100, %v1392
        %v1394 = vpop.f32.mrb[0].mxu0
        %1395 = vmatprep.mubr.f32.mxu0 0.0
        %v1396 = vand.u32 %v743, 4294901760
        %1397 = vmatmul.mubr.f32.gmra.mrb[0].mxu0 %v1396
        %v1398 = vpop.f32.mrb[0].mxu0
        %v1399 = vadd.f32 %v1110, %v1398
        %v1400 = vpop.f32.mrb[0].mxu0
        %1401 = vmatprep.mubr.f32.mxu0 0.0
        %v1402 = vand.u32 %v746, 4294901760
        %1403 = vmatmul.mubr.f32.gmra.mrb[0].mxu0 %v1402
        %v1404 = vpop.f32.mrb[0].mxu0
        %v1405 = vadd.f32 %v1120, %v1404
        %v1406 = vpop.f32.mrb[0].mxu0
        %1407 = vmatprep.mubr.f32.mxu0 0.0
        %v1408 = vand.u32 %v749, 4294901760
        %1409 = vmatmul.mubr.f32.gmra.mrb[0].mxu0 %v1408
        %v1410 = vpop.f32.mrb[0].mxu0
        %v1411 = vadd.f32 %v1130, %v1410
        %v1412 = vpop.f32.mrb[0].mxu0
        %1413 = vmatprep.mubr.f32.mxu0 0.0
        %v1414 = vand.u32 %v752, 4294901760
        %1415 = vmatmul.mubr.f32.gmra.mrb[0].mxu0 %v1414
        %v1416 = vpop.f32.mrb[0].mxu0
        %v1417 = vadd.f32 %v1140, %v1416
        %v1418 = vpop.f32.mrb[0].mxu0
        %1419 = vdwg.mxu0
        %1420 = vmatprep.subr.mxu0 0.0
        %v1421 = vand.u32 %v653, 4294901760
        %v1422 = vsub.f32 %v653, %v1421
        %1423 = vmatpush1.msra.mxu0 %v1422
        %1424 = vmatprep.subr.mxu0 0.0
        %v1425 = vand.u32 %v654, 4294901760
        %v1426 = vsub.f32 %v654, %v1425
        %1427 = vmatpush1.msra.mxu0 %v1426
        %1428 = vmatprep.subr.mxu0 0.0
        %v1429 = vand.u32 %v655, 4294901760
        %v1430 = vsub.f32 %v655, %v1429
        %1431 = vmatpush1.msra.mxu0 %v1430
        %1432 = vmatprep.subr.mxu0 0.0
        %v1433 = vand.u32 %v656, 4294901760
        %v1434 = vsub.f32 %v656, %v1433
        %1435 = vmatpush1.msra.mxu0 %v1434
        %1436 = vmatprep.subr.mxu0 0.0
        %1437 = vmatpush1.msra.mxu0 0.0
        %1438 = vmatprep.subr.mxu0 0.0
        %1439 = vmatpush1.msra.mxu0 0.0
        %1440 = vmatprep.subr.mxu0 0.0
        %1441 = vmatpush1.msra.mxu0 0.0
        %1442 = vmatprep.subr.mxu0 0.0
        %1443 = vmatpush1.msra.mxu0 0.0
        %1444 = vmatprep.subr.mxu0 0.0
        %1445 = vmatpush1.msra.mxu0 0.0
        %1446 = vmatprep.subr.mxu0 0.0
        %1447 = vmatpush1.msra.mxu0 0.0
        %1448 = vmatprep.subr.mxu0 0.0
        %1449 = vmatpush1.msra.mxu0 0.0
        %1450 = vmatprep.subr.mxu0 0.0
        %1451 = vmatpush1.msra.mxu0 0.0
        %1452 = vmatprep.subr.mxu0 0.0
        %1453 = vmatpush1.msra.mxu0 0.0
        %1454 = vmatprep.subr.mxu0 0.0
        %1455 = vmatpush1.msra.mxu0 0.0
        %1456 = vmatprep.subr.mxu0 0.0
        %1457 = vmatpush1.msra.mxu0 0.0
        %1458 = vmatprep.subr.mxu0 0.0
        %1459 = vmatpush1.msra.mxu0 0.0
        %1460 = vmatprep.subr.mxu0 0.0
        %1461 = vmatpush1.msra.mxu0 0.0
        %1462 = vmatprep.subr.mxu0 0.0
        %1463 = vmatpush1.msra.mxu0 0.0
        %1464 = vmatprep.subr.mxu0 0.0
        %1465 = vmatpush1.msra.mxu0 0.0
        %1466 = vmatprep.subr.mxu0 0.0
        %1467 = vmatpush1.msra.mxu0 0.0
        %1468 = vmatprep.subr.mxu0 0.0
        %1469 = vmatpush1.msra.mxu0 0.0
        %1470 = vmatprep.subr.mxu0 0.0
        %1471 = vmatpush1.msra.mxu0 0.0
        %1472 = vmatprep.subr.mxu0 0.0
        %1473 = vmatpush1.msra.mxu0 0.0
        %1474 = vmatprep.subr.mxu0 0.0
        %1475 = vmatpush1.msra.mxu0 0.0
        %1476 = vmatprep.subr.mxu0 0.0
        %1477 = vmatpush1.msra.mxu0 0.0
        %1478 = vmatprep.subr.mxu0 0.0
        %1479 = vmatpush1.msra.mxu0 0.0
        %1480 = vmatprep.subr.mxu0 0.0
        %1481 = vmatpush1.msra.mxu0 0.0
        %1482 = vmatprep.subr.mxu0 0.0
        %1483 = vmatpush1.msra.mxu0 0.0
        %1484 = vmatprep.subr.mxu0 0.0
        %1485 = vmatpush1.msra.mxu0 0.0
        %1486 = vmatprep.subr.mxu0 0.0
        %1487 = vmatpush1.msra.mxu0 0.0
        %1488 = vmatprep.subr.mxu0 0.0
        %1489 = vmatpush1.msra.mxu0 0.0
        %1490 = vmatprep.subr.mxu0 0.0
        %1491 = vmatpush1.msra.mxu0 0.0
        %1492 = vmatprep.mubr.f32.mxu0 0.0
        %v1493 = vand.u32 %v659, 4294901760
        %v1494 = vsub.f32 %v659, %v1493
        %1495 = vmatmul.mubr.f32.gmra.mrb[0].mxu0 %v1494
        %v1496 = vpop.f32.mrb[0].mxu0
        %v1497 = vadd.f32 %v1231, %v1496
        %v1498 = vpop.f32.mrb[0].mxu0
        %1499 = vmatprep.mubr.f32.mxu0 0.0
        %v1500 = vand.u32 %v662, 4294901760
        %v1501 = vsub.f32 %v662, %v1500
        %1502 = vmatmul.mubr.f32.gmra.mrb[0].mxu0 %v1501
        %v1503 = vpop.f32.mrb[0].mxu0
        %v1504 = vadd.f32 %v1237, %v1503
        %v1505 = vpop.f32.mrb[0].mxu0
        %1506 = vmatprep.mubr.f32.mxu0 0.0
        %v1507 = vand.u32 %v665, 4294901760
        %v1508 = vsub.f32 %v665, %v1507
        %1509 = vmatmul.mubr.f32.gmra.mrb[0].mxu0 %v1508
        %v1510 = vpop.f32.mrb[0].mxu0
        %v1511 = vadd.f32 %v1243, %v1510
        %v1512 = vpop.f32.mrb[0].mxu0
        %1513 = vmatprep.mubr.f32.mxu0 0.0
        %v1514 = vand.u32 %v668, 4294901760
        %v1515 = vsub.f32 %v668, %v1514
        %1516 = vmatmul.mubr.f32.gmra.mrb[0].mxu0 %v1515
        %v1517 = vpop.f32.mrb[0].mxu0
        %v1518 = vadd.f32 %v1249, %v1517
        %v1519 = vpop.f32.mrb[0].mxu0
        %1520 = vmatprep.mubr.f32.mxu0 0.0
        %v1521 = vand.u32 %v671, 4294901760
        %v1522 = vsub.f32 %v671, %v1521
        %1523 = vmatmul.mubr.f32.gmra.mrb[0].mxu0 %v1522
        %v1524 = vpop.f32.mrb[0].mxu0
        %v1525 = vadd.f32 %v1255, %v1524
        %v1526 = vpop.f32.mrb[0].mxu0
        %1527 = vmatprep.mubr.f32.mxu0 0.0
        %v1528 = vand.u32 %v674, 4294901760
        %v1529 = vsub.f32 %v674, %v1528
        %1530 = vmatmul.mubr.f32.gmra.mrb[0].mxu0 %v1529
        %v1531 = vpop.f32.mrb[0].mxu0
        %v1532 = vadd.f32 %v1261, %v1531
        %v1533 = vpop.f32.mrb[0].mxu0
        %1534 = vmatprep.mubr.f32.mxu0 0.0
        %v1535 = vand.u32 %v677, 4294901760
        %v1536 = vsub.f32 %v677, %v1535
        %1537 = vmatmul.mubr.f32.gmra.mrb[0].mxu0 %v1536
        %v1538 = vpop.f32.mrb[0].mxu0
        %v1539 = vadd.f32 %v1267, %v1538
        %v1540 = vpop.f32.mrb[0].mxu0
        %1541 = vmatprep.mubr.f32.mxu0 0.0
        %v1542 = vand.u32 %v680, 4294901760
        %v1543 = vsub.f32 %v680, %v1542
        %1544 = vmatmul.mubr.f32.gmra.mrb[0].mxu0 %v1543
        %v1545 = vpop.f32.mrb[0].mxu0
        %v1546 = vadd.f32 %v1273, %v1545
        %v1547 = vpop.f32.mrb[0].mxu0
        %1548 = vmatprep.mubr.f32.mxu0 0.0
        %v1549 = vand.u32 %v683, 4294901760
        %v1550 = vsub.f32 %v683, %v1549
        %1551 = vmatmul.mubr.f32.gmra.mrb[0].mxu0 %v1550
        %v1552 = vpop.f32.mrb[0].mxu0
        %v1553 = vadd.f32 %v1279, %v1552
        %v1554 = vpop.f32.mrb[0].mxu0
        %1555 = vmatprep.mubr.f32.mxu0 0.0
        %v1556 = vand.u32 %v686, 4294901760
        %v1557 = vsub.f32 %v686, %v1556
        %1558 = vmatmul.mubr.f32.gmra.mrb[0].mxu0 %v1557
        %v1559 = vpop.f32.mrb[0].mxu0
        %v1560 = vadd.f32 %v1285, %v1559
        %v1561 = vpop.f32.mrb[0].mxu0
        %1562 = vmatprep.mubr.f32.mxu0 0.0
        %v1563 = vand.u32 %v689, 4294901760
        %v1564 = vsub.f32 %v689, %v1563
        %1565 = vmatmul.mubr.f32.gmra.mrb[0].mxu0 %v1564
        %v1566 = vpop.f32.mrb[0].mxu0
        %v1567 = vadd.f32 %v1291, %v1566
        %v1568 = vpop.f32.mrb[0].mxu0
        %1569 = vmatprep.mubr.f32.mxu0 0.0
        %v1570 = vand.u32 %v692, 4294901760
        %v1571 = vsub.f32 %v692, %v1570
        %1572 = vmatmul.mubr.f32.gmra.mrb[0].mxu0 %v1571
        %v1573 = vpop.f32.mrb[0].mxu0
        %v1574 = vadd.f32 %v1297, %v1573
        %v1575 = vpop.f32.mrb[0].mxu0
        %1576 = vmatprep.mubr.f32.mxu0 0.0
        %v1577 = vand.u32 %v695, 4294901760
        %v1578 = vsub.f32 %v695, %v1577
        %1579 = vmatmul.mubr.f32.gmra.mrb[0].mxu0 %v1578
        %v1580 = vpop.f32.mrb[0].mxu0
        %v1581 = vadd.f32 %v1303, %v1580
        %v1582 = vpop.f32.mrb[0].mxu0
        %1583 = vmatprep.mubr.f32.mxu0 0.0
        %v1584 = vand.u32 %v698, 4294901760
        %v1585 = vsub.f32 %v698, %v1584
        %1586 = vmatmul.mubr.f32.gmra.mrb[0].mxu0 %v1585
        %v1587 = vpop.f32.mrb[0].mxu0
        %v1588 = vadd.f32 %v1309, %v1587
        %v1589 = vpop.f32.mrb[0].mxu0
        %1590 = vmatprep.mubr.f32.mxu0 0.0
        %v1591 = vand.u32 %v701, 4294901760
        %v1592 = vsub.f32 %v701, %v1591
        %1593 = vmatmul.mubr.f32.gmra.mrb[0].mxu0 %v1592
        %v1594 = vpop.f32.mrb[0].mxu0
        %v1595 = vadd.f32 %v1315, %v1594
        %v1596 = vpop.f32.mrb[0].mxu0
        %1597 = vmatprep.mubr.f32.mxu0 0.0
        %v1598 = vand.u32 %v704, 4294901760
        %v1599 = vsub.f32 %v704, %v1598
        %1600 = vmatmul.mubr.f32.gmra.mrb[0].mxu0 %v1599
        %v1601 = vpop.f32.mrb[0].mxu0
        %v1602 = vadd.f32 %v1321, %v1601
        %v1603 = vpop.f32.mrb[0].mxu0
        %1604 = vmatprep.mubr.f32.mxu0 0.0
        %v1605 = vand.u32 %v707, 4294901760
        %v1606 = vsub.f32 %v707, %v1605
        %1607 = vmatmul.mubr.f32.gmra.mrb[0].mxu0 %v1606
        %v1608 = vpop.f32.mrb[0].mxu0
        %v1609 = vadd.f32 %v1327, %v1608
        %v1610 = vpop.f32.mrb[0].mxu0
        %1611 = vmatprep.mubr.f32.mxu0 0.0
        %v1612 = vand.u32 %v710, 4294901760
        %v1613 = vsub.f32 %v710, %v1612
        %1614 = vmatmul.mubr.f32.gmra.mrb[0].mxu0 %v1613
        %v1615 = vpop.f32.mrb[0].mxu0
        %v1616 = vadd.f32 %v1333, %v1615
        %v1617 = vpop.f32.mrb[0].mxu0
        %1618 = vmatprep.mubr.f32.mxu0 0.0
        %v1619 = vand.u32 %v713, 4294901760
        %v1620 = vsub.f32 %v713, %v1619
        %1621 = vmatmul.mubr.f32.gmra.mrb[0].mxu0 %v1620
        %v1622 = vpop.f32.mrb[0].mxu0
        %v1623 = vadd.f32 %v1339, %v1622
        %v1624 = vpop.f32.mrb[0].mxu0
        %1625 = vmatprep.mubr.f32.mxu0 0.0
        %v1626 = vand.u32 %v716, 4294901760
        %v1627 = vsub.f32 %v716, %v1626
        %1628 = vmatmul.mubr.f32.gmra.mrb[0].mxu0 %v1627
        %v1629 = vpop.f32.mrb[0].mxu0
        %v1630 = vadd.f32 %v1345, %v1629
        %v1631 = vpop.f32.mrb[0].mxu0
        %1632 = vmatprep.mubr.f32.mxu0 0.0
        %v1633 = vand.u32 %v719, 4294901760
        %v1634 = vsub.f32 %v719, %v1633
        %1635 = vmatmul.mubr.f32.gmra.mrb[0].mxu0 %v1634
        %v1636 = vpop.f32.mrb[0].mxu0
        %v1637 = vadd.f32 %v1351, %v1636
        %v1638 = vpop.f32.mrb[0].mxu0
        %1639 = vmatprep.mubr.f32.mxu0 0.0
        %v1640 = vand.u32 %v722, 4294901760
        %v1641 = vsub.f32 %v722, %v1640
        %1642 = vmatmul.mubr.f32.gmra.mrb[0].mxu0 %v1641
        %v1643 = vpop.f32.mrb[0].mxu0
        %v1644 = vadd.f32 %v1357, %v1643
        %v1645 = vpop.f32.mrb[0].mxu0
        %1646 = vmatprep.mubr.f32.mxu0 0.0
        %v1647 = vand.u32 %v725, 4294901760
        %v1648 = vsub.f32 %v725, %v1647
        %1649 = vmatmul.mubr.f32.gmra.mrb[0].mxu0 %v1648
        %v1650 = vpop.f32.mrb[0].mxu0
        %v1651 = vadd.f32 %v1363, %v1650
        %v1652 = vpop.f32.mrb[0].mxu0
        %1653 = vmatprep.mubr.f32.mxu0 0.0
        %v1654 = vand.u32 %v728, 4294901760
        %v1655 = vsub.f32 %v728, %v1654
        %1656 = vmatmul.mubr.f32.gmra.mrb[0].mxu0 %v1655
        %v1657 = vpop.f32.mrb[0].mxu0
        %v1658 = vadd.f32 %v1369, %v1657
        %v1659 = vpop.f32.mrb[0].mxu0
        %1660 = vmatprep.mubr.f32.mxu0 0.0
        %v1661 = vand.u32 %v731, 4294901760
        %v1662 = vsub.f32 %v731, %v1661
        %1663 = vmatmul.mubr.f32.gmra.mrb[0].mxu0 %v1662
        %v1664 = vpop.f32.mrb[0].mxu0
        %v1665 = vadd.f32 %v1375, %v1664
        %v1666 = vpop.f32.mrb[0].mxu0
        %1667 = vmatprep.mubr.f32.mxu0 0.0
        %v1668 = vand.u32 %v734, 4294901760
        %v1669 = vsub.f32 %v734, %v1668
        %1670 = vmatmul.mubr.f32.gmra.mrb[0].mxu0 %v1669
        %v1671 = vpop.f32.mrb[0].mxu0
        %v1672 = vadd.f32 %v1381, %v1671
        %v1673 = vpop.f32.mrb[0].mxu0
        %1674 = vmatprep.mubr.f32.mxu0 0.0
        %v1675 = vand.u32 %v737, 4294901760
        %v1676 = vsub.f32 %v737, %v1675
        %1677 = vmatmul.mubr.f32.gmra.mrb[0].mxu0 %v1676
        %v1678 = vpop.f32.mrb[0].mxu0
        %v1679 = vadd.f32 %v1387, %v1678
        %v1680 = vpop.f32.mrb[0].mxu0
        %1681 = vmatprep.mubr.f32.mxu0 0.0
        %v1682 = vand.u32 %v740, 4294901760
        %v1683 = vsub.f32 %v740, %v1682
        %1684 = vmatmul.mubr.f32.gmra.mrb[0].mxu0 %v1683
        %v1685 = vpop.f32.mrb[0].mxu0
        %v1686 = vadd.f32 %v1393, %v1685
        %v1687 = vpop.f32.mrb[0].mxu0
        %1688 = vmatprep.mubr.f32.mxu0 0.0
        %v1689 = vand.u32 %v743, 4294901760
        %v1690 = vsub.f32 %v743, %v1689
        %1691 = vmatmul.mubr.f32.gmra.mrb[0].mxu0 %v1690
        %v1692 = vpop.f32.mrb[0].mxu0
        %v1693 = vadd.f32 %v1399, %v1692
        %v1694 = vpop.f32.mrb[0].mxu0
        %1695 = vmatprep.mubr.f32.mxu0 0.0
        %v1696 = vand.u32 %v746, 4294901760
        %v1697 = vsub.f32 %v746, %v1696
        %1698 = vmatmul.mubr.f32.gmra.mrb[0].mxu0 %v1697
        %v1699 = vpop.f32.mrb[0].mxu0
        %v1700 = vadd.f32 %v1405, %v1699
        %v1701 = vpop.f32.mrb[0].mxu0
        %1702 = vmatprep.mubr.f32.mxu0 0.0
        %v1703 = vand.u32 %v749, 4294901760
        %v1704 = vsub.f32 %v749, %v1703
        %1705 = vmatmul.mubr.f32.gmra.mrb[0].mxu0 %v1704
        %v1706 = vpop.f32.mrb[0].mxu0
        %v1707 = vadd.f32 %v1411, %v1706
        %v1708 = vpop.f32.mrb[0].mxu0
        %1709 = vmatprep.mubr.f32.mxu0 0.0
        %v1710 = vand.u32 %v752, 4294901760
        %v1711 = vsub.f32 %v752, %v1710
        %1712 = vmatmul.mubr.f32.gmra.mrb[0].mxu0 %v1711
        %v1713 = vpop.f32.mrb[0].mxu0
        %v1714 = vadd.f32 %v1417, %v1713
        %v1715 = vpop.f32.mrb[0].mxu0
        %1716 = vdwg.mxu0
        %1717 = vmatprep.subr.mxu0 0.0
        %v1718 = vand.u32 %v653, 4294901760
        %1719 = vmatpush1.msra.mxu0 %v1718
        %1720 = vmatprep.subr.mxu0 0.0
        %v1721 = vand.u32 %v654, 4294901760
        %1722 = vmatpush1.msra.mxu0 %v1721
        %1723 = vmatprep.subr.mxu0 0.0
        %v1724 = vand.u32 %v655, 4294901760
        %1725 = vmatpush1.msra.mxu0 %v1724
        %1726 = vmatprep.subr.mxu0 0.0
        %v1727 = vand.u32 %v656, 4294901760
        %1728 = vmatpush1.msra.mxu0 %v1727
        %1729 = vmatprep.subr.mxu0 0.0
        %1730 = vmatpush1.msra.mxu0 0.0
        %1731 = vmatprep.subr.mxu0 0.0
        %1732 = vmatpush1.msra.mxu0 0.0
        %1733 = vmatprep.subr.mxu0 0.0
        %1734 = vmatpush1.msra.mxu0 0.0
        %1735 = vmatprep.subr.mxu0 0.0
        %1736 = vmatpush1.msra.mxu0 0.0
        %1737 = vmatprep.subr.mxu0 0.0
        %1738 = vmatpush1.msra.mxu0 0.0
        %1739 = vmatprep.subr.mxu0 0.0
        %1740 = vmatpush1.msra.mxu0 0.0
        %1741 = vmatprep.subr.mxu0 0.0
        %1742 = vmatpush1.msra.mxu0 0.0
        %1743 = vmatprep.subr.mxu0 0.0
        %1744 = vmatpush1.msra.mxu0 0.0
        %1745 = vmatprep.subr.mxu0 0.0
        %1746 = vmatpush1.msra.mxu0 0.0
        %1747 = vmatprep.subr.mxu0 0.0
        %1748 = vmatpush1.msra.mxu0 0.0
        %1749 = vmatprep.subr.mxu0 0.0
        %1750 = vmatpush1.msra.mxu0 0.0
        %1751 = vmatprep.subr.mxu0 0.0
        %1752 = vmatpush1.msra.mxu0 0.0
        %1753 = vmatprep.subr.mxu0 0.0
        %1754 = vmatpush1.msra.mxu0 0.0
        %1755 = vmatprep.subr.mxu0 0.0
        %1756 = vmatpush1.msra.mxu0 0.0
        %1757 = vmatprep.subr.mxu0 0.0
        %1758 = vmatpush1.msra.mxu0 0.0
        %1759 = vmatprep.subr.mxu0 0.0
        %1760 = vmatpush1.msra.mxu0 0.0
        %1761 = vmatprep.subr.mxu0 0.0
        %1762 = vmatpush1.msra.mxu0 0.0
        %1763 = vmatprep.subr.mxu0 0.0
        %1764 = vmatpush1.msra.mxu0 0.0
        %1765 = vmatprep.subr.mxu0 0.0
        %1766 = vmatpush1.msra.mxu0 0.0
        %1767 = vmatprep.subr.mxu0 0.0
        %1768 = vmatpush1.msra.mxu0 0.0
        %1769 = vmatprep.subr.mxu0 0.0
        %1770 = vmatpush1.msra.mxu0 0.0
        %1771 = vmatprep.subr.mxu0 0.0
        %1772 = vmatpush1.msra.mxu0 0.0
        %1773 = vmatprep.subr.mxu0 0.0
        %1774 = vmatpush1.msra.mxu0 0.0
        %1775 = vmatprep.subr.mxu0 0.0
        %1776 = vmatpush1.msra.mxu0 0.0
        %1777 = vmatprep.subr.mxu0 0.0
        %1778 = vmatpush1.msra.mxu0 0.0
        %1779 = vmatprep.subr.mxu0 0.0
        %1780 = vmatpush1.msra.mxu0 0.0
        %1781 = vmatprep.subr.mxu0 0.0
        %1782 = vmatpush1.msra.mxu0 0.0
        %1783 = vmatprep.subr.mxu0 0.0
        %1784 = vmatpush1.msra.mxu0 0.0
        %1785 = vmatprep.mubr.f32.mxu0 0.0
        %v1786 = vand.u32 %v659, 4294901760
        %v1787 = vsub.f32 %v659, %v1786
        %v1788 = vand.u32 %v1787, 4294901760
        %1789 = vmatmul.mubr.f32.gmra.mrb[0].mxu0 %v1788
        %v1790 = vpop.f32.mrb[0].mxu0
        %v1791 = vadd.f32 %v1497, %v1790
        %v1792 = vpop.f32.mrb[0].mxu0
        %1793 = vmatprep.mubr.f32.mxu0 0.0
        %v1794 = vand.u32 %v662, 4294901760
        %v1795 = vsub.f32 %v662, %v1794
        %v1796 = vand.u32 %v1795, 4294901760
        %1797 = vmatmul.mubr.f32.gmra.mrb[0].mxu0 %v1796
        %v1798 = vpop.f32.mrb[0].mxu0
        %v1799 = vadd.f32 %v1504, %v1798
        %v1800 = vpop.f32.mrb[0].mxu0
        %1801 = vmatprep.mubr.f32.mxu0 0.0
        %v1802 = vand.u32 %v665, 4294901760
        %v1803 = vsub.f32 %v665, %v1802
        %v1804 = vand.u32 %v1803, 4294901760
        %1805 = vmatmul.mubr.f32.gmra.mrb[0].mxu0 %v1804
        %v1806 = vpop.f32.mrb[0].mxu0
        %v1807 = vadd.f32 %v1511, %v1806
        %v1808 = vpop.f32.mrb[0].mxu0
        %1809 = vmatprep.mubr.f32.mxu0 0.0
        %v1810 = vand.u32 %v668, 4294901760
        %v1811 = vsub.f32 %v668, %v1810
        %v1812 = vand.u32 %v1811, 4294901760
        %1813 = vmatmul.mubr.f32.gmra.mrb[0].mxu0 %v1812
        %v1814 = vpop.f32.mrb[0].mxu0
        %v1815 = vadd.f32 %v1518, %v1814
        %v1816 = vpop.f32.mrb[0].mxu0
        %1817 = vmatprep.mubr.f32.mxu0 0.0
        %v1818 = vand.u32 %v671, 4294901760
        %v1819 = vsub.f32 %v671, %v1818
        %v1820 = vand.u32 %v1819, 4294901760
        %1821 = vmatmul.mubr.f32.gmra.mrb[0].mxu0 %v1820
        %v1822 = vpop.f32.mrb[0].mxu0
        %v1823 = vadd.f32 %v1525, %v1822
        %v1824 = vpop.f32.mrb[0].mxu0
        %1825 = vmatprep.mubr.f32.mxu0 0.0
        %v1826 = vand.u32 %v674, 4294901760
        %v1827 = vsub.f32 %v674, %v1826
        %v1828 = vand.u32 %v1827, 4294901760
        %1829 = vmatmul.mubr.f32.gmra.mrb[0].mxu0 %v1828
        %v1830 = vpop.f32.mrb[0].mxu0
        %v1831 = vadd.f32 %v1532, %v1830
        %v1832 = vpop.f32.mrb[0].mxu0
        %1833 = vmatprep.mubr.f32.mxu0 0.0
        %v1834 = vand.u32 %v677, 4294901760
        %v1835 = vsub.f32 %v677, %v1834
        %v1836 = vand.u32 %v1835, 4294901760
        %1837 = vmatmul.mubr.f32.gmra.mrb[0].mxu0 %v1836
        %v1838 = vpop.f32.mrb[0].mxu0
        %v1839 = vadd.f32 %v1539, %v1838
        %v1840 = vpop.f32.mrb[0].mxu0
        %1841 = vmatprep.mubr.f32.mxu0 0.0
        %v1842 = vand.u32 %v680, 4294901760
        %v1843 = vsub.f32 %v680, %v1842
        %v1844 = vand.u32 %v1843, 4294901760
        %1845 = vmatmul.mubr.f32.gmra.mrb[0].mxu0 %v1844
        %v1846 = vpop.f32.mrb[0].mxu0
        %v1847 = vadd.f32 %v1546, %v1846
        %v1848 = vpop.f32.mrb[0].mxu0
        %1849 = vmatprep.mubr.f32.mxu0 0.0
        %v1850 = vand.u32 %v683, 4294901760
        %v1851 = vsub.f32 %v683, %v1850
        %v1852 = vand.u32 %v1851, 4294901760
        %1853 = vmatmul.mubr.f32.gmra.mrb[0].mxu0 %v1852
        %v1854 = vpop.f32.mrb[0].mxu0
        %v1855 = vadd.f32 %v1553, %v1854
        %v1856 = vpop.f32.mrb[0].mxu0
        %1857 = vmatprep.mubr.f32.mxu0 0.0
        %v1858 = vand.u32 %v686, 4294901760
        %v1859 = vsub.f32 %v686, %v1858
        %v1860 = vand.u32 %v1859, 4294901760
        %1861 = vmatmul.mubr.f32.gmra.mrb[0].mxu0 %v1860
        %v1862 = vpop.f32.mrb[0].mxu0
        %v1863 = vadd.f32 %v1560, %v1862
        %v1864 = vpop.f32.mrb[0].mxu0
        %1865 = vmatprep.mubr.f32.mxu0 0.0
        %v1866 = vand.u32 %v689, 4294901760
        %v1867 = vsub.f32 %v689, %v1866
        %v1868 = vand.u32 %v1867, 4294901760
        %1869 = vmatmul.mubr.f32.gmra.mrb[0].mxu0 %v1868
        %v1870 = vpop.f32.mrb[0].mxu0
        %v1871 = vadd.f32 %v1567, %v1870
        %v1872 = vpop.f32.mrb[0].mxu0
        %1873 = vmatprep.mubr.f32.mxu0 0.0
        %v1874 = vand.u32 %v692, 4294901760
        %v1875 = vsub.f32 %v692, %v1874
        %v1876 = vand.u32 %v1875, 4294901760
        %1877 = vmatmul.mubr.f32.gmra.mrb[0].mxu0 %v1876
        %v1878 = vpop.f32.mrb[0].mxu0
        %v1879 = vadd.f32 %v1574, %v1878
        %v1880 = vpop.f32.mrb[0].mxu0
        %1881 = vmatprep.mubr.f32.mxu0 0.0
        %v1882 = vand.u32 %v695, 4294901760
        %v1883 = vsub.f32 %v695, %v1882
        %v1884 = vand.u32 %v1883, 4294901760
        %1885 = vmatmul.mubr.f32.gmra.mrb[0].mxu0 %v1884
        %v1886 = vpop.f32.mrb[0].mxu0
        %v1887 = vadd.f32 %v1581, %v1886
        %v1888 = vpop.f32.mrb[0].mxu0
        %1889 = vmatprep.mubr.f32.mxu0 0.0
        %v1890 = vand.u32 %v698, 4294901760
        %v1891 = vsub.f32 %v698, %v1890
        %v1892 = vand.u32 %v1891, 4294901760
        %1893 = vmatmul.mubr.f32.gmra.mrb[0].mxu0 %v1892
        %v1894 = vpop.f32.mrb[0].mxu0
        %v1895 = vadd.f32 %v1588, %v1894
        %v1896 = vpop.f32.mrb[0].mxu0
        %1897 = vmatprep.mubr.f32.mxu0 0.0
        %v1898 = vand.u32 %v701, 4294901760
        %v1899 = vsub.f32 %v701, %v1898
        %v1900 = vand.u32 %v1899, 4294901760
        %1901 = vmatmul.mubr.f32.gmra.mrb[0].mxu0 %v1900
        %v1902 = vpop.f32.mrb[0].mxu0
        %v1903 = vadd.f32 %v1595, %v1902
        %v1904 = vpop.f32.mrb[0].mxu0
        %1905 = vmatprep.mubr.f32.mxu0 0.0
        %v1906 = vand.u32 %v704, 4294901760
        %v1907 = vsub.f32 %v704, %v1906
        %v1908 = vand.u32 %v1907, 4294901760
        %1909 = vmatmul.mubr.f32.gmra.mrb[0].mxu0 %v1908
        %v1910 = vpop.f32.mrb[0].mxu0
        %v1911 = vadd.f32 %v1602, %v1910
        %v1912 = vpop.f32.mrb[0].mxu0
        %1913 = vmatprep.mubr.f32.mxu0 0.0
        %v1914 = vand.u32 %v707, 4294901760
        %v1915 = vsub.f32 %v707, %v1914
        %v1916 = vand.u32 %v1915, 4294901760
        %1917 = vmatmul.mubr.f32.gmra.mrb[0].mxu0 %v1916
        %v1918 = vpop.f32.mrb[0].mxu0
        %v1919 = vadd.f32 %v1609, %v1918
        %v1920 = vpop.f32.mrb[0].mxu0
        %1921 = vmatprep.mubr.f32.mxu0 0.0
        %v1922 = vand.u32 %v710, 4294901760
        %v1923 = vsub.f32 %v710, %v1922
        %v1924 = vand.u32 %v1923, 4294901760
        %1925 = vmatmul.mubr.f32.gmra.mrb[0].mxu0 %v1924
        %v1926 = vpop.f32.mrb[0].mxu0
        %v1927 = vadd.f32 %v1616, %v1926
        %v1928 = vpop.f32.mrb[0].mxu0
        %1929 = vmatprep.mubr.f32.mxu0 0.0
        %v1930 = vand.u32 %v713, 4294901760
        %v1931 = vsub.f32 %v713, %v1930
        %v1932 = vand.u32 %v1931, 4294901760
        %1933 = vmatmul.mubr.f32.gmra.mrb[0].mxu0 %v1932
        %v1934 = vpop.f32.mrb[0].mxu0
        %v1935 = vadd.f32 %v1623, %v1934
        %v1936 = vpop.f32.mrb[0].mxu0
        %1937 = vmatprep.mubr.f32.mxu0 0.0
        %v1938 = vand.u32 %v716, 4294901760
        %v1939 = vsub.f32 %v716, %v1938
        %v1940 = vand.u32 %v1939, 4294901760
        %1941 = vmatmul.mubr.f32.gmra.mrb[0].mxu0 %v1940
        %v1942 = vpop.f32.mrb[0].mxu0
        %v1943 = vadd.f32 %v1630, %v1942
        %v1944 = vpop.f32.mrb[0].mxu0
        %1945 = vmatprep.mubr.f32.mxu0 0.0
        %v1946 = vand.u32 %v719, 4294901760
        %v1947 = vsub.f32 %v719, %v1946
        %v1948 = vand.u32 %v1947, 4294901760
        %1949 = vmatmul.mubr.f32.gmra.mrb[0].mxu0 %v1948
        %v1950 = vpop.f32.mrb[0].mxu0
        %v1951 = vadd.f32 %v1637, %v1950
        %v1952 = vpop.f32.mrb[0].mxu0
        %1953 = vmatprep.mubr.f32.mxu0 0.0
        %v1954 = vand.u32 %v722, 4294901760
        %v1955 = vsub.f32 %v722, %v1954
        %v1956 = vand.u32 %v1955, 4294901760
        %1957 = vmatmul.mubr.f32.gmra.mrb[0].mxu0 %v1956
        %v1958 = vpop.f32.mrb[0].mxu0
        %v1959 = vadd.f32 %v1644, %v1958
        %v1960 = vpop.f32.mrb[0].mxu0
        %1961 = vmatprep.mubr.f32.mxu0 0.0
        %v1962 = vand.u32 %v725, 4294901760
        %v1963 = vsub.f32 %v725, %v1962
        %v1964 = vand.u32 %v1963, 4294901760
        %1965 = vmatmul.mubr.f32.gmra.mrb[0].mxu0 %v1964
        %v1966 = vpop.f32.mrb[0].mxu0
        %v1967 = vadd.f32 %v1651, %v1966
        %v1968 = vpop.f32.mrb[0].mxu0
        %1969 = vmatprep.mubr.f32.mxu0 0.0
        %v1970 = vand.u32 %v728, 4294901760
        %v1971 = vsub.f32 %v728, %v1970
        %v1972 = vand.u32 %v1971, 4294901760
        %1973 = vmatmul.mubr.f32.gmra.mrb[0].mxu0 %v1972
        %v1974 = vpop.f32.mrb[0].mxu0
        %v1975 = vadd.f32 %v1658, %v1974
        %v1976 = vpop.f32.mrb[0].mxu0
        %1977 = vmatprep.mubr.f32.mxu0 0.0
        %v1978 = vand.u32 %v731, 4294901760
        %v1979 = vsub.f32 %v731, %v1978
        %v1980 = vand.u32 %v1979, 4294901760
        %1981 = vmatmul.mubr.f32.gmra.mrb[0].mxu0 %v1980
        %v1982 = vpop.f32.mrb[0].mxu0
        %v1983 = vadd.f32 %v1665, %v1982
        %v1984 = vpop.f32.mrb[0].mxu0
        %1985 = vmatprep.mubr.f32.mxu0 0.0
        %v1986 = vand.u32 %v734, 4294901760
        %v1987 = vsub.f32 %v734, %v1986
        %v1988 = vand.u32 %v1987, 4294901760
        %1989 = vmatmul.mubr.f32.gmra.mrb[0].mxu0 %v1988
        %v1990 = vpop.f32.mrb[0].mxu0
        %v1991 = vadd.f32 %v1672, %v1990
        %v1992 = vpop.f32.mrb[0].mxu0
        %1993 = vmatprep.mubr.f32.mxu0 0.0
        %v1994 = vand.u32 %v737, 4294901760
        %v1995 = vsub.f32 %v737, %v1994
        %v1996 = vand.u32 %v1995, 4294901760
        %1997 = vmatmul.mubr.f32.gmra.mrb[0].mxu0 %v1996
        %v1998 = vpop.f32.mrb[0].mxu0
        %v1999 = vadd.f32 %v1679, %v1998
        %v2000 = vpop.f32.mrb[0].mxu0
        %2001 = vmatprep.mubr.f32.mxu0 0.0
        %v2002 = vand.u32 %v740, 4294901760
        %v2003 = vsub.f32 %v740, %v2002
        %v2004 = vand.u32 %v2003, 4294901760
        %2005 = vmatmul.mubr.f32.gmra.mrb[0].mxu0 %v2004
        %v2006 = vpop.f32.mrb[0].mxu0
        %v2007 = vadd.f32 %v1686, %v2006
        %v2008 = vpop.f32.mrb[0].mxu0
        %2009 = vmatprep.mubr.f32.mxu0 0.0
        %v2010 = vand.u32 %v743, 4294901760
        %v2011 = vsub.f32 %v743, %v2010
        %v2012 = vand.u32 %v2011, 4294901760
        %2013 = vmatmul.mubr.f32.gmra.mrb[0].mxu0 %v2012
        %v2014 = vpop.f32.mrb[0].mxu0
        %v2015 = vadd.f32 %v1693, %v2014
        %v2016 = vpop.f32.mrb[0].mxu0
        %2017 = vmatprep.mubr.f32.mxu0 0.0
        %v2018 = vand.u32 %v746, 4294901760
        %v2019 = vsub.f32 %v746, %v2018
        %v2020 = vand.u32 %v2019, 4294901760
        %2021 = vmatmul.mubr.f32.gmra.mrb[0].mxu0 %v2020
        %v2022 = vpop.f32.mrb[0].mxu0
        %v2023 = vadd.f32 %v1700, %v2022
        %v2024 = vpop.f32.mrb[0].mxu0
        %2025 = vmatprep.mubr.f32.mxu0 0.0
        %v2026 = vand.u32 %v749, 4294901760
        %v2027 = vsub.f32 %v749, %v2026
        %v2028 = vand.u32 %v2027, 4294901760
        %2029 = vmatmul.mubr.f32.gmra.mrb[0].mxu0 %v2028
        %v2030 = vpop.f32.mrb[0].mxu0
        %v2031 = vadd.f32 %v1707, %v2030
        %v2032 = vpop.f32.mrb[0].mxu0
        %2033 = vmatprep.mubr.f32.mxu0 0.0
        %v2034 = vand.u32 %v752, 4294901760
        %v2035 = vsub.f32 %v752, %v2034
        %v2036 = vand.u32 %v2035, 4294901760
        %2037 = vmatmul.mubr.f32.gmra.mrb[0].mxu0 %v2036
        %v2038 = vpop.f32.mrb[0].mxu0
        %v2039 = vadd.f32 %v1714, %v2038
        %v2040 = vpop.f32.mrb[0].mxu0
        %2041 = vdwg.mxu0
        %2042 = vmatprep.subr.mxu0 0.0
        %v2043 = vand.u32 %v653, 4294901760
        %v2044 = vsub.f32 %v653, %v2043
        %v2045 = vand.u32 %v2044, 4294901760
        %2046 = vmatpush1.msra.mxu0 %v2045
        %2047 = vmatprep.subr.mxu0 0.0
        %v2048 = vand.u32 %v654, 4294901760
        %v2049 = vsub.f32 %v654, %v2048
        %v2050 = vand.u32 %v2049, 4294901760
        %2051 = vmatpush1.msra.mxu0 %v2050
        %2052 = vmatprep.subr.mxu0 0.0
        %v2053 = vand.u32 %v655, 4294901760
        %v2054 = vsub.f32 %v655, %v2053
        %v2055 = vand.u32 %v2054, 4294901760
        %2056 = vmatpush1.msra.mxu0 %v2055
        %2057 = vmatprep.subr.mxu0 0.0
        %v2058 = vand.u32 %v656, 4294901760
        %v2059 = vsub.f32 %v656, %v2058
        %v2060 = vand.u32 %v2059, 4294901760
        %2061 = vmatpush1.msra.mxu0 %v2060
        %2062 = vmatprep.subr.mxu0 0.0
        %2063 = vmatpush1.msra.mxu0 0.0
        %2064 = vmatprep.subr.mxu0 0.0
        %2065 = vmatpush1.msra.mxu0 0.0
        %2066 = vmatprep.subr.mxu0 0.0
        %2067 = vmatpush1.msra.mxu0 0.0
        %2068 = vmatprep.subr.mxu0 0.0
        %2069 = vmatpush1.msra.mxu0 0.0
        %2070 = vmatprep.subr.mxu0 0.0
        %2071 = vmatpush1.msra.mxu0 0.0
        %2072 = vmatprep.subr.mxu0 0.0
        %2073 = vmatpush1.msra.mxu0 0.0
        %2074 = vmatprep.subr.mxu0 0.0
        %2075 = vmatpush1.msra.mxu0 0.0
        %2076 = vmatprep.subr.mxu0 0.0
        %2077 = vmatpush1.msra.mxu0 0.0
        %2078 = vmatprep.subr.mxu0 0.0
        %2079 = vmatpush1.msra.mxu0 0.0
        %2080 = vmatprep.subr.mxu0 0.0
        %2081 = vmatpush1.msra.mxu0 0.0
        %2082 = vmatprep.subr.mxu0 0.0
        %2083 = vmatpush1.msra.mxu0 0.0
        %2084 = vmatprep.subr.mxu0 0.0
        %2085 = vmatpush1.msra.mxu0 0.0
        %2086 = vmatprep.subr.mxu0 0.0
        %2087 = vmatpush1.msra.mxu0 0.0
        %2088 = vmatprep.subr.mxu0 0.0
        %2089 = vmatpush1.msra.mxu0 0.0
        %2090 = vmatprep.subr.mxu0 0.0
        %2091 = vmatpush1.msra.mxu0 0.0
        %2092 = vmatprep.subr.mxu0 0.0
        %2093 = vmatpush1.msra.mxu0 0.0
        %2094 = vmatprep.subr.mxu0 0.0
        %2095 = vmatpush1.msra.mxu0 0.0
        %2096 = vmatprep.subr.mxu0 0.0
        %2097 = vmatpush1.msra.mxu0 0.0
        %2098 = vmatprep.subr.mxu0 0.0
        %2099 = vmatpush1.msra.mxu0 0.0
        %2100 = vmatprep.subr.mxu0 0.0
        %2101 = vmatpush1.msra.mxu0 0.0
        %2102 = vmatprep.subr.mxu0 0.0
        %2103 = vmatpush1.msra.mxu0 0.0
        %2104 = vmatprep.subr.mxu0 0.0
        %2105 = vmatpush1.msra.mxu0 0.0
        %2106 = vmatprep.subr.mxu0 0.0
        %2107 = vmatpush1.msra.mxu0 0.0
        %2108 = vmatprep.subr.mxu0 0.0
        %2109 = vmatpush1.msra.mxu0 0.0
        %2110 = vmatprep.subr.mxu0 0.0
        %2111 = vmatpush1.msra.mxu0 0.0
        %2112 = vmatprep.subr.mxu0 0.0
        %2113 = vmatpush1.msra.mxu0 0.0
        %2114 = vmatprep.subr.mxu0 0.0
        %2115 = vmatpush1.msra.mxu0 0.0
        %2116 = vmatprep.subr.mxu0 0.0
        %2117 = vmatpush1.msra.mxu0 0.0
        %2118 = vmatprep.mubr.f32.mxu0 0.0
        %v2119 = vand.u32 %v659, 4294901760
        %2120 = vmatmul.mubr.f32.gmra.mrb[0].mxu0 %v2119
        %v2121 = vpop.f32.mrb[0].mxu0
        %v2122 = vadd.f32 %v1791, %v2121
        %v2123 = vpop.f32.mrb[0].mxu0
        %2124 = vmatprep.mubr.f32.mxu0 0.0
        %v2125 = vand.u32 %v662, 4294901760
        %2126 = vmatmul.mubr.f32.gmra.mrb[0].mxu0 %v2125
        %v2127 = vpop.f32.mrb[0].mxu0
        %v2128 = vadd.f32 %v1799, %v2127
        %v2129 = vpop.f32.mrb[0].mxu0
        %2130 = vmatprep.mubr.f32.mxu0 0.0
        %v2131 = vand.u32 %v665, 4294901760
        %2132 = vmatmul.mubr.f32.gmra.mrb[0].mxu0 %v2131
        %v2133 = vpop.f32.mrb[0].mxu0
        %v2134 = vadd.f32 %v1807, %v2133
        %v2135 = vpop.f32.mrb[0].mxu0
        %2136 = vmatprep.mubr.f32.mxu0 0.0
        %v2137 = vand.u32 %v668, 4294901760
        %2138 = vmatmul.mubr.f32.gmra.mrb[0].mxu0 %v2137
        %v2139 = vpop.f32.mrb[0].mxu0
        %v2140 = vadd.f32 %v1815, %v2139
        %v2141 = vpop.f32.mrb[0].mxu0
        %2142 = vmatprep.mubr.f32.mxu0 0.0
        %v2143 = vand.u32 %v671, 4294901760
        %2144 = vmatmul.mubr.f32.gmra.mrb[0].mxu0 %v2143
        %v2145 = vpop.f32.mrb[0].mxu0
        %v2146 = vadd.f32 %v1823, %v2145
        %v2147 = vpop.f32.mrb[0].mxu0
        %2148 = vmatprep.mubr.f32.mxu0 0.0
        %v2149 = vand.u32 %v674, 4294901760
        %2150 = vmatmul.mubr.f32.gmra.mrb[0].mxu0 %v2149
        %v2151 = vpop.f32.mrb[0].mxu0
        %v2152 = vadd.f32 %v1831, %v2151
        %v2153 = vpop.f32.mrb[0].mxu0
        %2154 = vmatprep.mubr.f32.mxu0 0.0
        %v2155 = vand.u32 %v677, 4294901760
        %2156 = vmatmul.mubr.f32.gmra.mrb[0].mxu0 %v2155
        %v2157 = vpop.f32.mrb[0].mxu0
        %v2158 = vadd.f32 %v1839, %v2157
        %v2159 = vpop.f32.mrb[0].mxu0
        %2160 = vmatprep.mubr.f32.mxu0 0.0
        %v2161 = vand.u32 %v680, 4294901760
        %2162 = vmatmul.mubr.f32.gmra.mrb[0].mxu0 %v2161
        %v2163 = vpop.f32.mrb[0].mxu0
        %v2164 = vadd.f32 %v1847, %v2163
        %v2165 = vpop.f32.mrb[0].mxu0
        %2166 = vmatprep.mubr.f32.mxu0 0.0
        %v2167 = vand.u32 %v683, 4294901760
        %2168 = vmatmul.mubr.f32.gmra.mrb[0].mxu0 %v2167
        %v2169 = vpop.f32.mrb[0].mxu0
        %v2170 = vadd.f32 %v1855, %v2169
        %v2171 = vpop.f32.mrb[0].mxu0
        %2172 = vmatprep.mubr.f32.mxu0 0.0
        %v2173 = vand.u32 %v686, 4294901760
        %2174 = vmatmul.mubr.f32.gmra.mrb[0].mxu0 %v2173
        %v2175 = vpop.f32.mrb[0].mxu0
        %v2176 = vadd.f32 %v1863, %v2175
        %v2177 = vpop.f32.mrb[0].mxu0
        %2178 = vmatprep.mubr.f32.mxu0 0.0
        %v2179 = vand.u32 %v689, 4294901760
        %2180 = vmatmul.mubr.f32.gmra.mrb[0].mxu0 %v2179
        %v2181 = vpop.f32.mrb[0].mxu0
        %v2182 = vadd.f32 %v1871, %v2181
        %v2183 = vpop.f32.mrb[0].mxu0
        %2184 = vmatprep.mubr.f32.mxu0 0.0
        %v2185 = vand.u32 %v692, 4294901760
        %2186 = vmatmul.mubr.f32.gmra.mrb[0].mxu0 %v2185
        %v2187 = vpop.f32.mrb[0].mxu0
        %v2188 = vadd.f32 %v1879, %v2187
        %v2189 = vpop.f32.mrb[0].mxu0
        %2190 = vmatprep.mubr.f32.mxu0 0.0
        %v2191 = vand.u32 %v695, 4294901760
        %2192 = vmatmul.mubr.f32.gmra.mrb[0].mxu0 %v2191
        %v2193 = vpop.f32.mrb[0].mxu0
        %v2194 = vadd.f32 %v1887, %v2193
        %v2195 = vpop.f32.mrb[0].mxu0
        %2196 = vmatprep.mubr.f32.mxu0 0.0
        %v2197 = vand.u32 %v698, 4294901760
        %2198 = vmatmul.mubr.f32.gmra.mrb[0].mxu0 %v2197
        %v2199 = vpop.f32.mrb[0].mxu0
        %v2200 = vadd.f32 %v1895, %v2199
        %v2201 = vpop.f32.mrb[0].mxu0
        %2202 = vmatprep.mubr.f32.mxu0 0.0
        %v2203 = vand.u32 %v701, 4294901760
        %2204 = vmatmul.mubr.f32.gmra.mrb[0].mxu0 %v2203
        %v2205 = vpop.f32.mrb[0].mxu0
        %v2206 = vadd.f32 %v1903, %v2205
        %v2207 = vpop.f32.mrb[0].mxu0
        %2208 = vmatprep.mubr.f32.mxu0 0.0
        %v2209 = vand.u32 %v704, 4294901760
        %2210 = vmatmul.mubr.f32.gmra.mrb[0].mxu0 %v2209
        %v2211 = vpop.f32.mrb[0].mxu0
        %v2212 = vadd.f32 %v1911, %v2211
        %v2213 = vpop.f32.mrb[0].mxu0
        %2214 = vmatprep.mubr.f32.mxu0 0.0
        %v2215 = vand.u32 %v707, 4294901760
        %2216 = vmatmul.mubr.f32.gmra.mrb[0].mxu0 %v2215
        %v2217 = vpop.f32.mrb[0].mxu0
        %v2218 = vadd.f32 %v1919, %v2217
        %v2219 = vpop.f32.mrb[0].mxu0
        %2220 = vmatprep.mubr.f32.mxu0 0.0
        %v2221 = vand.u32 %v710, 4294901760
        %2222 = vmatmul.mubr.f32.gmra.mrb[0].mxu0 %v2221
        %v2223 = vpop.f32.mrb[0].mxu0
        %v2224 = vadd.f32 %v1927, %v2223
        %v2225 = vpop.f32.mrb[0].mxu0
        %2226 = vmatprep.mubr.f32.mxu0 0.0
        %v2227 = vand.u32 %v713, 4294901760
        %2228 = vmatmul.mubr.f32.gmra.mrb[0].mxu0 %v2227
        %v2229 = vpop.f32.mrb[0].mxu0
        %v2230 = vadd.f32 %v1935, %v2229
        %v2231 = vpop.f32.mrb[0].mxu0
        %2232 = vmatprep.mubr.f32.mxu0 0.0
        %v2233 = vand.u32 %v716, 4294901760
        %2234 = vmatmul.mubr.f32.gmra.mrb[0].mxu0 %v2233
        %v2235 = vpop.f32.mrb[0].mxu0
        %v2236 = vadd.f32 %v1943, %v2235
        %v2237 = vpop.f32.mrb[0].mxu0
        %2238 = vmatprep.mubr.f32.mxu0 0.0
        %v2239 = vand.u32 %v719, 4294901760
        %2240 = vmatmul.mubr.f32.gmra.mrb[0].mxu0 %v2239
        %v2241 = vpop.f32.mrb[0].mxu0
        %v2242 = vadd.f32 %v1951, %v2241
        %v2243 = vpop.f32.mrb[0].mxu0
        %2244 = vmatprep.mubr.f32.mxu0 0.0
        %v2245 = vand.u32 %v722, 4294901760
        %2246 = vmatmul.mubr.f32.gmra.mrb[0].mxu0 %v2245
        %v2247 = vpop.f32.mrb[0].mxu0
        %v2248 = vadd.f32 %v1959, %v2247
        %v2249 = vpop.f32.mrb[0].mxu0
        %2250 = vmatprep.mubr.f32.mxu0 0.0
        %v2251 = vand.u32 %v725, 4294901760
        %2252 = vmatmul.mubr.f32.gmra.mrb[0].mxu0 %v2251
        %v2253 = vpop.f32.mrb[0].mxu0
        %v2254 = vadd.f32 %v1967, %v2253
        %v2255 = vpop.f32.mrb[0].mxu0
        %2256 = vmatprep.mubr.f32.mxu0 0.0
        %v2257 = vand.u32 %v728, 4294901760
        %2258 = vmatmul.mubr.f32.gmra.mrb[0].mxu0 %v2257
        %v2259 = vpop.f32.mrb[0].mxu0
        %v2260 = vadd.f32 %v1975, %v2259
        %v2261 = vpop.f32.mrb[0].mxu0
        %2262 = vmatprep.mubr.f32.mxu0 0.0
        %v2263 = vand.u32 %v731, 4294901760
        %2264 = vmatmul.mubr.f32.gmra.mrb[0].mxu0 %v2263
        %v2265 = vpop.f32.mrb[0].mxu0
        %v2266 = vadd.f32 %v1983, %v2265
        %v2267 = vpop.f32.mrb[0].mxu0
        %2268 = vmatprep.mubr.f32.mxu0 0.0
        %v2269 = vand.u32 %v734, 4294901760
        %2270 = vmatmul.mubr.f32.gmra.mrb[0].mxu0 %v2269
        %v2271 = vpop.f32.mrb[0].mxu0
        %v2272 = vadd.f32 %v1991, %v2271
        %v2273 = vpop.f32.mrb[0].mxu0
        %2274 = vmatprep.mubr.f32.mxu0 0.0
        %v2275 = vand.u32 %v737, 4294901760
        %2276 = vmatmul.mubr.f32.gmra.mrb[0].mxu0 %v2275
        %v2277 = vpop.f32.mrb[0].mxu0
        %v2278 = vadd.f32 %v1999, %v2277
        %v2279 = vpop.f32.mrb[0].mxu0
        %2280 = vmatprep.mubr.f32.mxu0 0.0
        %v2281 = vand.u32 %v740, 4294901760
        %2282 = vmatmul.mubr.f32.gmra.mrb[0].mxu0 %v2281
        %v2283 = vpop.f32.mrb[0].mxu0
        %v2284 = vadd.f32 %v2007, %v2283
        %v2285 = vpop.f32.mrb[0].mxu0
        %2286 = vmatprep.mubr.f32.mxu0 0.0
        %v2287 = vand.u32 %v743, 4294901760
        %2288 = vmatmul.mubr.f32.gmra.mrb[0].mxu0 %v2287
        %v2289 = vpop.f32.mrb[0].mxu0
        %v2290 = vadd.f32 %v2015, %v2289
        %v2291 = vpop.f32.mrb[0].mxu0
        %2292 = vmatprep.mubr.f32.mxu0 0.0
        %v2293 = vand.u32 %v746, 4294901760
        %2294 = vmatmul.mubr.f32.gmra.mrb[0].mxu0 %v2293
        %v2295 = vpop.f32.mrb[0].mxu0
        %v2296 = vadd.f32 %v2023, %v2295
        %v2297 = vpop.f32.mrb[0].mxu0
        %2298 = vmatprep.mubr.f32.mxu0 0.0
        %v2299 = vand.u32 %v749, 4294901760
        %2300 = vmatmul.mubr.f32.gmra.mrb[0].mxu0 %v2299
        %v2301 = vpop.f32.mrb[0].mxu0
        %v2302 = vadd.f32 %v2031, %v2301
        %v2303 = vpop.f32.mrb[0].mxu0
        %2304 = vmatprep.mubr.f32.mxu0 0.0
        %v2305 = vand.u32 %v752, 4294901760
        %2306 = vmatmul.mubr.f32.gmra.mrb[0].mxu0 %v2305
        %v2307 = vpop.f32.mrb[0].mxu0
        %v2308 = vadd.f32 %v2039, %v2307
        %v2309 = vpop.f32.mrb[0].mxu0
        %2310 = vdwg.mxu0
        %2311 = vmatprep.subr.mxu0 0.0
        %v2312 = vand.u32 %v653, 4294901760
        %2313 = vmatpush1.msra.mxu0 %v2312
        %2314 = vmatprep.subr.mxu0 0.0
        %v2315 = vand.u32 %v654, 4294901760
        %2316 = vmatpush1.msra.mxu0 %v2315
        %2317 = vmatprep.subr.mxu0 0.0
        %v2318 = vand.u32 %v655, 4294901760
        %2319 = vmatpush1.msra.mxu0 %v2318
        %2320 = vmatprep.subr.mxu0 0.0
        %v2321 = vand.u32 %v656, 4294901760
        %2322 = vmatpush1.msra.mxu0 %v2321
        %2323 = vmatprep.subr.mxu0 0.0
        %2324 = vmatpush1.msra.mxu0 0.0
        %2325 = vmatprep.subr.mxu0 0.0
        %2326 = vmatpush1.msra.mxu0 0.0
        %2327 = vmatprep.subr.mxu0 0.0
        %2328 = vmatpush1.msra.mxu0 0.0
        %2329 = vmatprep.subr.mxu0 0.0
        %2330 = vmatpush1.msra.mxu0 0.0
        %2331 = vmatprep.subr.mxu0 0.0
        %2332 = vmatpush1.msra.mxu0 0.0
        %2333 = vmatprep.subr.mxu0 0.0
        %2334 = vmatpush1.msra.mxu0 0.0
        %2335 = vmatprep.subr.mxu0 0.0
        %2336 = vmatpush1.msra.mxu0 0.0
        %2337 = vmatprep.subr.mxu0 0.0
        %2338 = vmatpush1.msra.mxu0 0.0
        %2339 = vmatprep.subr.mxu0 0.0
        %2340 = vmatpush1.msra.mxu0 0.0
        %2341 = vmatprep.subr.mxu0 0.0
        %2342 = vmatpush1.msra.mxu0 0.0
        %2343 = vmatprep.subr.mxu0 0.0
        %2344 = vmatpush1.msra.mxu0 0.0
        %2345 = vmatprep.subr.mxu0 0.0
        %2346 = vmatpush1.msra.mxu0 0.0
        %2347 = vmatprep.subr.mxu0 0.0
        %2348 = vmatpush1.msra.mxu0 0.0
        %2349 = vmatprep.subr.mxu0 0.0
        %2350 = vmatpush1.msra.mxu0 0.0
        %2351 = vmatprep.subr.mxu0 0.0
        %2352 = vmatpush1.msra.mxu0 0.0
        %2353 = vmatprep.subr.mxu0 0.0
        %2354 = vmatpush1.msra.mxu0 0.0
        %2355 = vmatprep.subr.mxu0 0.0
        %2356 = vmatpush1.msra.mxu0 0.0
        %2357 = vmatprep.subr.mxu0 0.0
        %2358 = vmatpush1.msra.mxu0 0.0
        %2359 = vmatprep.subr.mxu0 0.0
        %2360 = vmatpush1.msra.mxu0 0.0
        %2361 = vmatprep.subr.mxu0 0.0
        %2362 = vmatpush1.msra.mxu0 0.0
        %2363 = vmatprep.subr.mxu0 0.0
        %2364 = vmatpush1.msra.mxu0 0.0
        %2365 = vmatprep.subr.mxu0 0.0
        %2366 = vmatpush1.msra.mxu0 0.0
        %2367 = vmatprep.subr.mxu0 0.0
        %2368 = vmatpush1.msra.mxu0 0.0
        %2369 = vmatprep.subr.mxu0 0.0
        %2370 = vmatpush1.msra.mxu0 0.0
        %2371 = vmatprep.subr.mxu0 0.0
        %2372 = vmatpush1.msra.mxu0 0.0
        %2373 = vmatprep.subr.mxu0 0.0
        %2374 = vmatpush1.msra.mxu0 0.0
        %2375 = vmatprep.subr.mxu0 0.0
        %2376 = vmatpush1.msra.mxu0 0.0
        %2377 = vmatprep.subr.mxu0 0.0
        %2378 = vmatpush1.msra.mxu0 0.0
        %2379 = vmatprep.mubr.f32.mxu0 0.0
        %v2380 = vand.u32 %v659, 4294901760
        %2381 = vmatmul.mubr.f32.gmra.mrb[0].mxu0 %v2380
        %v2382 = vpop.f32.mrb[0].mxu0
        %v2383 = vadd.f32 %v2122, %v2382
        %v2384 = vpop.f32.mrb[0].mxu0
        %2385 = vmatprep.mubr.f32.mxu0 0.0
        %v2386 = vand.u32 %v662, 4294901760
        %2387 = vmatmul.mubr.f32.gmra.mrb[0].mxu0 %v2386
        %v2388 = vpop.f32.mrb[0].mxu0
        %v2389 = vadd.f32 %v2128, %v2388
        %v2390 = vpop.f32.mrb[0].mxu0
        %2391 = vmatprep.mubr.f32.mxu0 0.0
        %v2392 = vand.u32 %v665, 4294901760
        %2393 = vmatmul.mubr.f32.gmra.mrb[0].mxu0 %v2392
        %v2394 = vpop.f32.mrb[0].mxu0
        %v2395 = vadd.f32 %v2134, %v2394
        %v2396 = vpop.f32.mrb[0].mxu0
        %2397 = vmatprep.mubr.f32.mxu0 0.0
        %v2398 = vand.u32 %v668, 4294901760
        %2399 = vmatmul.mubr.f32.gmra.mrb[0].mxu0 %v2398
        %v2400 = vpop.f32.mrb[0].mxu0
        %v2401 = vadd.f32 %v2140, %v2400
        %v2402 = vpop.f32.mrb[0].mxu0
        %2403 = vmatprep.mubr.f32.mxu0 0.0
        %v2404 = vand.u32 %v671, 4294901760
        %2405 = vmatmul.mubr.f32.gmra.mrb[0].mxu0 %v2404
        %v2406 = vpop.f32.mrb[0].mxu0
        %v2407 = vadd.f32 %v2146, %v2406
        %v2408 = vpop.f32.mrb[0].mxu0
        %2409 = vmatprep.mubr.f32.mxu0 0.0
        %v2410 = vand.u32 %v674, 4294901760
        %2411 = vmatmul.mubr.f32.gmra.mrb[0].mxu0 %v2410
        %v2412 = vpop.f32.mrb[0].mxu0
        %v2413 = vadd.f32 %v2152, %v2412
        %v2414 = vpop.f32.mrb[0].mxu0
        %2415 = vmatprep.mubr.f32.mxu0 0.0
        %v2416 = vand.u32 %v677, 4294901760
        %2417 = vmatmul.mubr.f32.gmra.mrb[0].mxu0 %v2416
        %v2418 = vpop.f32.mrb[0].mxu0
        %v2419 = vadd.f32 %v2158, %v2418
        %v2420 = vpop.f32.mrb[0].mxu0
        %2421 = vmatprep.mubr.f32.mxu0 0.0
        %v2422 = vand.u32 %v680, 4294901760
        %2423 = vmatmul.mubr.f32.gmra.mrb[0].mxu0 %v2422
        %v2424 = vpop.f32.mrb[0].mxu0
        %v2425 = vadd.f32 %v2164, %v2424
        %v2426 = vpop.f32.mrb[0].mxu0
        %2427 = vmatprep.mubr.f32.mxu0 0.0
        %v2428 = vand.u32 %v683, 4294901760
        %2429 = vmatmul.mubr.f32.gmra.mrb[0].mxu0 %v2428
        %v2430 = vpop.f32.mrb[0].mxu0
        %v2431 = vadd.f32 %v2170, %v2430
        %v2432 = vpop.f32.mrb[0].mxu0
        %2433 = vmatprep.mubr.f32.mxu0 0.0
        %v2434 = vand.u32 %v686, 4294901760
        %2435 = vmatmul.mubr.f32.gmra.mrb[0].mxu0 %v2434
        %v2436 = vpop.f32.mrb[0].mxu0
        %v2437 = vadd.f32 %v2176, %v2436
        %v2438 = vpop.f32.mrb[0].mxu0
        %2439 = vmatprep.mubr.f32.mxu0 0.0
        %v2440 = vand.u32 %v689, 4294901760
        %2441 = vmatmul.mubr.f32.gmra.mrb[0].mxu0 %v2440
        %v2442 = vpop.f32.mrb[0].mxu0
        %v2443 = vadd.f32 %v2182, %v2442
        %v2444 = vpop.f32.mrb[0].mxu0
        %2445 = vmatprep.mubr.f32.mxu0 0.0
        %v2446 = vand.u32 %v692, 4294901760
        %2447 = vmatmul.mubr.f32.gmra.mrb[0].mxu0 %v2446
        %v2448 = vpop.f32.mrb[0].mxu0
        %v2449 = vadd.f32 %v2188, %v2448
        %v2450 = vpop.f32.mrb[0].mxu0
        %2451 = vmatprep.mubr.f32.mxu0 0.0
        %v2452 = vand.u32 %v695, 4294901760
        %2453 = vmatmul.mubr.f32.gmra.mrb[0].mxu0 %v2452
        %v2454 = vpop.f32.mrb[0].mxu0
        %v2455 = vadd.f32 %v2194, %v2454
        %v2456 = vpop.f32.mrb[0].mxu0
        %2457 = vmatprep.mubr.f32.mxu0 0.0
        %v2458 = vand.u32 %v698, 4294901760
        %2459 = vmatmul.mubr.f32.gmra.mrb[0].mxu0 %v2458
        %v2460 = vpop.f32.mrb[0].mxu0
        %v2461 = vadd.f32 %v2200, %v2460
        %v2462 = vpop.f32.mrb[0].mxu0
        %2463 = vmatprep.mubr.f32.mxu0 0.0
        %v2464 = vand.u32 %v701, 4294901760
        %2465 = vmatmul.mubr.f32.gmra.mrb[0].mxu0 %v2464
        %v2466 = vpop.f32.mrb[0].mxu0
        %v2467 = vadd.f32 %v2206, %v2466
        %v2468 = vpop.f32.mrb[0].mxu0
        %2469 = vmatprep.mubr.f32.mxu0 0.0
        %v2470 = vand.u32 %v704, 4294901760
        %2471 = vmatmul.mubr.f32.gmra.mrb[0].mxu0 %v2470
        %v2472 = vpop.f32.mrb[0].mxu0
        %v2473 = vadd.f32 %v2212, %v2472
        %v2474 = vpop.f32.mrb[0].mxu0
        %2475 = vmatprep.mubr.f32.mxu0 0.0
        %v2476 = vand.u32 %v707, 4294901760
        %2477 = vmatmul.mubr.f32.gmra.mrb[0].mxu0 %v2476
        %v2478 = vpop.f32.mrb[0].mxu0
        %v2479 = vadd.f32 %v2218, %v2478
        %v2480 = vpop.f32.mrb[0].mxu0
        %2481 = vmatprep.mubr.f32.mxu0 0.0
        %v2482 = vand.u32 %v710, 4294901760
        %2483 = vmatmul.mubr.f32.gmra.mrb[0].mxu0 %v2482
        %v2484 = vpop.f32.mrb[0].mxu0
        %v2485 = vadd.f32 %v2224, %v2484
        %v2486 = vpop.f32.mrb[0].mxu0
        %2487 = vmatprep.mubr.f32.mxu0 0.0
        %v2488 = vand.u32 %v713, 4294901760
        %2489 = vmatmul.mubr.f32.gmra.mrb[0].mxu0 %v2488
        %v2490 = vpop.f32.mrb[0].mxu0
        %v2491 = vadd.f32 %v2230, %v2490
        %v2492 = vpop.f32.mrb[0].mxu0
        %2493 = vmatprep.mubr.f32.mxu0 0.0
        %v2494 = vand.u32 %v716, 4294901760
        %2495 = vmatmul.mubr.f32.gmra.mrb[0].mxu0 %v2494
        %v2496 = vpop.f32.mrb[0].mxu0
        %v2497 = vadd.f32 %v2236, %v2496
        %v2498 = vpop.f32.mrb[0].mxu0
        %2499 = vmatprep.mubr.f32.mxu0 0.0
        %v2500 = vand.u32 %v719, 4294901760
        %2501 = vmatmul.mubr.f32.gmra.mrb[0].mxu0 %v2500
        %v2502 = vpop.f32.mrb[0].mxu0
        %v2503 = vadd.f32 %v2242, %v2502
        %v2504 = vpop.f32.mrb[0].mxu0
        %2505 = vmatprep.mubr.f32.mxu0 0.0
        %v2506 = vand.u32 %v722, 4294901760
        %2507 = vmatmul.mubr.f32.gmra.mrb[0].mxu0 %v2506
        %v2508 = vpop.f32.mrb[0].mxu0
        %v2509 = vadd.f32 %v2248, %v2508
        %v2510 = vpop.f32.mrb[0].mxu0
        %2511 = vmatprep.mubr.f32.mxu0 0.0
        %v2512 = vand.u32 %v725, 4294901760
        %2513 = vmatmul.mubr.f32.gmra.mrb[0].mxu0 %v2512
        %v2514 = vpop.f32.mrb[0].mxu0
        %v2515 = vadd.f32 %v2254, %v2514
        %v2516 = vpop.f32.mrb[0].mxu0
        %2517 = vmatprep.mubr.f32.mxu0 0.0
        %v2518 = vand.u32 %v728, 4294901760
        %2519 = vmatmul.mubr.f32.gmra.mrb[0].mxu0 %v2518
        %v2520 = vpop.f32.mrb[0].mxu0
        %v2521 = vadd.f32 %v2260, %v2520
        %v2522 = vpop.f32.mrb[0].mxu0
        %2523 = vmatprep.mubr.f32.mxu0 0.0
        %v2524 = vand.u32 %v731, 4294901760
        %2525 = vmatmul.mubr.f32.gmra.mrb[0].mxu0 %v2524
        %v2526 = vpop.f32.mrb[0].mxu0
        %v2527 = vadd.f32 %v2266, %v2526
        %v2528 = vpop.f32.mrb[0].mxu0
        %2529 = vmatprep.mubr.f32.mxu0 0.0
        %v2530 = vand.u32 %v734, 4294901760
        %2531 = vmatmul.mubr.f32.gmra.mrb[0].mxu0 %v2530
        %v2532 = vpop.f32.mrb[0].mxu0
        %v2533 = vadd.f32 %v2272, %v2532
        %v2534 = vpop.f32.mrb[0].mxu0
        %2535 = vmatprep.mubr.f32.mxu0 0.0
        %v2536 = vand.u32 %v737, 4294901760
        %2537 = vmatmul.mubr.f32.gmra.mrb[0].mxu0 %v2536
        %v2538 = vpop.f32.mrb[0].mxu0
        %v2539 = vadd.f32 %v2278, %v2538
        %v2540 = vpop.f32.mrb[0].mxu0
        %2541 = vmatprep.mubr.f32.mxu0 0.0
        %v2542 = vand.u32 %v740, 4294901760
        %2543 = vmatmul.mubr.f32.gmra.mrb[0].mxu0 %v2542
        %v2544 = vpop.f32.mrb[0].mxu0
        %v2545 = vadd.f32 %v2284, %v2544
        %v2546 = vpop.f32.mrb[0].mxu0
        %2547 = vmatprep.mubr.f32.mxu0 0.0
        %v2548 = vand.u32 %v743, 4294901760
        %2549 = vmatmul.mubr.f32.gmra.mrb[0].mxu0 %v2548
        %v2550 = vpop.f32.mrb[0].mxu0
        %v2551 = vadd.f32 %v2290, %v2550
        %v2552 = vpop.f32.mrb[0].mxu0
        %2553 = vmatprep.mubr.f32.mxu0 0.0
        %v2554 = vand.u32 %v746, 4294901760
        %2555 = vmatmul.mubr.f32.gmra.mrb[0].mxu0 %v2554
        %v2556 = vpop.f32.mrb[0].mxu0
        %v2557 = vadd.f32 %v2296, %v2556
        %v2558 = vpop.f32.mrb[0].mxu0
        %2559 = vmatprep.mubr.f32.mxu0 0.0
        %v2560 = vand.u32 %v749, 4294901760
        %2561 = vmatmul.mubr.f32.gmra.mrb[0].mxu0 %v2560
        %v2562 = vpop.f32.mrb[0].mxu0
        %v2563 = vadd.f32 %v2302, %v2562
        %v2564 = vpop.f32.mrb[0].mxu0
        %2565 = vmatprep.mubr.f32.mxu0 0.0
        %v2566 = vand.u32 %v752, 4294901760
        %2567 = vmatmul.mubr.f32.gmra.mrb[0].mxu0 %v2566
        %v2568 = vpop.f32.mrb[0].mxu0
        %v2569 = vadd.f32 %v2308, %v2568
        %v2570 = vpop.f32.mrb[0].mxu0
        %2571 = vdwg.mxu0
        %v2572 = vld [vmem:[%s287] sm:$0xff]
        %v2573 = vld [vmem:[%s287 + $0x8] sm:$0xff]
        %v2574 = vld [vmem:[%s287 + $0x10] sm:$0xff]
        %v2575 = vld [vmem:[%s287 + $0x18] sm:$0xff]
        %v2576 = vld [vmem:[%s287 + $0x20] sm:$0xff]
        %v2577 = vld [vmem:[%s287 + $0x28] sm:$0xff]
        %v2578 = vld [vmem:[%s287 + $0x30] sm:$0xff]
        %v2579 = vld [vmem:[%s287 + $0x38] sm:$0xff]
        %v2580 = vld [vmem:[%s287 + $0x40] sm:$0xff]
        %v2581 = vld [vmem:[%s287 + $0x48] sm:$0xff]
        %v2582 = vld [vmem:[%s287 + $0x50] sm:$0xff]
        %v2583 = vld [vmem:[%s287 + $0x58] sm:$0xff]
        %v2584 = vld [vmem:[%s287 + $0x60] sm:$0xff]
        %v2585 = vld [vmem:[%s287 + $0x68] sm:$0xff]
        %v2586 = vld [vmem:[%s287 + $0x70] sm:$0xff]
        %v2587 = vld [vmem:[%s287 + $0x78] sm:$0xff]
        %v2588 = vld [vmem:[%s287 + $0x80] sm:$0xff]
        %v2589 = vld [vmem:[%s287 + $0x88] sm:$0xff]
        %v2590 = vld [vmem:[%s287 + $0x90] sm:$0xff]
        %v2591 = vld [vmem:[%s287 + $0x98] sm:$0xff]
        %v2592 = vld [vmem:[%s287 + $0xa0] sm:$0xff]
        %v2593 = vld [vmem:[%s287 + $0xa8] sm:$0xff]
        %v2594 = vld [vmem:[%s287 + $0xb0] sm:$0xff]
        %v2595 = vld [vmem:[%s287 + $0xb8] sm:$0xff]
        %v2596 = vld [vmem:[%s287 + $0xc0] sm:$0xff]
        %v2597 = vld [vmem:[%s287 + $0xc8] sm:$0xff]
        %v2598 = vld [vmem:[%s287 + $0xd0] sm:$0xff]
        %v2599 = vld [vmem:[%s287 + $0xd8] sm:$0xff]
        %v2600 = vld [vmem:[%s287 + $0xe0] sm:$0xff]
        %v2601 = vld [vmem:[%s287 + $0xe8] sm:$0xff]
        %v2602 = vld [vmem:[%s287 + $0xf0] sm:$0xff]
        %v2603 = vld [vmem:[%s287 + $0xf8] sm:$0xff]
        %v2604 = vld [vmem:[%s3] sm:$0xff]
        %v2605 = vld [vmem:[%s3 + $0x8] sm:$0xff]
        %v2606 = vld [vmem:[%s3 + $0x10] sm:$0xff]
        %v2607 = vld [vmem:[%s3 + $0x18] sm:$0xff]
        %v2608 = vld [vmem:[%s3 + $0x20] sm:$0xff]
        %v2609 = vld [vmem:[%s3 + $0x28] sm:$0xff]
        %v2610 = vld [vmem:[%s3 + $0x30] sm:$0xff]
        %v2611 = vld [vmem:[%s3 + $0x38] sm:$0xff]
        %vm2612 = vcmask 523264
        %v2614 = vsel %vm2612, %v2572, 0
        %v2617 = vsel %vm2612, %v2573, 0
        %v2620 = vsel %vm2612, %v2574, 0
        %v2623 = vsel %vm2612, %v2575, 0
        %v2626 = vsel %vm2612, %v2576, 0
        %v2629 = vsel %vm2612, %v2577, 0
        %v2632 = vsel %vm2612, %v2578, 0
        %v2635 = vsel %vm2612, %v2579, 0
        %v2638 = vsel %vm2612, %v2580, 0
        %v2641 = vsel %vm2612, %v2581, 0
        %v2644 = vsel %vm2612, %v2582, 0
        %v2647 = vsel %vm2612, %v2583, 0
        %v2650 = vsel %vm2612, %v2584, 0
        %v2653 = vsel %vm2612, %v2585, 0
        %v2656 = vsel %vm2612, %v2586, 0
        %v2659 = vsel %vm2612, %v2587, 0
        %v2662 = vsel %vm2612, %v2588, 0
        %v2665 = vsel %vm2612, %v2589, 0
        %v2668 = vsel %vm2612, %v2590, 0
        %v2671 = vsel %vm2612, %v2591, 0
        %v2674 = vsel %vm2612, %v2592, 0
        %v2677 = vsel %vm2612, %v2593, 0
        %v2680 = vsel %vm2612, %v2594, 0
        %v2683 = vsel %vm2612, %v2595, 0
        %v2686 = vsel %vm2612, %v2596, 0
        %v2689 = vsel %vm2612, %v2597, 0
        %v2692 = vsel %vm2612, %v2598, 0
        %v2695 = vsel %vm2612, %v2599, 0
        %v2698 = vsel %vm2612, %v2600, 0
        %v2701 = vsel %vm2612, %v2601, 0
        %v2704 = vsel %vm2612, %v2602, 0
        %v2707 = vsel %vm2612, %v2603, 0
        %2709 = vmatprep.subr.mxu0 0.0
        %v2710 = vand.u32 %v2604, 4294901760
        %2711 = vmatpush1.msra.mxu0 %v2710
        %2712 = vmatprep.subr.mxu0 0.0
        %v2713 = vand.u32 %v2605, 4294901760
        %2714 = vmatpush1.msra.mxu0 %v2713
        %2715 = vmatprep.subr.mxu0 0.0
        %v2716 = vand.u32 %v2606, 4294901760
        %2717 = vmatpush1.msra.mxu0 %v2716
        %2718 = vmatprep.subr.mxu0 0.0
        %v2719 = vand.u32 %v2607, 4294901760
        %2720 = vmatpush1.msra.mxu0 %v2719
        %2721 = vmatprep.subr.mxu0 0.0
        %v2722 = vand.u32 %v2608, 4294901760
        %2723 = vmatpush1.msra.mxu0 %v2722
        %2724 = vmatprep.subr.mxu0 0.0
        %v2725 = vand.u32 %v2609, 4294901760
        %2726 = vmatpush1.msra.mxu0 %v2725
        %2727 = vmatprep.subr.mxu0 0.0
        %v2728 = vand.u32 %v2610, 4294901760
        %2729 = vmatpush1.msra.mxu0 %v2728
        %2730 = vmatprep.subr.mxu0 0.0
        %v2731 = vand.u32 %v2611, 4294901760
        %2732 = vmatpush1.msra.mxu0 %v2731
        %2733 = vmatprep.subr.mxu0 0.0
        %2734 = vmatpush1.msra.mxu0 0.0
        %2735 = vmatprep.subr.mxu0 0.0
        %2736 = vmatpush1.msra.mxu0 0.0
        %2737 = vmatprep.subr.mxu0 0.0
        %2738 = vmatpush1.msra.mxu0 0.0
        %2739 = vmatprep.subr.mxu0 0.0
        %2740 = vmatpush1.msra.mxu0 0.0
        %2741 = vmatprep.subr.mxu0 0.0
        %2742 = vmatpush1.msra.mxu0 0.0
        %2743 = vmatprep.subr.mxu0 0.0
        %2744 = vmatpush1.msra.mxu0 0.0
        %2745 = vmatprep.subr.mxu0 0.0
        %2746 = vmatpush1.msra.mxu0 0.0
        %2747 = vmatprep.subr.mxu0 0.0
        %2748 = vmatpush1.msra.mxu0 0.0
        %2749 = vmatprep.subr.mxu0 0.0
        %2750 = vmatpush1.msra.mxu0 0.0
        %2751 = vmatprep.subr.mxu0 0.0
        %2752 = vmatpush1.msra.mxu0 0.0
        %2753 = vmatprep.subr.mxu0 0.0
        %2754 = vmatpush1.msra.mxu0 0.0
        %2755 = vmatprep.subr.mxu0 0.0
        %2756 = vmatpush1.msra.mxu0 0.0
        %2757 = vmatprep.subr.mxu0 0.0
        %2758 = vmatpush1.msra.mxu0 0.0
        %2759 = vmatprep.subr.mxu0 0.0
        %2760 = vmatpush1.msra.mxu0 0.0
        %2761 = vmatprep.subr.mxu0 0.0
        %2762 = vmatpush1.msra.mxu0 0.0
        %2763 = vmatprep.subr.mxu0 0.0
        %2764 = vmatpush1.msra.mxu0 0.0
        %2765 = vmatprep.subr.mxu0 0.0
        %2766 = vmatpush1.msra.mxu0 0.0
        %2767 = vmatprep.subr.mxu0 0.0
        %2768 = vmatpush1.msra.mxu0 0.0
        %2769 = vmatprep.subr.mxu0 0.0
        %2770 = vmatpush1.msra.mxu0 0.0
        %2771 = vmatprep.subr.mxu0 0.0
        %2772 = vmatpush1.msra.mxu0 0.0
        %2773 = vmatprep.subr.mxu0 0.0
        %2774 = vmatpush1.msra.mxu0 0.0
        %2775 = vmatprep.subr.mxu0 0.0
        %2776 = vmatpush1.msra.mxu0 0.0
        %2777 = vmatprep.subr.mxu0 0.0
        %2778 = vmatpush1.msra.mxu0 0.0
        %2779 = vmatprep.subr.mxu0 0.0
        %2780 = vmatpush1.msra.mxu0 0.0
        %2781 = vmatprep.mubr.f32.mxu0 0.0
        %v2782 = vand.u32 %v2614, 4294901760
        %v2783 = vsub.f32 %v2614, %v2782
        %v2784 = vand.u32 %v2783, 4294901760
        %v2785 = vsub.f32 %v2783, %v2784
        %v2786 = vand.u32 %v2785, 4294901760
        %2787 = vmatmul.mubr.f32.gmra.mrb[0].mxu0 %v2786
        %v2788 = vpop.f32.mrb[0].mxu0
        %v2789 = vadd.f32 0.0, %v2788
        %v2790 = vpop.f32.mrb[0].mxu0
        %2791 = vmatprep.mubr.f32.mxu0 0.0
        %v2792 = vand.u32 %v2617, 4294901760
        %v2793 = vsub.f32 %v2617, %v2792
        %v2794 = vand.u32 %v2793, 4294901760
        %v2795 = vsub.f32 %v2793, %v2794
        %v2796 = vand.u32 %v2795, 4294901760
        %2797 = vmatmul.mubr.f32.gmra.mrb[0].mxu0 %v2796
        %v2798 = vpop.f32.mrb[0].mxu0
        %v2799 = vadd.f32 0.0, %v2798
        %v2800 = vpop.f32.mrb[0].mxu0
        %2801 = vmatprep.mubr.f32.mxu0 0.0
        %v2802 = vand.u32 %v2620, 4294901760
        %v2803 = vsub.f32 %v2620, %v2802
        %v2804 = vand.u32 %v2803, 4294901760
        %v2805 = vsub.f32 %v2803, %v2804
        %v2806 = vand.u32 %v2805, 4294901760
        %2807 = vmatmul.mubr.f32.gmra.mrb[0].mxu0 %v2806
        %v2808 = vpop.f32.mrb[0].mxu0
        %v2809 = vadd.f32 0.0, %v2808
        %v2810 = vpop.f32.mrb[0].mxu0
        %2811 = vmatprep.mubr.f32.mxu0 0.0
        %v2812 = vand.u32 %v2623, 4294901760
        %v2813 = vsub.f32 %v2623, %v2812
        %v2814 = vand.u32 %v2813, 4294901760
        %v2815 = vsub.f32 %v2813, %v2814
        %v2816 = vand.u32 %v2815, 4294901760
        %2817 = vmatmul.mubr.f32.gmra.mrb[0].mxu0 %v2816
        %v2818 = vpop.f32.mrb[0].mxu0
        %v2819 = vadd.f32 0.0, %v2818
        %v2820 = vpop.f32.mrb[0].mxu0
        %2821 = vmatprep.mubr.f32.mxu0 0.0
        %v2822 = vand.u32 %v2626, 4294901760
        %v2823 = vsub.f32 %v2626, %v2822
        %v2824 = vand.u32 %v2823, 4294901760
        %v2825 = vsub.f32 %v2823, %v2824
        %v2826 = vand.u32 %v2825, 4294901760
        %2827 = vmatmul.mubr.f32.gmra.mrb[0].mxu0 %v2826
        %v2828 = vpop.f32.mrb[0].mxu0
        %v2829 = vadd.f32 0.0, %v2828
        %v2830 = vpop.f32.mrb[0].mxu0
        %2831 = vmatprep.mubr.f32.mxu0 0.0
        %v2832 = vand.u32 %v2629, 4294901760
        %v2833 = vsub.f32 %v2629, %v2832
        %v2834 = vand.u32 %v2833, 4294901760
        %v2835 = vsub.f32 %v2833, %v2834
        %v2836 = vand.u32 %v2835, 4294901760
        %2837 = vmatmul.mubr.f32.gmra.mrb[0].mxu0 %v2836
        %v2838 = vpop.f32.mrb[0].mxu0
        %v2839 = vadd.f32 0.0, %v2838
        %v2840 = vpop.f32.mrb[0].mxu0
        %2841 = vmatprep.mubr.f32.mxu0 0.0
        %v2842 = vand.u32 %v2632, 4294901760
        %v2843 = vsub.f32 %v2632, %v2842
        %v2844 = vand.u32 %v2843, 4294901760
        %v2845 = vsub.f32 %v2843, %v2844
        %v2846 = vand.u32 %v2845, 4294901760
        %2847 = vmatmul.mubr.f32.gmra.mrb[0].mxu0 %v2846
        %v2848 = vpop.f32.mrb[0].mxu0
        %v2849 = vadd.f32 0.0, %v2848
        %v2850 = vpop.f32.mrb[0].mxu0
        %2851 = vmatprep.mubr.f32.mxu0 0.0
        %v2852 = vand.u32 %v2635, 4294901760
        %v2853 = vsub.f32 %v2635, %v2852
        %v2854 = vand.u32 %v2853, 4294901760
        %v2855 = vsub.f32 %v2853, %v2854
        %v2856 = vand.u32 %v2855, 4294901760
        %2857 = vmatmul.mubr.f32.gmra.mrb[0].mxu0 %v2856
        %v2858 = vpop.f32.mrb[0].mxu0
        %v2859 = vadd.f32 0.0, %v2858
        %v2860 = vpop.f32.mrb[0].mxu0
        %2861 = vmatprep.mubr.f32.mxu0 0.0
        %v2862 = vand.u32 %v2638, 4294901760
        %v2863 = vsub.f32 %v2638, %v2862
        %v2864 = vand.u32 %v2863, 4294901760
        %v2865 = vsub.f32 %v2863, %v2864
        %v2866 = vand.u32 %v2865, 4294901760
        %2867 = vmatmul.mubr.f32.gmra.mrb[0].mxu0 %v2866
        %v2868 = vpop.f32.mrb[0].mxu0
        %v2869 = vadd.f32 0.0, %v2868
        %v2870 = vpop.f32.mrb[0].mxu0
        %2871 = vmatprep.mubr.f32.mxu0 0.0
        %v2872 = vand.u32 %v2641, 4294901760
        %v2873 = vsub.f32 %v2641, %v2872
        %v2874 = vand.u32 %v2873, 4294901760
        %v2875 = vsub.f32 %v2873, %v2874
        %v2876 = vand.u32 %v2875, 4294901760
        %2877 = vmatmul.mubr.f32.gmra.mrb[0].mxu0 %v2876
        %v2878 = vpop.f32.mrb[0].mxu0
        %v2879 = vadd.f32 0.0, %v2878
        %v2880 = vpop.f32.mrb[0].mxu0
        %2881 = vmatprep.mubr.f32.mxu0 0.0
        %v2882 = vand.u32 %v2644, 4294901760
        %v2883 = vsub.f32 %v2644, %v2882
        %v2884 = vand.u32 %v2883, 4294901760
        %v2885 = vsub.f32 %v2883, %v2884
        %v2886 = vand.u32 %v2885, 4294901760
        %2887 = vmatmul.mubr.f32.gmra.mrb[0].mxu0 %v2886
        %v2888 = vpop.f32.mrb[0].mxu0
        %v2889 = vadd.f32 0.0, %v2888
        %v2890 = vpop.f32.mrb[0].mxu0
        %2891 = vmatprep.mubr.f32.mxu0 0.0
        %v2892 = vand.u32 %v2647, 4294901760
        %v2893 = vsub.f32 %v2647, %v2892
        %v2894 = vand.u32 %v2893, 4294901760
        %v2895 = vsub.f32 %v2893, %v2894
        %v2896 = vand.u32 %v2895, 4294901760
        %2897 = vmatmul.mubr.f32.gmra.mrb[0].mxu0 %v2896
        %v2898 = vpop.f32.mrb[0].mxu0
        %v2899 = vadd.f32 0.0, %v2898
        %v2900 = vpop.f32.mrb[0].mxu0
        %2901 = vmatprep.mubr.f32.mxu0 0.0
        %v2902 = vand.u32 %v2650, 4294901760
        %v2903 = vsub.f32 %v2650, %v2902
        %v2904 = vand.u32 %v2903, 4294901760
        %v2905 = vsub.f32 %v2903, %v2904
        %v2906 = vand.u32 %v2905, 4294901760
        %2907 = vmatmul.mubr.f32.gmra.mrb[0].mxu0 %v2906
        %v2908 = vpop.f32.mrb[0].mxu0
        %v2909 = vadd.f32 0.0, %v2908
        %v2910 = vpop.f32.mrb[0].mxu0
        %2911 = vmatprep.mubr.f32.mxu0 0.0
        %v2912 = vand.u32 %v2653, 4294901760
        %v2913 = vsub.f32 %v2653, %v2912
        %v2914 = vand.u32 %v2913, 4294901760
        %v2915 = vsub.f32 %v2913, %v2914
        %v2916 = vand.u32 %v2915, 4294901760
        %2917 = vmatmul.mubr.f32.gmra.mrb[0].mxu0 %v2916
        %v2918 = vpop.f32.mrb[0].mxu0
        %v2919 = vadd.f32 0.0, %v2918
        %v2920 = vpop.f32.mrb[0].mxu0
        %2921 = vmatprep.mubr.f32.mxu0 0.0
        %v2922 = vand.u32 %v2656, 4294901760
        %v2923 = vsub.f32 %v2656, %v2922
        %v2924 = vand.u32 %v2923, 4294901760
        %v2925 = vsub.f32 %v2923, %v2924
        %v2926 = vand.u32 %v2925, 4294901760
        %2927 = vmatmul.mubr.f32.gmra.mrb[0].mxu0 %v2926
        %v2928 = vpop.f32.mrb[0].mxu0
        %v2929 = vadd.f32 0.0, %v2928
        %v2930 = vpop.f32.mrb[0].mxu0
        %2931 = vmatprep.mubr.f32.mxu0 0.0
        %v2932 = vand.u32 %v2659, 4294901760
        %v2933 = vsub.f32 %v2659, %v2932
        %v2934 = vand.u32 %v2933, 4294901760
        %v2935 = vsub.f32 %v2933, %v2934
        %v2936 = vand.u32 %v2935, 4294901760
        %2937 = vmatmul.mubr.f32.gmra.mrb[0].mxu0 %v2936
        %v2938 = vpop.f32.mrb[0].mxu0
        %v2939 = vadd.f32 0.0, %v2938
        %v2940 = vpop.f32.mrb[0].mxu0
        %2941 = vmatprep.mubr.f32.mxu0 0.0
        %v2942 = vand.u32 %v2662, 4294901760
        %v2943 = vsub.f32 %v2662, %v2942
        %v2944 = vand.u32 %v2943, 4294901760
        %v2945 = vsub.f32 %v2943, %v2944
        %v2946 = vand.u32 %v2945, 4294901760
        %2947 = vmatmul.mubr.f32.gmra.mrb[0].mxu0 %v2946
        %v2948 = vpop.f32.mrb[0].mxu0
        %v2949 = vadd.f32 0.0, %v2948
        %v2950 = vpop.f32.mrb[0].mxu0
        %2951 = vmatprep.mubr.f32.mxu0 0.0
        %v2952 = vand.u32 %v2665, 4294901760
        %v2953 = vsub.f32 %v2665, %v2952
        %v2954 = vand.u32 %v2953, 4294901760
        %v2955 = vsub.f32 %v2953, %v2954
        %v2956 = vand.u32 %v2955, 4294901760
        %2957 = vmatmul.mubr.f32.gmra.mrb[0].mxu0 %v2956
        %v2958 = vpop.f32.mrb[0].mxu0
        %v2959 = vadd.f32 0.0, %v2958
        %v2960 = vpop.f32.mrb[0].mxu0
        %2961 = vmatprep.mubr.f32.mxu0 0.0
        %v2962 = vand.u32 %v2668, 4294901760
        %v2963 = vsub.f32 %v2668, %v2962
        %v2964 = vand.u32 %v2963, 4294901760
        %v2965 = vsub.f32 %v2963, %v2964
        %v2966 = vand.u32 %v2965, 4294901760
        %2967 = vmatmul.mubr.f32.gmra.mrb[0].mxu0 %v2966
        %v2968 = vpop.f32.mrb[0].mxu0
        %v2969 = vadd.f32 0.0, %v2968
        %v2970 = vpop.f32.mrb[0].mxu0
        %2971 = vmatprep.mubr.f32.mxu0 0.0
        %v2972 = vand.u32 %v2671, 4294901760
        %v2973 = vsub.f32 %v2671, %v2972
        %v2974 = vand.u32 %v2973, 4294901760
        %v2975 = vsub.f32 %v2973, %v2974
        %v2976 = vand.u32 %v2975, 4294901760
        %2977 = vmatmul.mubr.f32.gmra.mrb[0].mxu0 %v2976
        %v2978 = vpop.f32.mrb[0].mxu0
        %v2979 = vadd.f32 0.0, %v2978
        %v2980 = vpop.f32.mrb[0].mxu0
        %2981 = vmatprep.mubr.f32.mxu0 0.0
        %v2982 = vand.u32 %v2674, 4294901760
        %v2983 = vsub.f32 %v2674, %v2982
        %v2984 = vand.u32 %v2983, 4294901760
        %v2985 = vsub.f32 %v2983, %v2984
        %v2986 = vand.u32 %v2985, 4294901760
        %2987 = vmatmul.mubr.f32.gmra.mrb[0].mxu0 %v2986
        %v2988 = vpop.f32.mrb[0].mxu0
        %v2989 = vadd.f32 0.0, %v2988
        %v2990 = vpop.f32.mrb[0].mxu0
        %2991 = vmatprep.mubr.f32.mxu0 0.0
        %v2992 = vand.u32 %v2677, 4294901760
        %v2993 = vsub.f32 %v2677, %v2992
        %v2994 = vand.u32 %v2993, 4294901760
        %v2995 = vsub.f32 %v2993, %v2994
        %v2996 = vand.u32 %v2995, 4294901760
        %2997 = vmatmul.mubr.f32.gmra.mrb[0].mxu0 %v2996
        %v2998 = vpop.f32.mrb[0].mxu0
        %v2999 = vadd.f32 0.0, %v2998
        %v3000 = vpop.f32.mrb[0].mxu0
        %3001 = vmatprep.mubr.f32.mxu0 0.0
        %v3002 = vand.u32 %v2680, 4294901760
        %v3003 = vsub.f32 %v2680, %v3002
        %v3004 = vand.u32 %v3003, 4294901760
        %v3005 = vsub.f32 %v3003, %v3004
        %v3006 = vand.u32 %v3005, 4294901760
        %3007 = vmatmul.mubr.f32.gmra.mrb[0].mxu0 %v3006
        %v3008 = vpop.f32.mrb[0].mxu0
        %v3009 = vadd.f32 0.0, %v3008
        %v3010 = vpop.f32.mrb[0].mxu0
        %3011 = vmatprep.mubr.f32.mxu0 0.0
        %v3012 = vand.u32 %v2683, 4294901760
        %v3013 = vsub.f32 %v2683, %v3012
        %v3014 = vand.u32 %v3013, 4294901760
        %v3015 = vsub.f32 %v3013, %v3014
        %v3016 = vand.u32 %v3015, 4294901760
        %3017 = vmatmul.mubr.f32.gmra.mrb[0].mxu0 %v3016
        %v3018 = vpop.f32.mrb[0].mxu0
        %v3019 = vadd.f32 0.0, %v3018
        %v3020 = vpop.f32.mrb[0].mxu0
        %3021 = vmatprep.mubr.f32.mxu0 0.0
        %v3022 = vand.u32 %v2686, 4294901760
        %v3023 = vsub.f32 %v2686, %v3022
        %v3024 = vand.u32 %v3023, 4294901760
        %v3025 = vsub.f32 %v3023, %v3024
        %v3026 = vand.u32 %v3025, 4294901760
        %3027 = vmatmul.mubr.f32.gmra.mrb[0].mxu0 %v3026
        %v3028 = vpop.f32.mrb[0].mxu0
        %v3029 = vadd.f32 0.0, %v3028
        %v3030 = vpop.f32.mrb[0].mxu0
        %3031 = vmatprep.mubr.f32.mxu0 0.0
        %v3032 = vand.u32 %v2689, 4294901760
        %v3033 = vsub.f32 %v2689, %v3032
        %v3034 = vand.u32 %v3033, 4294901760
        %v3035 = vsub.f32 %v3033, %v3034
        %v3036 = vand.u32 %v3035, 4294901760
        %3037 = vmatmul.mubr.f32.gmra.mrb[0].mxu0 %v3036
        %v3038 = vpop.f32.mrb[0].mxu0
        %v3039 = vadd.f32 0.0, %v3038
        %v3040 = vpop.f32.mrb[0].mxu0
        %3041 = vmatprep.mubr.f32.mxu0 0.0
        %v3042 = vand.u32 %v2692, 4294901760
        %v3043 = vsub.f32 %v2692, %v3042
        %v3044 = vand.u32 %v3043, 4294901760
        %v3045 = vsub.f32 %v3043, %v3044
        %v3046 = vand.u32 %v3045, 4294901760
        %3047 = vmatmul.mubr.f32.gmra.mrb[0].mxu0 %v3046
        %v3048 = vpop.f32.mrb[0].mxu0
        %v3049 = vadd.f32 0.0, %v3048
        %v3050 = vpop.f32.mrb[0].mxu0
        %3051 = vmatprep.mubr.f32.mxu0 0.0
        %v3052 = vand.u32 %v2695, 4294901760
        %v3053 = vsub.f32 %v2695, %v3052
        %v3054 = vand.u32 %v3053, 4294901760
        %v3055 = vsub.f32 %v3053, %v3054
        %v3056 = vand.u32 %v3055, 4294901760
        %3057 = vmatmul.mubr.f32.gmra.mrb[0].mxu0 %v3056
        %v3058 = vpop.f32.mrb[0].mxu0
        %v3059 = vadd.f32 0.0, %v3058
        %v3060 = vpop.f32.mrb[0].mxu0
        %3061 = vmatprep.mubr.f32.mxu0 0.0
        %v3062 = vand.u32 %v2698, 4294901760
        %v3063 = vsub.f32 %v2698, %v3062
        %v3064 = vand.u32 %v3063, 4294901760
        %v3065 = vsub.f32 %v3063, %v3064
        %v3066 = vand.u32 %v3065, 4294901760
        %3067 = vmatmul.mubr.f32.gmra.mrb[0].mxu0 %v3066
        %v3068 = vpop.f32.mrb[0].mxu0
        %v3069 = vadd.f32 0.0, %v3068
        %v3070 = vpop.f32.mrb[0].mxu0
        %3071 = vmatprep.mubr.f32.mxu0 0.0
        %v3072 = vand.u32 %v2701, 4294901760
        %v3073 = vsub.f32 %v2701, %v3072
        %v3074 = vand.u32 %v3073, 4294901760
        %v3075 = vsub.f32 %v3073, %v3074
        %v3076 = vand.u32 %v3075, 4294901760
        %3077 = vmatmul.mubr.f32.gmra.mrb[0].mxu0 %v3076
        %v3078 = vpop.f32.mrb[0].mxu0
        %v3079 = vadd.f32 0.0, %v3078
        %v3080 = vpop.f32.mrb[0].mxu0
        %3081 = vmatprep.mubr.f32.mxu0 0.0
        %v3082 = vand.u32 %v2704, 4294901760
        %v3083 = vsub.f32 %v2704, %v3082
        %v3084 = vand.u32 %v3083, 4294901760
        %v3085 = vsub.f32 %v3083, %v3084
        %v3086 = vand.u32 %v3085, 4294901760
        %3087 = vmatmul.mubr.f32.gmra.mrb[0].mxu0 %v3086
        %v3088 = vpop.f32.mrb[0].mxu0
        %v3089 = vadd.f32 0.0, %v3088
        %v3090 = vpop.f32.mrb[0].mxu0
        %3091 = vmatprep.mubr.f32.mxu0 0.0
        %v3092 = vand.u32 %v2707, 4294901760
        %v3093 = vsub.f32 %v2707, %v3092
        %v3094 = vand.u32 %v3093, 4294901760
        %v3095 = vsub.f32 %v3093, %v3094
        %v3096 = vand.u32 %v3095, 4294901760
        %3097 = vmatmul.mubr.f32.gmra.mrb[0].mxu0 %v3096
        %v3098 = vpop.f32.mrb[0].mxu0
        %v3099 = vadd.f32 0.0, %v3098
        %v3100 = vpop.f32.mrb[0].mxu0
        %3101 = vdwg.mxu0
        %3102 = vmatprep.subr.mxu0 0.0
        %v3103 = vand.u32 %v2604, 4294901760
        %v3104 = vsub.f32 %v2604, %v3103
        %v3105 = vand.u32 %v3104, 4294901760
        %v3106 = vsub.f32 %v3104, %v3105
        %v3107 = vand.u32 %v3106, 4294901760
        %3108 = vmatpush1.msra.mxu0 %v3107
        %3109 = vmatprep.subr.mxu0 0.0
        %v3110 = vand.u32 %v2605, 4294901760
        %v3111 = vsub.f32 %v2605, %v3110
        %v3112 = vand.u32 %v3111, 4294901760
        %v3113 = vsub.f32 %v3111, %v3112
        %v3114 = vand.u32 %v3113, 4294901760
        %3115 = vmatpush1.msra.mxu0 %v3114
        %3116 = vmatprep.subr.mxu0 0.0
        %v3117 = vand.u32 %v2606, 4294901760
        %v3118 = vsub.f32 %v2606, %v3117
        %v3119 = vand.u32 %v3118, 4294901760
        %v3120 = vsub.f32 %v3118, %v3119
        %v3121 = vand.u32 %v3120, 4294901760
        %3122 = vmatpush1.msra.mxu0 %v3121
        %3123 = vmatprep.subr.mxu0 0.0
        %v3124 = vand.u32 %v2607, 4294901760
        %v3125 = vsub.f32 %v2607, %v3124
        %v3126 = vand.u32 %v3125, 4294901760
        %v3127 = vsub.f32 %v3125, %v3126
        %v3128 = vand.u32 %v3127, 4294901760
        %3129 = vmatpush1.msra.mxu0 %v3128
        %3130 = vmatprep.subr.mxu0 0.0
        %v3131 = vand.u32 %v2608, 4294901760
        %v3132 = vsub.f32 %v2608, %v3131
        %v3133 = vand.u32 %v3132, 4294901760
        %v3134 = vsub.f32 %v3132, %v3133
        %v3135 = vand.u32 %v3134, 4294901760
        %3136 = vmatpush1.msra.mxu0 %v3135
        %3137 = vmatprep.subr.mxu0 0.0
        %v3138 = vand.u32 %v2609, 4294901760
        %v3139 = vsub.f32 %v2609, %v3138
        %v3140 = vand.u32 %v3139, 4294901760
        %v3141 = vsub.f32 %v3139, %v3140
        %v3142 = vand.u32 %v3141, 4294901760
        %3143 = vmatpush1.msra.mxu0 %v3142
        %3144 = vmatprep.subr.mxu0 0.0
        %v3145 = vand.u32 %v2610, 4294901760
        %v3146 = vsub.f32 %v2610, %v3145
        %v3147 = vand.u32 %v3146, 4294901760
        %v3148 = vsub.f32 %v3146, %v3147
        %v3149 = vand.u32 %v3148, 4294901760
        %3150 = vmatpush1.msra.mxu0 %v3149
        %3151 = vmatprep.subr.mxu0 0.0
        %v3152 = vand.u32 %v2611, 4294901760
        %v3153 = vsub.f32 %v2611, %v3152
        %v3154 = vand.u32 %v3153, 4294901760
        %v3155 = vsub.f32 %v3153, %v3154
        %v3156 = vand.u32 %v3155, 4294901760
        %3157 = vmatpush1.msra.mxu0 %v3156
        %3158 = vmatprep.subr.mxu0 0.0
        %3159 = vmatpush1.msra.mxu0 0.0
        %3160 = vmatprep.subr.mxu0 0.0
        %3161 = vmatpush1.msra.mxu0 0.0
        %3162 = vmatprep.subr.mxu0 0.0
        %3163 = vmatpush1.msra.mxu0 0.0
        %3164 = vmatprep.subr.mxu0 0.0
        %3165 = vmatpush1.msra.mxu0 0.0
        %3166 = vmatprep.subr.mxu0 0.0
        %3167 = vmatpush1.msra.mxu0 0.0
        %3168 = vmatprep.subr.mxu0 0.0
        %3169 = vmatpush1.msra.mxu0 0.0
        %3170 = vmatprep.subr.mxu0 0.0
        %3171 = vmatpush1.msra.mxu0 0.0
        %3172 = vmatprep.subr.mxu0 0.0
        %3173 = vmatpush1.msra.mxu0 0.0
        %3174 = vmatprep.subr.mxu0 0.0
        %3175 = vmatpush1.msra.mxu0 0.0
        %3176 = vmatprep.subr.mxu0 0.0
        %3177 = vmatpush1.msra.mxu0 0.0
        %3178 = vmatprep.subr.mxu0 0.0
        %3179 = vmatpush1.msra.mxu0 0.0
        %3180 = vmatprep.subr.mxu0 0.0
        %3181 = vmatpush1.msra.mxu0 0.0
        %3182 = vmatprep.subr.mxu0 0.0
        %3183 = vmatpush1.msra.mxu0 0.0
        %3184 = vmatprep.subr.mxu0 0.0
        %3185 = vmatpush1.msra.mxu0 0.0
        %3186 = vmatprep.subr.mxu0 0.0
        %3187 = vmatpush1.msra.mxu0 0.0
        %3188 = vmatprep.subr.mxu0 0.0
        %3189 = vmatpush1.msra.mxu0 0.0
        %3190 = vmatprep.subr.mxu0 0.0
        %3191 = vmatpush1.msra.mxu0 0.0
        %3192 = vmatprep.subr.mxu0 0.0
        %3193 = vmatpush1.msra.mxu0 0.0
        %3194 = vmatprep.subr.mxu0 0.0
        %3195 = vmatpush1.msra.mxu0 0.0
        %3196 = vmatprep.subr.mxu0 0.0
        %3197 = vmatpush1.msra.mxu0 0.0
        %3198 = vmatprep.subr.mxu0 0.0
        %3199 = vmatpush1.msra.mxu0 0.0
        %3200 = vmatprep.subr.mxu0 0.0
        %3201 = vmatpush1.msra.mxu0 0.0
        %3202 = vmatprep.subr.mxu0 0.0
        %3203 = vmatpush1.msra.mxu0 0.0
        %3204 = vmatprep.subr.mxu0 0.0
        %3205 = vmatpush1.msra.mxu0 0.0
        %3206 = vmatprep.mubr.f32.mxu0 0.0
        %v3207 = vand.u32 %v2614, 4294901760
        %3208 = vmatmul.mubr.f32.gmra.mrb[0].mxu0 %v3207
        %v3209 = vpop.f32.mrb[0].mxu0
        %v3210 = vadd.f32 %v2789, %v3209
        %v3211 = vpop.f32.mrb[0].mxu0
        %3212 = vmatprep.mubr.f32.mxu0 0.0
        %v3213 = vand.u32 %v2617, 4294901760
        %3214 = vmatmul.mubr.f32.gmra.mrb[0].mxu0 %v3213
        %v3215 = vpop.f32.mrb[0].mxu0
        %v3216 = vadd.f32 %v2799, %v3215
        %v3217 = vpop.f32.mrb[0].mxu0
        %3218 = vmatprep.mubr.f32.mxu0 0.0
        %v3219 = vand.u32 %v2620, 4294901760
        %3220 = vmatmul.mubr.f32.gmra.mrb[0].mxu0 %v3219
        %v3221 = vpop.f32.mrb[0].mxu0
        %v3222 = vadd.f32 %v2809, %v3221
        %v3223 = vpop.f32.mrb[0].mxu0
        %3224 = vmatprep.mubr.f32.mxu0 0.0
        %v3225 = vand.u32 %v2623, 4294901760
        %3226 = vmatmul.mubr.f32.gmra.mrb[0].mxu0 %v3225
        %v3227 = vpop.f32.mrb[0].mxu0
        %v3228 = vadd.f32 %v2819, %v3227
        %v3229 = vpop.f32.mrb[0].mxu0
        %3230 = vmatprep.mubr.f32.mxu0 0.0
        %v3231 = vand.u32 %v2626, 4294901760
        %3232 = vmatmul.mubr.f32.gmra.mrb[0].mxu0 %v3231
        %v3233 = vpop.f32.mrb[0].mxu0
        %v3234 = vadd.f32 %v2829, %v3233
        %v3235 = vpop.f32.mrb[0].mxu0
        %3236 = vmatprep.mubr.f32.mxu0 0.0
        %v3237 = vand.u32 %v2629, 4294901760
        %3238 = vmatmul.mubr.f32.gmra.mrb[0].mxu0 %v3237
        %v3239 = vpop.f32.mrb[0].mxu0
        %v3240 = vadd.f32 %v2839, %v3239
        %v3241 = vpop.f32.mrb[0].mxu0
        %3242 = vmatprep.mubr.f32.mxu0 0.0
        %v3243 = vand.u32 %v2632, 4294901760
        %3244 = vmatmul.mubr.f32.gmra.mrb[0].mxu0 %v3243
        %v3245 = vpop.f32.mrb[0].mxu0
        %v3246 = vadd.f32 %v2849, %v3245
        %v3247 = vpop.f32.mrb[0].mxu0
        %3248 = vmatprep.mubr.f32.mxu0 0.0
        %v3249 = vand.u32 %v2635, 4294901760
        %3250 = vmatmul.mubr.f32.gmra.mrb[0].mxu0 %v3249
        %v3251 = vpop.f32.mrb[0].mxu0
        %v3252 = vadd.f32 %v2859, %v3251
        %v3253 = vpop.f32.mrb[0].mxu0
        %3254 = vmatprep.mubr.f32.mxu0 0.0
        %v3255 = vand.u32 %v2638, 4294901760
        %3256 = vmatmul.mubr.f32.gmra.mrb[0].mxu0 %v3255
        %v3257 = vpop.f32.mrb[0].mxu0
        %v3258 = vadd.f32 %v2869, %v3257
        %v3259 = vpop.f32.mrb[0].mxu0
        %3260 = vmatprep.mubr.f32.mxu0 0.0
        %v3261 = vand.u32 %v2641, 4294901760
        %3262 = vmatmul.mubr.f32.gmra.mrb[0].mxu0 %v3261
        %v3263 = vpop.f32.mrb[0].mxu0
        %v3264 = vadd.f32 %v2879, %v3263
        %v3265 = vpop.f32.mrb[0].mxu0
        %3266 = vmatprep.mubr.f32.mxu0 0.0
        %v3267 = vand.u32 %v2644, 4294901760
        %3268 = vmatmul.mubr.f32.gmra.mrb[0].mxu0 %v3267
        %v3269 = vpop.f32.mrb[0].mxu0
        %v3270 = vadd.f32 %v2889, %v3269
        %v3271 = vpop.f32.mrb[0].mxu0
        %3272 = vmatprep.mubr.f32.mxu0 0.0
        %v3273 = vand.u32 %v2647, 4294901760
        %3274 = vmatmul.mubr.f32.gmra.mrb[0].mxu0 %v3273
        %v3275 = vpop.f32.mrb[0].mxu0
        %v3276 = vadd.f32 %v2899, %v3275
        %v3277 = vpop.f32.mrb[0].mxu0
        %3278 = vmatprep.mubr.f32.mxu0 0.0
        %v3279 = vand.u32 %v2650, 4294901760
        %3280 = vmatmul.mubr.f32.gmra.mrb[0].mxu0 %v3279
        %v3281 = vpop.f32.mrb[0].mxu0
        %v3282 = vadd.f32 %v2909, %v3281
        %v3283 = vpop.f32.mrb[0].mxu0
        %3284 = vmatprep.mubr.f32.mxu0 0.0
        %v3285 = vand.u32 %v2653, 4294901760
        %3286 = vmatmul.mubr.f32.gmra.mrb[0].mxu0 %v3285
        %v3287 = vpop.f32.mrb[0].mxu0
        %v3288 = vadd.f32 %v2919, %v3287
        %v3289 = vpop.f32.mrb[0].mxu0
        %3290 = vmatprep.mubr.f32.mxu0 0.0
        %v3291 = vand.u32 %v2656, 4294901760
        %3292 = vmatmul.mubr.f32.gmra.mrb[0].mxu0 %v3291
        %v3293 = vpop.f32.mrb[0].mxu0
        %v3294 = vadd.f32 %v2929, %v3293
        %v3295 = vpop.f32.mrb[0].mxu0
        %3296 = vmatprep.mubr.f32.mxu0 0.0
        %v3297 = vand.u32 %v2659, 4294901760
        %3298 = vmatmul.mubr.f32.gmra.mrb[0].mxu0 %v3297
        %v3299 = vpop.f32.mrb[0].mxu0
        %v3300 = vadd.f32 %v2939, %v3299
        %v3301 = vpop.f32.mrb[0].mxu0
        %3302 = vmatprep.mubr.f32.mxu0 0.0
        %v3303 = vand.u32 %v2662, 4294901760
        %3304 = vmatmul.mubr.f32.gmra.mrb[0].mxu0 %v3303
        %v3305 = vpop.f32.mrb[0].mxu0
        %v3306 = vadd.f32 %v2949, %v3305
        %v3307 = vpop.f32.mrb[0].mxu0
        %3308 = vmatprep.mubr.f32.mxu0 0.0
        %v3309 = vand.u32 %v2665, 4294901760
        %3310 = vmatmul.mubr.f32.gmra.mrb[0].mxu0 %v3309
        %v3311 = vpop.f32.mrb[0].mxu0
        %v3312 = vadd.f32 %v2959, %v3311
        %v3313 = vpop.f32.mrb[0].mxu0
        %3314 = vmatprep.mubr.f32.mxu0 0.0
        %v3315 = vand.u32 %v2668, 4294901760
        %3316 = vmatmul.mubr.f32.gmra.mrb[0].mxu0 %v3315
        %v3317 = vpop.f32.mrb[0].mxu0
        %v3318 = vadd.f32 %v2969, %v3317
        %v3319 = vpop.f32.mrb[0].mxu0
        %3320 = vmatprep.mubr.f32.mxu0 0.0
        %v3321 = vand.u32 %v2671, 4294901760
        %3322 = vmatmul.mubr.f32.gmra.mrb[0].mxu0 %v3321
        %v3323 = vpop.f32.mrb[0].mxu0
        %v3324 = vadd.f32 %v2979, %v3323
        %v3325 = vpop.f32.mrb[0].mxu0
        %3326 = vmatprep.mubr.f32.mxu0 0.0
        %v3327 = vand.u32 %v2674, 4294901760
        %3328 = vmatmul.mubr.f32.gmra.mrb[0].mxu0 %v3327
        %v3329 = vpop.f32.mrb[0].mxu0
        %v3330 = vadd.f32 %v2989, %v3329
        %v3331 = vpop.f32.mrb[0].mxu0
        %3332 = vmatprep.mubr.f32.mxu0 0.0
        %v3333 = vand.u32 %v2677, 4294901760
        %3334 = vmatmul.mubr.f32.gmra.mrb[0].mxu0 %v3333
        %v3335 = vpop.f32.mrb[0].mxu0
        %v3336 = vadd.f32 %v2999, %v3335
        %v3337 = vpop.f32.mrb[0].mxu0
        %3338 = vmatprep.mubr.f32.mxu0 0.0
        %v3339 = vand.u32 %v2680, 4294901760
        %3340 = vmatmul.mubr.f32.gmra.mrb[0].mxu0 %v3339
        %v3341 = vpop.f32.mrb[0].mxu0
        %v3342 = vadd.f32 %v3009, %v3341
        %v3343 = vpop.f32.mrb[0].mxu0
        %3344 = vmatprep.mubr.f32.mxu0 0.0
        %v3345 = vand.u32 %v2683, 4294901760
        %3346 = vmatmul.mubr.f32.gmra.mrb[0].mxu0 %v3345
        %v3347 = vpop.f32.mrb[0].mxu0
        %v3348 = vadd.f32 %v3019, %v3347
        %v3349 = vpop.f32.mrb[0].mxu0
        %3350 = vmatprep.mubr.f32.mxu0 0.0
        %v3351 = vand.u32 %v2686, 4294901760
        %3352 = vmatmul.mubr.f32.gmra.mrb[0].mxu0 %v3351
        %v3353 = vpop.f32.mrb[0].mxu0
        %v3354 = vadd.f32 %v3029, %v3353
        %v3355 = vpop.f32.mrb[0].mxu0
        %3356 = vmatprep.mubr.f32.mxu0 0.0
        %v3357 = vand.u32 %v2689, 4294901760
        %3358 = vmatmul.mubr.f32.gmra.mrb[0].mxu0 %v3357
        %v3359 = vpop.f32.mrb[0].mxu0
        %v3360 = vadd.f32 %v3039, %v3359
        %v3361 = vpop.f32.mrb[0].mxu0
        %3362 = vmatprep.mubr.f32.mxu0 0.0
        %v3363 = vand.u32 %v2692, 4294901760
        %3364 = vmatmul.mubr.f32.gmra.mrb[0].mxu0 %v3363
        %v3365 = vpop.f32.mrb[0].mxu0
        %v3366 = vadd.f32 %v3049, %v3365
        %v3367 = vpop.f32.mrb[0].mxu0
        %3368 = vmatprep.mubr.f32.mxu0 0.0
        %v3369 = vand.u32 %v2695, 4294901760
        %3370 = vmatmul.mubr.f32.gmra.mrb[0].mxu0 %v3369
        %v3371 = vpop.f32.mrb[0].mxu0
        %v3372 = vadd.f32 %v3059, %v3371
        %v3373 = vpop.f32.mrb[0].mxu0
        %3374 = vmatprep.mubr.f32.mxu0 0.0
        %v3375 = vand.u32 %v2698, 4294901760
        %3376 = vmatmul.mubr.f32.gmra.mrb[0].mxu0 %v3375
        %v3377 = vpop.f32.mrb[0].mxu0
        %v3378 = vadd.f32 %v3069, %v3377
        %v3379 = vpop.f32.mrb[0].mxu0
        %3380 = vmatprep.mubr.f32.mxu0 0.0
        %v3381 = vand.u32 %v2701, 4294901760
        %3382 = vmatmul.mubr.f32.gmra.mrb[0].mxu0 %v3381
        %v3383 = vpop.f32.mrb[0].mxu0
        %v3384 = vadd.f32 %v3079, %v3383
        %v3385 = vpop.f32.mrb[0].mxu0
        %3386 = vmatprep.mubr.f32.mxu0 0.0
        %v3387 = vand.u32 %v2704, 4294901760
        %3388 = vmatmul.mubr.f32.gmra.mrb[0].mxu0 %v3387
        %v3389 = vpop.f32.mrb[0].mxu0
        %v3390 = vadd.f32 %v3089, %v3389
        %v3391 = vpop.f32.mrb[0].mxu0
        %3392 = vmatprep.mubr.f32.mxu0 0.0
        %v3393 = vand.u32 %v2707, 4294901760
        %3394 = vmatmul.mubr.f32.gmra.mrb[0].mxu0 %v3393
        %v3395 = vpop.f32.mrb[0].mxu0
        %v3396 = vadd.f32 %v3099, %v3395
        %v3397 = vpop.f32.mrb[0].mxu0
        %3398 = vdwg.mxu0
        %3399 = vmatprep.subr.mxu0 0.0
        %v3400 = vand.u32 %v2604, 4294901760
        %v3401 = vsub.f32 %v2604, %v3400
        %3402 = vmatpush1.msra.mxu0 %v3401
        %3403 = vmatprep.subr.mxu0 0.0
        %v3404 = vand.u32 %v2605, 4294901760
        %v3405 = vsub.f32 %v2605, %v3404
        %3406 = vmatpush1.msra.mxu0 %v3405
        %3407 = vmatprep.subr.mxu0 0.0
        %v3408 = vand.u32 %v2606, 4294901760
        %v3409 = vsub.f32 %v2606, %v3408
        %3410 = vmatpush1.msra.mxu0 %v3409
        %3411 = vmatprep.subr.mxu0 0.0
        %v3412 = vand.u32 %v2607, 4294901760
        %v3413 = vsub.f32 %v2607, %v3412
        %3414 = vmatpush1.msra.mxu0 %v3413
        %3415 = vmatprep.subr.mxu0 0.0
        %v3416 = vand.u32 %v2608, 4294901760
        %v3417 = vsub.f32 %v2608, %v3416
        %3418 = vmatpush1.msra.mxu0 %v3417
        %3419 = vmatprep.subr.mxu0 0.0
        %v3420 = vand.u32 %v2609, 4294901760
        %v3421 = vsub.f32 %v2609, %v3420
        %3422 = vmatpush1.msra.mxu0 %v3421
        %3423 = vmatprep.subr.mxu0 0.0
        %v3424 = vand.u32 %v2610, 4294901760
        %v3425 = vsub.f32 %v2610, %v3424
        %3426 = vmatpush1.msra.mxu0 %v3425
        %3427 = vmatprep.subr.mxu0 0.0
        %v3428 = vand.u32 %v2611, 4294901760
        %v3429 = vsub.f32 %v2611, %v3428
        %3430 = vmatpush1.msra.mxu0 %v3429
        %3431 = vmatprep.subr.mxu0 0.0
        %3432 = vmatpush1.msra.mxu0 0.0
        %3433 = vmatprep.subr.mxu0 0.0
        %3434 = vmatpush1.msra.mxu0 0.0
        %3435 = vmatprep.subr.mxu0 0.0
        %3436 = vmatpush1.msra.mxu0 0.0
        %3437 = vmatprep.subr.mxu0 0.0
        %3438 = vmatpush1.msra.mxu0 0.0
        %3439 = vmatprep.subr.mxu0 0.0
        %3440 = vmatpush1.msra.mxu0 0.0
        %3441 = vmatprep.subr.mxu0 0.0
        %3442 = vmatpush1.msra.mxu0 0.0
        %3443 = vmatprep.subr.mxu0 0.0
        %3444 = vmatpush1.msra.mxu0 0.0
        %3445 = vmatprep.subr.mxu0 0.0
        %3446 = vmatpush1.msra.mxu0 0.0
        %3447 = vmatprep.subr.mxu0 0.0
        %3448 = vmatpush1.msra.mxu0 0.0
        %3449 = vmatprep.subr.mxu0 0.0
        %3450 = vmatpush1.msra.mxu0 0.0
        %3451 = vmatprep.subr.mxu0 0.0
        %3452 = vmatpush1.msra.mxu0 0.0
        %3453 = vmatprep.subr.mxu0 0.0
        %3454 = vmatpush1.msra.mxu0 0.0
        %3455 = vmatprep.subr.mxu0 0.0
        %3456 = vmatpush1.msra.mxu0 0.0
        %3457 = vmatprep.subr.mxu0 0.0
        %3458 = vmatpush1.msra.mxu0 0.0
        %3459 = vmatprep.subr.mxu0 0.0
        %3460 = vmatpush1.msra.mxu0 0.0
        %3461 = vmatprep.subr.mxu0 0.0
        %3462 = vmatpush1.msra.mxu0 0.0
        %3463 = vmatprep.subr.mxu0 0.0
        %3464 = vmatpush1.msra.mxu0 0.0
        %3465 = vmatprep.subr.mxu0 0.0
        %3466 = vmatpush1.msra.mxu0 0.0
        %3467 = vmatprep.subr.mxu0 0.0
        %3468 = vmatpush1.msra.mxu0 0.0
        %3469 = vmatprep.subr.mxu0 0.0
        %3470 = vmatpush1.msra.mxu0 0.0
        %3471 = vmatprep.subr.mxu0 0.0
        %3472 = vmatpush1.msra.mxu0 0.0
        %3473 = vmatprep.subr.mxu0 0.0
        %3474 = vmatpush1.msra.mxu0 0.0
        %3475 = vmatprep.subr.mxu0 0.0
        %3476 = vmatpush1.msra.mxu0 0.0
        %3477 = vmatprep.subr.mxu0 0.0
        %3478 = vmatpush1.msra.mxu0 0.0
        %3479 = vmatprep.mubr.f32.mxu0 0.0
        %v3480 = vand.u32 %v2614, 4294901760
        %v3481 = vsub.f32 %v2614, %v3480
        %3482 = vmatmul.mubr.f32.gmra.mrb[0].mxu0 %v3481
        %v3483 = vpop.f32.mrb[0].mxu0
        %v3484 = vadd.f32 %v3210, %v3483
        %v3485 = vpop.f32.mrb[0].mxu0
        %3486 = vmatprep.mubr.f32.mxu0 0.0
        %v3487 = vand.u32 %v2617, 4294901760
        %v3488 = vsub.f32 %v2617, %v3487
        %3489 = vmatmul.mubr.f32.gmra.mrb[0].mxu0 %v3488
        %v3490 = vpop.f32.mrb[0].mxu0
        %v3491 = vadd.f32 %v3216, %v3490
        %v3492 = vpop.f32.mrb[0].mxu0
        %3493 = vmatprep.mubr.f32.mxu0 0.0
        %v3494 = vand.u32 %v2620, 4294901760
        %v3495 = vsub.f32 %v2620, %v3494
        %3496 = vmatmul.mubr.f32.gmra.mrb[0].mxu0 %v3495
        %v3497 = vpop.f32.mrb[0].mxu0
        %v3498 = vadd.f32 %v3222, %v3497
        %v3499 = vpop.f32.mrb[0].mxu0
        %3500 = vmatprep.mubr.f32.mxu0 0.0
        %v3501 = vand.u32 %v2623, 4294901760
        %v3502 = vsub.f32 %v2623, %v3501
        %3503 = vmatmul.mubr.f32.gmra.mrb[0].mxu0 %v3502
        %v3504 = vpop.f32.mrb[0].mxu0
        %v3505 = vadd.f32 %v3228, %v3504
        %v3506 = vpop.f32.mrb[0].mxu0
        %3507 = vmatprep.mubr.f32.mxu0 0.0
        %v3508 = vand.u32 %v2626, 4294901760
        %v3509 = vsub.f32 %v2626, %v3508
        %3510 = vmatmul.mubr.f32.gmra.mrb[0].mxu0 %v3509
        %v3511 = vpop.f32.mrb[0].mxu0
        %v3512 = vadd.f32 %v3234, %v3511
        %v3513 = vpop.f32.mrb[0].mxu0
        %3514 = vmatprep.mubr.f32.mxu0 0.0
        %v3515 = vand.u32 %v2629, 4294901760
        %v3516 = vsub.f32 %v2629, %v3515
        %3517 = vmatmul.mubr.f32.gmra.mrb[0].mxu0 %v3516
        %v3518 = vpop.f32.mrb[0].mxu0
        %v3519 = vadd.f32 %v3240, %v3518
        %v3520 = vpop.f32.mrb[0].mxu0
        %3521 = vmatprep.mubr.f32.mxu0 0.0
        %v3522 = vand.u32 %v2632, 4294901760
        %v3523 = vsub.f32 %v2632, %v3522
        %3524 = vmatmul.mubr.f32.gmra.mrb[0].mxu0 %v3523
        %v3525 = vpop.f32.mrb[0].mxu0
        %v3526 = vadd.f32 %v3246, %v3525
        %v3527 = vpop.f32.mrb[0].mxu0
        %3528 = vmatprep.mubr.f32.mxu0 0.0
        %v3529 = vand.u32 %v2635, 4294901760
        %v3530 = vsub.f32 %v2635, %v3529
        %3531 = vmatmul.mubr.f32.gmra.mrb[0].mxu0 %v3530
        %v3532 = vpop.f32.mrb[0].mxu0
        %v3533 = vadd.f32 %v3252, %v3532
        %v3534 = vpop.f32.mrb[0].mxu0
        %3535 = vmatprep.mubr.f32.mxu0 0.0
        %v3536 = vand.u32 %v2638, 4294901760
        %v3537 = vsub.f32 %v2638, %v3536
        %3538 = vmatmul.mubr.f32.gmra.mrb[0].mxu0 %v3537
        %v3539 = vpop.f32.mrb[0].mxu0
        %v3540 = vadd.f32 %v3258, %v3539
        %v3541 = vpop.f32.mrb[0].mxu0
        %3542 = vmatprep.mubr.f32.mxu0 0.0
        %v3543 = vand.u32 %v2641, 4294901760
        %v3544 = vsub.f32 %v2641, %v3543
        %3545 = vmatmul.mubr.f32.gmra.mrb[0].mxu0 %v3544
        %v3546 = vpop.f32.mrb[0].mxu0
        %v3547 = vadd.f32 %v3264, %v3546
        %v3548 = vpop.f32.mrb[0].mxu0
        %3549 = vmatprep.mubr.f32.mxu0 0.0
        %v3550 = vand.u32 %v2644, 4294901760
        %v3551 = vsub.f32 %v2644, %v3550
        %3552 = vmatmul.mubr.f32.gmra.mrb[0].mxu0 %v3551
        %v3553 = vpop.f32.mrb[0].mxu0
        %v3554 = vadd.f32 %v3270, %v3553
        %v3555 = vpop.f32.mrb[0].mxu0
        %3556 = vmatprep.mubr.f32.mxu0 0.0
        %v3557 = vand.u32 %v2647, 4294901760
        %v3558 = vsub.f32 %v2647, %v3557
        %3559 = vmatmul.mubr.f32.gmra.mrb[0].mxu0 %v3558
        %v3560 = vpop.f32.mrb[0].mxu0
        %v3561 = vadd.f32 %v3276, %v3560
        %v3562 = vpop.f32.mrb[0].mxu0
        %3563 = vmatprep.mubr.f32.mxu0 0.0
        %v3564 = vand.u32 %v2650, 4294901760
        %v3565 = vsub.f32 %v2650, %v3564
        %3566 = vmatmul.mubr.f32.gmra.mrb[0].mxu0 %v3565
        %v3567 = vpop.f32.mrb[0].mxu0
        %v3568 = vadd.f32 %v3282, %v3567
        %v3569 = vpop.f32.mrb[0].mxu0
        %3570 = vmatprep.mubr.f32.mxu0 0.0
        %v3571 = vand.u32 %v2653, 4294901760
        %v3572 = vsub.f32 %v2653, %v3571
        %3573 = vmatmul.mubr.f32.gmra.mrb[0].mxu0 %v3572
        %v3574 = vpop.f32.mrb[0].mxu0
        %v3575 = vadd.f32 %v3288, %v3574
        %v3576 = vpop.f32.mrb[0].mxu0
        %3577 = vmatprep.mubr.f32.mxu0 0.0
        %v3578 = vand.u32 %v2656, 4294901760
        %v3579 = vsub.f32 %v2656, %v3578
        %3580 = vmatmul.mubr.f32.gmra.mrb[0].mxu0 %v3579
        %v3581 = vpop.f32.mrb[0].mxu0
        %v3582 = vadd.f32 %v3294, %v3581
        %v3583 = vpop.f32.mrb[0].mxu0
        %3584 = vmatprep.mubr.f32.mxu0 0.0
        %v3585 = vand.u32 %v2659, 4294901760
        %v3586 = vsub.f32 %v2659, %v3585
        %3587 = vmatmul.mubr.f32.gmra.mrb[0].mxu0 %v3586
        %v3588 = vpop.f32.mrb[0].mxu0
        %v3589 = vadd.f32 %v3300, %v3588
        %v3590 = vpop.f32.mrb[0].mxu0
        %3591 = vmatprep.mubr.f32.mxu0 0.0
        %v3592 = vand.u32 %v2662, 4294901760
        %v3593 = vsub.f32 %v2662, %v3592
        %3594 = vmatmul.mubr.f32.gmra.mrb[0].mxu0 %v3593
        %v3595 = vpop.f32.mrb[0].mxu0
        %v3596 = vadd.f32 %v3306, %v3595
        %v3597 = vpop.f32.mrb[0].mxu0
        %3598 = vmatprep.mubr.f32.mxu0 0.0
        %v3599 = vand.u32 %v2665, 4294901760
        %v3600 = vsub.f32 %v2665, %v3599
        %3601 = vmatmul.mubr.f32.gmra.mrb[0].mxu0 %v3600
        %v3602 = vpop.f32.mrb[0].mxu0
        %v3603 = vadd.f32 %v3312, %v3602
        %v3604 = vpop.f32.mrb[0].mxu0
        %3605 = vmatprep.mubr.f32.mxu0 0.0
        %v3606 = vand.u32 %v2668, 4294901760
        %v3607 = vsub.f32 %v2668, %v3606
        %3608 = vmatmul.mubr.f32.gmra.mrb[0].mxu0 %v3607
        %v3609 = vpop.f32.mrb[0].mxu0
        %v3610 = vadd.f32 %v3318, %v3609
        %v3611 = vpop.f32.mrb[0].mxu0
        %3612 = vmatprep.mubr.f32.mxu0 0.0
        %v3613 = vand.u32 %v2671, 4294901760
        %v3614 = vsub.f32 %v2671, %v3613
        %3615 = vmatmul.mubr.f32.gmra.mrb[0].mxu0 %v3614
        %v3616 = vpop.f32.mrb[0].mxu0
        %v3617 = vadd.f32 %v3324, %v3616
        %v3618 = vpop.f32.mrb[0].mxu0
        %3619 = vmatprep.mubr.f32.mxu0 0.0
        %v3620 = vand.u32 %v2674, 4294901760
        %v3621 = vsub.f32 %v2674, %v3620
        %3622 = vmatmul.mubr.f32.gmra.mrb[0].mxu0 %v3621
        %v3623 = vpop.f32.mrb[0].mxu0
        %v3624 = vadd.f32 %v3330, %v3623
        %v3625 = vpop.f32.mrb[0].mxu0
        %3626 = vmatprep.mubr.f32.mxu0 0.0
        %v3627 = vand.u32 %v2677, 4294901760
        %v3628 = vsub.f32 %v2677, %v3627
        %3629 = vmatmul.mubr.f32.gmra.mrb[0].mxu0 %v3628
        %v3630 = vpop.f32.mrb[0].mxu0
        %v3631 = vadd.f32 %v3336, %v3630
        %v3632 = vpop.f32.mrb[0].mxu0
        %3633 = vmatprep.mubr.f32.mxu0 0.0
        %v3634 = vand.u32 %v2680, 4294901760
        %v3635 = vsub.f32 %v2680, %v3634
        %3636 = vmatmul.mubr.f32.gmra.mrb[0].mxu0 %v3635
        %v3637 = vpop.f32.mrb[0].mxu0
        %v3638 = vadd.f32 %v3342, %v3637
        %v3639 = vpop.f32.mrb[0].mxu0
        %3640 = vmatprep.mubr.f32.mxu0 0.0
        %v3641 = vand.u32 %v2683, 4294901760
        %v3642 = vsub.f32 %v2683, %v3641
        %3643 = vmatmul.mubr.f32.gmra.mrb[0].mxu0 %v3642
        %v3644 = vpop.f32.mrb[0].mxu0
        %v3645 = vadd.f32 %v3348, %v3644
        %v3646 = vpop.f32.mrb[0].mxu0
        %3647 = vmatprep.mubr.f32.mxu0 0.0
        %v3648 = vand.u32 %v2686, 4294901760
        %v3649 = vsub.f32 %v2686, %v3648
        %3650 = vmatmul.mubr.f32.gmra.mrb[0].mxu0 %v3649
        %v3651 = vpop.f32.mrb[0].mxu0
        %v3652 = vadd.f32 %v3354, %v3651
        %v3653 = vpop.f32.mrb[0].mxu0
        %3654 = vmatprep.mubr.f32.mxu0 0.0
        %v3655 = vand.u32 %v2689, 4294901760
        %v3656 = vsub.f32 %v2689, %v3655
        %3657 = vmatmul.mubr.f32.gmra.mrb[0].mxu0 %v3656
        %v3658 = vpop.f32.mrb[0].mxu0
        %v3659 = vadd.f32 %v3360, %v3658
        %v3660 = vpop.f32.mrb[0].mxu0
        %3661 = vmatprep.mubr.f32.mxu0 0.0
        %v3662 = vand.u32 %v2692, 4294901760
        %v3663 = vsub.f32 %v2692, %v3662
        %3664 = vmatmul.mubr.f32.gmra.mrb[0].mxu0 %v3663
        %v3665 = vpop.f32.mrb[0].mxu0
        %v3666 = vadd.f32 %v3366, %v3665
        %v3667 = vpop.f32.mrb[0].mxu0
        %3668 = vmatprep.mubr.f32.mxu0 0.0
        %v3669 = vand.u32 %v2695, 4294901760
        %v3670 = vsub.f32 %v2695, %v3669
        %3671 = vmatmul.mubr.f32.gmra.mrb[0].mxu0 %v3670
        %v3672 = vpop.f32.mrb[0].mxu0
        %v3673 = vadd.f32 %v3372, %v3672
        %v3674 = vpop.f32.mrb[0].mxu0
        %3675 = vmatprep.mubr.f32.mxu0 0.0
        %v3676 = vand.u32 %v2698, 4294901760
        %v3677 = vsub.f32 %v2698, %v3676
        %3678 = vmatmul.mubr.f32.gmra.mrb[0].mxu0 %v3677
        %v3679 = vpop.f32.mrb[0].mxu0
        %v3680 = vadd.f32 %v3378, %v3679
        %v3681 = vpop.f32.mrb[0].mxu0
        %3682 = vmatprep.mubr.f32.mxu0 0.0
        %v3683 = vand.u32 %v2701, 4294901760
        %v3684 = vsub.f32 %v2701, %v3683
        %3685 = vmatmul.mubr.f32.gmra.mrb[0].mxu0 %v3684
        %v3686 = vpop.f32.mrb[0].mxu0
        %v3687 = vadd.f32 %v3384, %v3686
        %v3688 = vpop.f32.mrb[0].mxu0
        %3689 = vmatprep.mubr.f32.mxu0 0.0
        %v3690 = vand.u32 %v2704, 4294901760
        %v3691 = vsub.f32 %v2704, %v3690
        %3692 = vmatmul.mubr.f32.gmra.mrb[0].mxu0 %v3691
        %v3693 = vpop.f32.mrb[0].mxu0
        %v3694 = vadd.f32 %v3390, %v3693
        %v3695 = vpop.f32.mrb[0].mxu0
        %3696 = vmatprep.mubr.f32.mxu0 0.0
        %v3697 = vand.u32 %v2707, 4294901760
        %v3698 = vsub.f32 %v2707, %v3697
        %3699 = vmatmul.mubr.f32.gmra.mrb[0].mxu0 %v3698
        %v3700 = vpop.f32.mrb[0].mxu0
        %v3701 = vadd.f32 %v3396, %v3700
        %v3702 = vpop.f32.mrb[0].mxu0
        %3703 = vdwg.mxu0
        %3704 = vmatprep.subr.mxu0 0.0
        %v3705 = vand.u32 %v2604, 4294901760
        %3706 = vmatpush1.msra.mxu0 %v3705
        %3707 = vmatprep.subr.mxu0 0.0
        %v3708 = vand.u32 %v2605, 4294901760
        %3709 = vmatpush1.msra.mxu0 %v3708
        %3710 = vmatprep.subr.mxu0 0.0
        %v3711 = vand.u32 %v2606, 4294901760
        %3712 = vmatpush1.msra.mxu0 %v3711
        %3713 = vmatprep.subr.mxu0 0.0
        %v3714 = vand.u32 %v2607, 4294901760
        %3715 = vmatpush1.msra.mxu0 %v3714
        %3716 = vmatprep.subr.mxu0 0.0
        %v3717 = vand.u32 %v2608, 4294901760
        %3718 = vmatpush1.msra.mxu0 %v3717
        %3719 = vmatprep.subr.mxu0 0.0
        %v3720 = vand.u32 %v2609, 4294901760
        %3721 = vmatpush1.msra.mxu0 %v3720
        %3722 = vmatprep.subr.mxu0 0.0
        %v3723 = vand.u32 %v2610, 4294901760
        %3724 = vmatpush1.msra.mxu0 %v3723
        %3725 = vmatprep.subr.mxu0 0.0
        %v3726 = vand.u32 %v2611, 4294901760
        %3727 = vmatpush1.msra.mxu0 %v3726
        %3728 = vmatprep.subr.mxu0 0.0
        %3729 = vmatpush1.msra.mxu0 0.0
        %3730 = vmatprep.subr.mxu0 0.0
        %3731 = vmatpush1.msra.mxu0 0.0
        %3732 = vmatprep.subr.mxu0 0.0
        %3733 = vmatpush1.msra.mxu0 0.0
        %3734 = vmatprep.subr.mxu0 0.0
        %3735 = vmatpush1.msra.mxu0 0.0
        %3736 = vmatprep.subr.mxu0 0.0
        %3737 = vmatpush1.msra.mxu0 0.0
        %3738 = vmatprep.subr.mxu0 0.0
        %3739 = vmatpush1.msra.mxu0 0.0
        %3740 = vmatprep.subr.mxu0 0.0
        %3741 = vmatpush1.msra.mxu0 0.0
        %3742 = vmatprep.subr.mxu0 0.0
        %3743 = vmatpush1.msra.mxu0 0.0
        %3744 = vmatprep.subr.mxu0 0.0
        %3745 = vmatpush1.msra.mxu0 0.0
        %3746 = vmatprep.subr.mxu0 0.0
        %3747 = vmatpush1.msra.mxu0 0.0
        %3748 = vmatprep.subr.mxu0 0.0
        %3749 = vmatpush1.msra.mxu0 0.0
        %3750 = vmatprep.subr.mxu0 0.0
        %3751 = vmatpush1.msra.mxu0 0.0
        %3752 = vmatprep.subr.mxu0 0.0
        %3753 = vmatpush1.msra.mxu0 0.0
        %3754 = vmatprep.subr.mxu0 0.0
        %3755 = vmatpush1.msra.mxu0 0.0
        %3756 = vmatprep.subr.mxu0 0.0
        %3757 = vmatpush1.msra.mxu0 0.0
        %3758 = vmatprep.subr.mxu0 0.0
        %3759 = vmatpush1.msra.mxu0 0.0
        %3760 = vmatprep.subr.mxu0 0.0
        %3761 = vmatpush1.msra.mxu0 0.0
        %3762 = vmatprep.subr.mxu0 0.0
        %3763 = vmatpush1.msra.mxu0 0.0
        %3764 = vmatprep.subr.mxu0 0.0
        %3765 = vmatpush1.msra.mxu0 0.0
        %3766 = vmatprep.subr.mxu0 0.0
        %3767 = vmatpush1.msra.mxu0 0.0
        %3768 = vmatprep.subr.mxu0 0.0
        %3769 = vmatpush1.msra.mxu0 0.0
        %3770 = vmatprep.subr.mxu0 0.0
        %3771 = vmatpush1.msra.mxu0 0.0
        %3772 = vmatprep.subr.mxu0 0.0
        %3773 = vmatpush1.msra.mxu0 0.0
        %3774 = vmatprep.subr.mxu0 0.0
        %3775 = vmatpush1.msra.mxu0 0.0
        %3776 = vmatprep.mubr.f32.mxu0 0.0
        %v3777 = vand.u32 %v2614, 4294901760
        %v3778 = vsub.f32 %v2614, %v3777
        %v3779 = vand.u32 %v3778, 4294901760
        %3780 = vmatmul.mubr.f32.gmra.mrb[0].mxu0 %v3779
        %v3781 = vpop.f32.mrb[0].mxu0
        %v3782 = vadd.f32 %v3484, %v3781
        %v3783 = vpop.f32.mrb[0].mxu0
        %3784 = vmatprep.mubr.f32.mxu0 0.0
        %v3785 = vand.u32 %v2617, 4294901760
        %v3786 = vsub.f32 %v2617, %v3785
        %v3787 = vand.u32 %v3786, 4294901760
        %3788 = vmatmul.mubr.f32.gmra.mrb[0].mxu0 %v3787
        %v3789 = vpop.f32.mrb[0].mxu0
        %v3790 = vadd.f32 %v3491, %v3789
        %v3791 = vpop.f32.mrb[0].mxu0
        %3792 = vmatprep.mubr.f32.mxu0 0.0
        %v3793 = vand.u32 %v2620, 4294901760
        %v3794 = vsub.f32 %v2620, %v3793
        %v3795 = vand.u32 %v3794, 4294901760
        %3796 = vmatmul.mubr.f32.gmra.mrb[0].mxu0 %v3795
        %v3797 = vpop.f32.mrb[0].mxu0
        %v3798 = vadd.f32 %v3498, %v3797
        %v3799 = vpop.f32.mrb[0].mxu0
        %3800 = vmatprep.mubr.f32.mxu0 0.0
        %v3801 = vand.u32 %v2623, 4294901760
        %v3802 = vsub.f32 %v2623, %v3801
        %v3803 = vand.u32 %v3802, 4294901760
        %3804 = vmatmul.mubr.f32.gmra.mrb[0].mxu0 %v3803
        %v3805 = vpop.f32.mrb[0].mxu0
        %v3806 = vadd.f32 %v3505, %v3805
        %v3807 = vpop.f32.mrb[0].mxu0
        %3808 = vmatprep.mubr.f32.mxu0 0.0
        %v3809 = vand.u32 %v2626, 4294901760
        %v3810 = vsub.f32 %v2626, %v3809
        %v3811 = vand.u32 %v3810, 4294901760
        %3812 = vmatmul.mubr.f32.gmra.mrb[0].mxu0 %v3811
        %v3813 = vpop.f32.mrb[0].mxu0
        %v3814 = vadd.f32 %v3512, %v3813
        %v3815 = vpop.f32.mrb[0].mxu0
        %3816 = vmatprep.mubr.f32.mxu0 0.0
        %v3817 = vand.u32 %v2629, 4294901760
        %v3818 = vsub.f32 %v2629, %v3817
        %v3819 = vand.u32 %v3818, 4294901760
        %3820 = vmatmul.mubr.f32.gmra.mrb[0].mxu0 %v3819
        %v3821 = vpop.f32.mrb[0].mxu0
        %v3822 = vadd.f32 %v3519, %v3821
        %v3823 = vpop.f32.mrb[0].mxu0
        %3824 = vmatprep.mubr.f32.mxu0 0.0
        %v3825 = vand.u32 %v2632, 4294901760
        %v3826 = vsub.f32 %v2632, %v3825
        %v3827 = vand.u32 %v3826, 4294901760
        %3828 = vmatmul.mubr.f32.gmra.mrb[0].mxu0 %v3827
        %v3829 = vpop.f32.mrb[0].mxu0
        %v3830 = vadd.f32 %v3526, %v3829
        %v3831 = vpop.f32.mrb[0].mxu0
        %3832 = vmatprep.mubr.f32.mxu0 0.0
        %v3833 = vand.u32 %v2635, 4294901760
        %v3834 = vsub.f32 %v2635, %v3833
        %v3835 = vand.u32 %v3834, 4294901760
        %3836 = vmatmul.mubr.f32.gmra.mrb[0].mxu0 %v3835
        %v3837 = vpop.f32.mrb[0].mxu0
        %v3838 = vadd.f32 %v3533, %v3837
        %v3839 = vpop.f32.mrb[0].mxu0
        %3840 = vmatprep.mubr.f32.mxu0 0.0
        %v3841 = vand.u32 %v2638, 4294901760
        %v3842 = vsub.f32 %v2638, %v3841
        %v3843 = vand.u32 %v3842, 4294901760
        %3844 = vmatmul.mubr.f32.gmra.mrb[0].mxu0 %v3843
        %v3845 = vpop.f32.mrb[0].mxu0
        %v3846 = vadd.f32 %v3540, %v3845
        %v3847 = vpop.f32.mrb[0].mxu0
        %3848 = vmatprep.mubr.f32.mxu0 0.0
        %v3849 = vand.u32 %v2641, 4294901760
        %v3850 = vsub.f32 %v2641, %v3849
        %v3851 = vand.u32 %v3850, 4294901760
        %3852 = vmatmul.mubr.f32.gmra.mrb[0].mxu0 %v3851
        %v3853 = vpop.f32.mrb[0].mxu0
        %v3854 = vadd.f32 %v3547, %v3853
        %v3855 = vpop.f32.mrb[0].mxu0
        %3856 = vmatprep.mubr.f32.mxu0 0.0
        %v3857 = vand.u32 %v2644, 4294901760
        %v3858 = vsub.f32 %v2644, %v3857
        %v3859 = vand.u32 %v3858, 4294901760
        %3860 = vmatmul.mubr.f32.gmra.mrb[0].mxu0 %v3859
        %v3861 = vpop.f32.mrb[0].mxu0
        %v3862 = vadd.f32 %v3554, %v3861
        %v3863 = vpop.f32.mrb[0].mxu0
        %3864 = vmatprep.mubr.f32.mxu0 0.0
        %v3865 = vand.u32 %v2647, 4294901760
        %v3866 = vsub.f32 %v2647, %v3865
        %v3867 = vand.u32 %v3866, 4294901760
        %3868 = vmatmul.mubr.f32.gmra.mrb[0].mxu0 %v3867
        %v3869 = vpop.f32.mrb[0].mxu0
        %v3870 = vadd.f32 %v3561, %v3869
        %v3871 = vpop.f32.mrb[0].mxu0
        %3872 = vmatprep.mubr.f32.mxu0 0.0
        %v3873 = vand.u32 %v2650, 4294901760
        %v3874 = vsub.f32 %v2650, %v3873
        %v3875 = vand.u32 %v3874, 4294901760
        %3876 = vmatmul.mubr.f32.gmra.mrb[0].mxu0 %v3875
        %v3877 = vpop.f32.mrb[0].mxu0
        %v3878 = vadd.f32 %v3568, %v3877
        %v3879 = vpop.f32.mrb[0].mxu0
        %3880 = vmatprep.mubr.f32.mxu0 0.0
        %v3881 = vand.u32 %v2653, 4294901760
        %v3882 = vsub.f32 %v2653, %v3881
        %v3883 = vand.u32 %v3882, 4294901760
        %3884 = vmatmul.mubr.f32.gmra.mrb[0].mxu0 %v3883
        %v3885 = vpop.f32.mrb[0].mxu0
        %v3886 = vadd.f32 %v3575, %v3885
        %v3887 = vpop.f32.mrb[0].mxu0
        %3888 = vmatprep.mubr.f32.mxu0 0.0
        %v3889 = vand.u32 %v2656, 4294901760
        %v3890 = vsub.f32 %v2656, %v3889
        %v3891 = vand.u32 %v3890, 4294901760
        %3892 = vmatmul.mubr.f32.gmra.mrb[0].mxu0 %v3891
        %v3893 = vpop.f32.mrb[0].mxu0
        %v3894 = vadd.f32 %v3582, %v3893
        %v3895 = vpop.f32.mrb[0].mxu0
        %3896 = vmatprep.mubr.f32.mxu0 0.0
        %v3897 = vand.u32 %v2659, 4294901760
        %v3898 = vsub.f32 %v2659, %v3897
        %v3899 = vand.u32 %v3898, 4294901760
        %3900 = vmatmul.mubr.f32.gmra.mrb[0].mxu0 %v3899
        %v3901 = vpop.f32.mrb[0].mxu0
        %v3902 = vadd.f32 %v3589, %v3901
        %v3903 = vpop.f32.mrb[0].mxu0
        %3904 = vmatprep.mubr.f32.mxu0 0.0
        %v3905 = vand.u32 %v2662, 4294901760
        %v3906 = vsub.f32 %v2662, %v3905
        %v3907 = vand.u32 %v3906, 4294901760
        %3908 = vmatmul.mubr.f32.gmra.mrb[0].mxu0 %v3907
        %v3909 = vpop.f32.mrb[0].mxu0
        %v3910 = vadd.f32 %v3596, %v3909
        %v3911 = vpop.f32.mrb[0].mxu0
        %3912 = vmatprep.mubr.f32.mxu0 0.0
        %v3913 = vand.u32 %v2665, 4294901760
        %v3914 = vsub.f32 %v2665, %v3913
        %v3915 = vand.u32 %v3914, 4294901760
        %3916 = vmatmul.mubr.f32.gmra.mrb[0].mxu0 %v3915
        %v3917 = vpop.f32.mrb[0].mxu0
        %v3918 = vadd.f32 %v3603, %v3917
        %v3919 = vpop.f32.mrb[0].mxu0
        %3920 = vmatprep.mubr.f32.mxu0 0.0
        %v3921 = vand.u32 %v2668, 4294901760
        %v3922 = vsub.f32 %v2668, %v3921
        %v3923 = vand.u32 %v3922, 4294901760
        %3924 = vmatmul.mubr.f32.gmra.mrb[0].mxu0 %v3923
        %v3925 = vpop.f32.mrb[0].mxu0
        %v3926 = vadd.f32 %v3610, %v3925
        %v3927 = vpop.f32.mrb[0].mxu0
        %3928 = vmatprep.mubr.f32.mxu0 0.0
        %v3929 = vand.u32 %v2671, 4294901760
        %v3930 = vsub.f32 %v2671, %v3929
        %v3931 = vand.u32 %v3930, 4294901760
        %3932 = vmatmul.mubr.f32.gmra.mrb[0].mxu0 %v3931
        %v3933 = vpop.f32.mrb[0].mxu0
        %v3934 = vadd.f32 %v3617, %v3933
        %v3935 = vpop.f32.mrb[0].mxu0
        %3936 = vmatprep.mubr.f32.mxu0 0.0
        %v3937 = vand.u32 %v2674, 4294901760
        %v3938 = vsub.f32 %v2674, %v3937
        %v3939 = vand.u32 %v3938, 4294901760
        %3940 = vmatmul.mubr.f32.gmra.mrb[0].mxu0 %v3939
        %v3941 = vpop.f32.mrb[0].mxu0
        %v3942 = vadd.f32 %v3624, %v3941
        %v3943 = vpop.f32.mrb[0].mxu0
        %3944 = vmatprep.mubr.f32.mxu0 0.0
        %v3945 = vand.u32 %v2677, 4294901760
        %v3946 = vsub.f32 %v2677, %v3945
        %v3947 = vand.u32 %v3946, 4294901760
        %3948 = vmatmul.mubr.f32.gmra.mrb[0].mxu0 %v3947
        %v3949 = vpop.f32.mrb[0].mxu0
        %v3950 = vadd.f32 %v3631, %v3949
        %v3951 = vpop.f32.mrb[0].mxu0
        %3952 = vmatprep.mubr.f32.mxu0 0.0
        %v3953 = vand.u32 %v2680, 4294901760
        %v3954 = vsub.f32 %v2680, %v3953
        %v3955 = vand.u32 %v3954, 4294901760
        %3956 = vmatmul.mubr.f32.gmra.mrb[0].mxu0 %v3955
        %v3957 = vpop.f32.mrb[0].mxu0
        %v3958 = vadd.f32 %v3638, %v3957
        %v3959 = vpop.f32.mrb[0].mxu0
        %3960 = vmatprep.mubr.f32.mxu0 0.0
        %v3961 = vand.u32 %v2683, 4294901760
        %v3962 = vsub.f32 %v2683, %v3961
        %v3963 = vand.u32 %v3962, 4294901760
        %3964 = vmatmul.mubr.f32.gmra.mrb[0].mxu0 %v3963
        %v3965 = vpop.f32.mrb[0].mxu0
        %v3966 = vadd.f32 %v3645, %v3965
        %v3967 = vpop.f32.mrb[0].mxu0
        %3968 = vmatprep.mubr.f32.mxu0 0.0
        %v3969 = vand.u32 %v2686, 4294901760
        %v3970 = vsub.f32 %v2686, %v3969
        %v3971 = vand.u32 %v3970, 4294901760
        %3972 = vmatmul.mubr.f32.gmra.mrb[0].mxu0 %v3971
        %v3973 = vpop.f32.mrb[0].mxu0
        %v3974 = vadd.f32 %v3652, %v3973
        %v3975 = vpop.f32.mrb[0].mxu0
        %3976 = vmatprep.mubr.f32.mxu0 0.0
        %v3977 = vand.u32 %v2689, 4294901760
        %v3978 = vsub.f32 %v2689, %v3977
        %v3979 = vand.u32 %v3978, 4294901760
        %3980 = vmatmul.mubr.f32.gmra.mrb[0].mxu0 %v3979
        %v3981 = vpop.f32.mrb[0].mxu0
        %v3982 = vadd.f32 %v3659, %v3981
        %v3983 = vpop.f32.mrb[0].mxu0
        %3984 = vmatprep.mubr.f32.mxu0 0.0
        %v3985 = vand.u32 %v2692, 4294901760
        %v3986 = vsub.f32 %v2692, %v3985
        %v3987 = vand.u32 %v3986, 4294901760
        %3988 = vmatmul.mubr.f32.gmra.mrb[0].mxu0 %v3987
        %v3989 = vpop.f32.mrb[0].mxu0
        %v3990 = vadd.f32 %v3666, %v3989
        %v3991 = vpop.f32.mrb[0].mxu0
        %3992 = vmatprep.mubr.f32.mxu0 0.0
        %v3993 = vand.u32 %v2695, 4294901760
        %v3994 = vsub.f32 %v2695, %v3993
        %v3995 = vand.u32 %v3994, 4294901760
        %3996 = vmatmul.mubr.f32.gmra.mrb[0].mxu0 %v3995
        %v3997 = vpop.f32.mrb[0].mxu0
        %v3998 = vadd.f32 %v3673, %v3997
        %v3999 = vpop.f32.mrb[0].mxu0
        %4000 = vmatprep.mubr.f32.mxu0 0.0
        %v4001 = vand.u32 %v2698, 4294901760
        %v4002 = vsub.f32 %v2698, %v4001
        %v4003 = vand.u32 %v4002, 4294901760
        %4004 = vmatmul.mubr.f32.gmra.mrb[0].mxu0 %v4003
        %v4005 = vpop.f32.mrb[0].mxu0
        %v4006 = vadd.f32 %v3680, %v4005
        %v4007 = vpop.f32.mrb[0].mxu0
        %4008 = vmatprep.mubr.f32.mxu0 0.0
        %v4009 = vand.u32 %v2701, 4294901760
        %v4010 = vsub.f32 %v2701, %v4009
        %v4011 = vand.u32 %v4010, 4294901760
        %4012 = vmatmul.mubr.f32.gmra.mrb[0].mxu0 %v4011
        %v4013 = vpop.f32.mrb[0].mxu0
        %v4014 = vadd.f32 %v3687, %v4013
        %v4015 = vpop.f32.mrb[0].mxu0
        %4016 = vmatprep.mubr.f32.mxu0 0.0
        %v4017 = vand.u32 %v2704, 4294901760
        %v4018 = vsub.f32 %v2704, %v4017
        %v4019 = vand.u32 %v4018, 4294901760
        %4020 = vmatmul.mubr.f32.gmra.mrb[0].mxu0 %v4019
        %v4021 = vpop.f32.mrb[0].mxu0
        %v4022 = vadd.f32 %v3694, %v4021
        %v4023 = vpop.f32.mrb[0].mxu0
        %4024 = vmatprep.mubr.f32.mxu0 0.0
        %v4025 = vand.u32 %v2707, 4294901760
        %v4026 = vsub.f32 %v2707, %v4025
        %v4027 = vand.u32 %v4026, 4294901760
        %4028 = vmatmul.mubr.f32.gmra.mrb[0].mxu0 %v4027
        %v4029 = vpop.f32.mrb[0].mxu0
        %v4030 = vadd.f32 %v3701, %v4029
        %v4031 = vpop.f32.mrb[0].mxu0
        %4032 = vdwg.mxu0
        %4033 = vmatprep.subr.mxu0 0.0
        %v4034 = vand.u32 %v2604, 4294901760
        %v4035 = vsub.f32 %v2604, %v4034
        %v4036 = vand.u32 %v4035, 4294901760
        %4037 = vmatpush1.msra.mxu0 %v4036
        %4038 = vmatprep.subr.mxu0 0.0
        %v4039 = vand.u32 %v2605, 4294901760
        %v4040 = vsub.f32 %v2605, %v4039
        %v4041 = vand.u32 %v4040, 4294901760
        %4042 = vmatpush1.msra.mxu0 %v4041
        %4043 = vmatprep.subr.mxu0 0.0
        %v4044 = vand.u32 %v2606, 4294901760
        %v4045 = vsub.f32 %v2606, %v4044
        %v4046 = vand.u32 %v4045, 4294901760
        %4047 = vmatpush1.msra.mxu0 %v4046
        %4048 = vmatprep.subr.mxu0 0.0
        %v4049 = vand.u32 %v2607, 4294901760
        %v4050 = vsub.f32 %v2607, %v4049
        %v4051 = vand.u32 %v4050, 4294901760
        %4052 = vmatpush1.msra.mxu0 %v4051
        %4053 = vmatprep.subr.mxu0 0.0
        %v4054 = vand.u32 %v2608, 4294901760
        %v4055 = vsub.f32 %v2608, %v4054
        %v4056 = vand.u32 %v4055, 4294901760
        %4057 = vmatpush1.msra.mxu0 %v4056
        %4058 = vmatprep.subr.mxu0 0.0
        %v4059 = vand.u32 %v2609, 4294901760
        %v4060 = vsub.f32 %v2609, %v4059
        %v4061 = vand.u32 %v4060, 4294901760
        %4062 = vmatpush1.msra.mxu0 %v4061
        %4063 = vmatprep.subr.mxu0 0.0
        %v4064 = vand.u32 %v2610, 4294901760
        %v4065 = vsub.f32 %v2610, %v4064
        %v4066 = vand.u32 %v4065, 4294901760
        %4067 = vmatpush1.msra.mxu0 %v4066
        %4068 = vmatprep.subr.mxu0 0.0
        %v4069 = vand.u32 %v2611, 4294901760
        %v4070 = vsub.f32 %v2611, %v4069
        %v4071 = vand.u32 %v4070, 4294901760
        %4072 = vmatpush1.msra.mxu0 %v4071
        %4073 = vmatprep.subr.mxu0 0.0
        %4074 = vmatpush1.msra.mxu0 0.0
        %4075 = vmatprep.subr.mxu0 0.0
        %4076 = vmatpush1.msra.mxu0 0.0
        %4077 = vmatprep.subr.mxu0 0.0
        %4078 = vmatpush1.msra.mxu0 0.0
        %4079 = vmatprep.subr.mxu0 0.0
        %4080 = vmatpush1.msra.mxu0 0.0
        %4081 = vmatprep.subr.mxu0 0.0
        %4082 = vmatpush1.msra.mxu0 0.0
        %4083 = vmatprep.subr.mxu0 0.0
        %4084 = vmatpush1.msra.mxu0 0.0
        %4085 = vmatprep.subr.mxu0 0.0
        %4086 = vmatpush1.msra.mxu0 0.0
        %4087 = vmatprep.subr.mxu0 0.0
        %4088 = vmatpush1.msra.mxu0 0.0
        %4089 = vmatprep.subr.mxu0 0.0
        %4090 = vmatpush1.msra.mxu0 0.0
        %4091 = vmatprep.subr.mxu0 0.0
        %4092 = vmatpush1.msra.mxu0 0.0
        %4093 = vmatprep.subr.mxu0 0.0
        %4094 = vmatpush1.msra.mxu0 0.0
        %4095 = vmatprep.subr.mxu0 0.0
        %4096 = vmatpush1.msra.mxu0 0.0
        %4097 = vmatprep.subr.mxu0 0.0
        %4098 = vmatpush1.msra.mxu0 0.0
        %4099 = vmatprep.subr.mxu0 0.0
        %4100 = vmatpush1.msra.mxu0 0.0
        %4101 = vmatprep.subr.mxu0 0.0
        %4102 = vmatpush1.msra.mxu0 0.0
        %4103 = vmatprep.subr.mxu0 0.0
        %4104 = vmatpush1.msra.mxu0 0.0
        %4105 = vmatprep.subr.mxu0 0.0
        %4106 = vmatpush1.msra.mxu0 0.0
        %4107 = vmatprep.subr.mxu0 0.0
        %4108 = vmatpush1.msra.mxu0 0.0
        %4109 = vmatprep.subr.mxu0 0.0
        %4110 = vmatpush1.msra.mxu0 0.0
        %4111 = vmatprep.subr.mxu0 0.0
        %4112 = vmatpush1.msra.mxu0 0.0
        %4113 = vmatprep.subr.mxu0 0.0
        %4114 = vmatpush1.msra.mxu0 0.0
        %4115 = vmatprep.subr.mxu0 0.0
        %4116 = vmatpush1.msra.mxu0 0.0
        %4117 = vmatprep.subr.mxu0 0.0
        %4118 = vmatpush1.msra.mxu0 0.0
        %4119 = vmatprep.subr.mxu0 0.0
        %4120 = vmatpush1.msra.mxu0 0.0
        %4121 = vmatprep.mubr.f32.mxu0 0.0
        %v4122 = vand.u32 %v2614, 4294901760
        %4123 = vmatmul.mubr.f32.gmra.mrb[0].mxu0 %v4122
        %v4124 = vpop.f32.mrb[0].mxu0
        %v4125 = vadd.f32 %v3782, %v4124
        %v4126 = vpop.f32.mrb[0].mxu0
        %4127 = vmatprep.mubr.f32.mxu0 0.0
        %v4128 = vand.u32 %v2617, 4294901760
        %4129 = vmatmul.mubr.f32.gmra.mrb[0].mxu0 %v4128
        %v4130 = vpop.f32.mrb[0].mxu0
        %v4131 = vadd.f32 %v3790, %v4130
        %v4132 = vpop.f32.mrb[0].mxu0
        %4133 = vmatprep.mubr.f32.mxu0 0.0
        %v4134 = vand.u32 %v2620, 4294901760
        %4135 = vmatmul.mubr.f32.gmra.mrb[0].mxu0 %v4134
        %v4136 = vpop.f32.mrb[0].mxu0
        %v4137 = vadd.f32 %v3798, %v4136
        %v4138 = vpop.f32.mrb[0].mxu0
        %4139 = vmatprep.mubr.f32.mxu0 0.0
        %v4140 = vand.u32 %v2623, 4294901760
        %4141 = vmatmul.mubr.f32.gmra.mrb[0].mxu0 %v4140
        %v4142 = vpop.f32.mrb[0].mxu0
        %v4143 = vadd.f32 %v3806, %v4142
        %v4144 = vpop.f32.mrb[0].mxu0
        %4145 = vmatprep.mubr.f32.mxu0 0.0
        %v4146 = vand.u32 %v2626, 4294901760
        %4147 = vmatmul.mubr.f32.gmra.mrb[0].mxu0 %v4146
        %v4148 = vpop.f32.mrb[0].mxu0
        %v4149 = vadd.f32 %v3814, %v4148
        %v4150 = vpop.f32.mrb[0].mxu0
        %4151 = vmatprep.mubr.f32.mxu0 0.0
        %v4152 = vand.u32 %v2629, 4294901760
        %4153 = vmatmul.mubr.f32.gmra.mrb[0].mxu0 %v4152
        %v4154 = vpop.f32.mrb[0].mxu0
        %v4155 = vadd.f32 %v3822, %v4154
        %v4156 = vpop.f32.mrb[0].mxu0
        %4157 = vmatprep.mubr.f32.mxu0 0.0
        %v4158 = vand.u32 %v2632, 4294901760
        %4159 = vmatmul.mubr.f32.gmra.mrb[0].mxu0 %v4158
        %v4160 = vpop.f32.mrb[0].mxu0
        %v4161 = vadd.f32 %v3830, %v4160
        %v4162 = vpop.f32.mrb[0].mxu0
        %4163 = vmatprep.mubr.f32.mxu0 0.0
        %v4164 = vand.u32 %v2635, 4294901760
        %4165 = vmatmul.mubr.f32.gmra.mrb[0].mxu0 %v4164
        %v4166 = vpop.f32.mrb[0].mxu0
        %v4167 = vadd.f32 %v3838, %v4166
        %v4168 = vpop.f32.mrb[0].mxu0
        %4169 = vmatprep.mubr.f32.mxu0 0.0
        %v4170 = vand.u32 %v2638, 4294901760
        %4171 = vmatmul.mubr.f32.gmra.mrb[0].mxu0 %v4170
        %v4172 = vpop.f32.mrb[0].mxu0
        %v4173 = vadd.f32 %v3846, %v4172
        %v4174 = vpop.f32.mrb[0].mxu0
        %4175 = vmatprep.mubr.f32.mxu0 0.0
        %v4176 = vand.u32 %v2641, 4294901760
        %4177 = vmatmul.mubr.f32.gmra.mrb[0].mxu0 %v4176
        %v4178 = vpop.f32.mrb[0].mxu0
        %v4179 = vadd.f32 %v3854, %v4178
        %v4180 = vpop.f32.mrb[0].mxu0
        %4181 = vmatprep.mubr.f32.mxu0 0.0
        %v4182 = vand.u32 %v2644, 4294901760
        %4183 = vmatmul.mubr.f32.gmra.mrb[0].mxu0 %v4182
        %v4184 = vpop.f32.mrb[0].mxu0
        %v4185 = vadd.f32 %v3862, %v4184
        %v4186 = vpop.f32.mrb[0].mxu0
        %4187 = vmatprep.mubr.f32.mxu0 0.0
        %v4188 = vand.u32 %v2647, 4294901760
        %4189 = vmatmul.mubr.f32.gmra.mrb[0].mxu0 %v4188
        %v4190 = vpop.f32.mrb[0].mxu0
        %v4191 = vadd.f32 %v3870, %v4190
        %v4192 = vpop.f32.mrb[0].mxu0
        %4193 = vmatprep.mubr.f32.mxu0 0.0
        %v4194 = vand.u32 %v2650, 4294901760
        %4195 = vmatmul.mubr.f32.gmra.mrb[0].mxu0 %v4194
        %v4196 = vpop.f32.mrb[0].mxu0
        %v4197 = vadd.f32 %v3878, %v4196
        %v4198 = vpop.f32.mrb[0].mxu0
        %4199 = vmatprep.mubr.f32.mxu0 0.0
        %v4200 = vand.u32 %v2653, 4294901760
        %4201 = vmatmul.mubr.f32.gmra.mrb[0].mxu0 %v4200
        %v4202 = vpop.f32.mrb[0].mxu0
        %v4203 = vadd.f32 %v3886, %v4202
        %v4204 = vpop.f32.mrb[0].mxu0
        %4205 = vmatprep.mubr.f32.mxu0 0.0
        %v4206 = vand.u32 %v2656, 4294901760
        %4207 = vmatmul.mubr.f32.gmra.mrb[0].mxu0 %v4206
        %v4208 = vpop.f32.mrb[0].mxu0
        %v4209 = vadd.f32 %v3894, %v4208
        %v4210 = vpop.f32.mrb[0].mxu0
        %4211 = vmatprep.mubr.f32.mxu0 0.0
        %v4212 = vand.u32 %v2659, 4294901760
        %4213 = vmatmul.mubr.f32.gmra.mrb[0].mxu0 %v4212
        %v4214 = vpop.f32.mrb[0].mxu0
        %v4215 = vadd.f32 %v3902, %v4214
        %v4216 = vpop.f32.mrb[0].mxu0
        %4217 = vmatprep.mubr.f32.mxu0 0.0
        %v4218 = vand.u32 %v2662, 4294901760
        %4219 = vmatmul.mubr.f32.gmra.mrb[0].mxu0 %v4218
        %v4220 = vpop.f32.mrb[0].mxu0
        %v4221 = vadd.f32 %v3910, %v4220
        %v4222 = vpop.f32.mrb[0].mxu0
        %4223 = vmatprep.mubr.f32.mxu0 0.0
        %v4224 = vand.u32 %v2665, 4294901760
        %4225 = vmatmul.mubr.f32.gmra.mrb[0].mxu0 %v4224
        %v4226 = vpop.f32.mrb[0].mxu0
        %v4227 = vadd.f32 %v3918, %v4226
        %v4228 = vpop.f32.mrb[0].mxu0
        %4229 = vmatprep.mubr.f32.mxu0 0.0
        %v4230 = vand.u32 %v2668, 4294901760
        %4231 = vmatmul.mubr.f32.gmra.mrb[0].mxu0 %v4230
        %v4232 = vpop.f32.mrb[0].mxu0
        %v4233 = vadd.f32 %v3926, %v4232
        %v4234 = vpop.f32.mrb[0].mxu0
        %4235 = vmatprep.mubr.f32.mxu0 0.0
        %v4236 = vand.u32 %v2671, 4294901760
        %4237 = vmatmul.mubr.f32.gmra.mrb[0].mxu0 %v4236
        %v4238 = vpop.f32.mrb[0].mxu0
        %v4239 = vadd.f32 %v3934, %v4238
        %v4240 = vpop.f32.mrb[0].mxu0
        %4241 = vmatprep.mubr.f32.mxu0 0.0
        %v4242 = vand.u32 %v2674, 4294901760
        %4243 = vmatmul.mubr.f32.gmra.mrb[0].mxu0 %v4242
        %v4244 = vpop.f32.mrb[0].mxu0
        %v4245 = vadd.f32 %v3942, %v4244
        %v4246 = vpop.f32.mrb[0].mxu0
        %4247 = vmatprep.mubr.f32.mxu0 0.0
        %v4248 = vand.u32 %v2677, 4294901760
        %4249 = vmatmul.mubr.f32.gmra.mrb[0].mxu0 %v4248
        %v4250 = vpop.f32.mrb[0].mxu0
        %v4251 = vadd.f32 %v3950, %v4250
        %v4252 = vpop.f32.mrb[0].mxu0
        %4253 = vmatprep.mubr.f32.mxu0 0.0
        %v4254 = vand.u32 %v2680, 4294901760
        %4255 = vmatmul.mubr.f32.gmra.mrb[0].mxu0 %v4254
        %v4256 = vpop.f32.mrb[0].mxu0
        %v4257 = vadd.f32 %v3958, %v4256
        %v4258 = vpop.f32.mrb[0].mxu0
        %4259 = vmatprep.mubr.f32.mxu0 0.0
        %v4260 = vand.u32 %v2683, 4294901760
        %4261 = vmatmul.mubr.f32.gmra.mrb[0].mxu0 %v4260
        %v4262 = vpop.f32.mrb[0].mxu0
        %v4263 = vadd.f32 %v3966, %v4262
        %v4264 = vpop.f32.mrb[0].mxu0
        %4265 = vmatprep.mubr.f32.mxu0 0.0
        %v4266 = vand.u32 %v2686, 4294901760
        %4267 = vmatmul.mubr.f32.gmra.mrb[0].mxu0 %v4266
        %v4268 = vpop.f32.mrb[0].mxu0
        %v4269 = vadd.f32 %v3974, %v4268
        %v4270 = vpop.f32.mrb[0].mxu0
        %4271 = vmatprep.mubr.f32.mxu0 0.0
        %v4272 = vand.u32 %v2689, 4294901760
        %4273 = vmatmul.mubr.f32.gmra.mrb[0].mxu0 %v4272
        %v4274 = vpop.f32.mrb[0].mxu0
        %v4275 = vadd.f32 %v3982, %v4274
        %v4276 = vpop.f32.mrb[0].mxu0
        %4277 = vmatprep.mubr.f32.mxu0 0.0
        %v4278 = vand.u32 %v2692, 4294901760
        %4279 = vmatmul.mubr.f32.gmra.mrb[0].mxu0 %v4278
        %v4280 = vpop.f32.mrb[0].mxu0
        %v4281 = vadd.f32 %v3990, %v4280
        %v4282 = vpop.f32.mrb[0].mxu0
        %4283 = vmatprep.mubr.f32.mxu0 0.0
        %v4284 = vand.u32 %v2695, 4294901760
        %4285 = vmatmul.mubr.f32.gmra.mrb[0].mxu0 %v4284
        %v4286 = vpop.f32.mrb[0].mxu0
        %v4287 = vadd.f32 %v3998, %v4286
        %v4288 = vpop.f32.mrb[0].mxu0
        %4289 = vmatprep.mubr.f32.mxu0 0.0
        %v4290 = vand.u32 %v2698, 4294901760
        %4291 = vmatmul.mubr.f32.gmra.mrb[0].mxu0 %v4290
        %v4292 = vpop.f32.mrb[0].mxu0
        %v4293 = vadd.f32 %v4006, %v4292
        %v4294 = vpop.f32.mrb[0].mxu0
        %4295 = vmatprep.mubr.f32.mxu0 0.0
        %v4296 = vand.u32 %v2701, 4294901760
        %4297 = vmatmul.mubr.f32.gmra.mrb[0].mxu0 %v4296
        %v4298 = vpop.f32.mrb[0].mxu0
        %v4299 = vadd.f32 %v4014, %v4298
        %v4300 = vpop.f32.mrb[0].mxu0
        %4301 = vmatprep.mubr.f32.mxu0 0.0
        %v4302 = vand.u32 %v2704, 4294901760
        %4303 = vmatmul.mubr.f32.gmra.mrb[0].mxu0 %v4302
        %v4304 = vpop.f32.mrb[0].mxu0
        %v4305 = vadd.f32 %v4022, %v4304
        %v4306 = vpop.f32.mrb[0].mxu0
        %4307 = vmatprep.mubr.f32.mxu0 0.0
        %v4308 = vand.u32 %v2707, 4294901760
        %4309 = vmatmul.mubr.f32.gmra.mrb[0].mxu0 %v4308
        %v4310 = vpop.f32.mrb[0].mxu0
        %v4311 = vadd.f32 %v4030, %v4310
        %v4312 = vpop.f32.mrb[0].mxu0
        %4313 = vdwg.mxu0
        %4314 = vmatprep.subr.mxu0 0.0
        %v4315 = vand.u32 %v2604, 4294901760
        %4316 = vmatpush1.msra.mxu0 %v4315
        %4317 = vmatprep.subr.mxu0 0.0
        %v4318 = vand.u32 %v2605, 4294901760
        %4319 = vmatpush1.msra.mxu0 %v4318
        %4320 = vmatprep.subr.mxu0 0.0
        %v4321 = vand.u32 %v2606, 4294901760
        %4322 = vmatpush1.msra.mxu0 %v4321
        %4323 = vmatprep.subr.mxu0 0.0
        %v4324 = vand.u32 %v2607, 4294901760
        %4325 = vmatpush1.msra.mxu0 %v4324
        %4326 = vmatprep.subr.mxu0 0.0
        %v4327 = vand.u32 %v2608, 4294901760
        %4328 = vmatpush1.msra.mxu0 %v4327
        %4329 = vmatprep.subr.mxu0 0.0
        %v4330 = vand.u32 %v2609, 4294901760
        %4331 = vmatpush1.msra.mxu0 %v4330
        %4332 = vmatprep.subr.mxu0 0.0
        %v4333 = vand.u32 %v2610, 4294901760
        %4334 = vmatpush1.msra.mxu0 %v4333
        %4335 = vmatprep.subr.mxu0 0.0
        %v4336 = vand.u32 %v2611, 4294901760
        %4337 = vmatpush1.msra.mxu0 %v4336
        %4338 = vmatprep.subr.mxu0 0.0
        %4339 = vmatpush1.msra.mxu0 0.0
        %4340 = vmatprep.subr.mxu0 0.0
        %4341 = vmatpush1.msra.mxu0 0.0
        %4342 = vmatprep.subr.mxu0 0.0
        %4343 = vmatpush1.msra.mxu0 0.0
        %4344 = vmatprep.subr.mxu0 0.0
        %4345 = vmatpush1.msra.mxu0 0.0
        %4346 = vmatprep.subr.mxu0 0.0
        %4347 = vmatpush1.msra.mxu0 0.0
        %4348 = vmatprep.subr.mxu0 0.0
        %4349 = vmatpush1.msra.mxu0 0.0
        %4350 = vmatprep.subr.mxu0 0.0
        %4351 = vmatpush1.msra.mxu0 0.0
        %4352 = vmatprep.subr.mxu0 0.0
        %4353 = vmatpush1.msra.mxu0 0.0
        %4354 = vmatprep.subr.mxu0 0.0
        %4355 = vmatpush1.msra.mxu0 0.0
        %4356 = vmatprep.subr.mxu0 0.0
        %4357 = vmatpush1.msra.mxu0 0.0
        %4358 = vmatprep.subr.mxu0 0.0
        %4359 = vmatpush1.msra.mxu0 0.0
        %4360 = vmatprep.subr.mxu0 0.0
        %4361 = vmatpush1.msra.mxu0 0.0
        %4362 = vmatprep.subr.mxu0 0.0
        %4363 = vmatpush1.msra.mxu0 0.0
        %4364 = vmatprep.subr.mxu0 0.0
        %4365 = vmatpush1.msra.mxu0 0.0
        %4366 = vmatprep.subr.mxu0 0.0
        %4367 = vmatpush1.msra.mxu0 0.0
        %4368 = vmatprep.subr.mxu0 0.0
        %4369 = vmatpush1.msra.mxu0 0.0
        %4370 = vmatprep.subr.mxu0 0.0
        %4371 = vmatpush1.msra.mxu0 0.0
        %4372 = vmatprep.subr.mxu0 0.0
        %4373 = vmatpush1.msra.mxu0 0.0
        %4374 = vmatprep.subr.mxu0 0.0
        %4375 = vmatpush1.msra.mxu0 0.0
        %4376 = vmatprep.subr.mxu0 0.0
        %4377 = vmatpush1.msra.mxu0 0.0
        %4378 = vmatprep.subr.mxu0 0.0
        %4379 = vmatpush1.msra.mxu0 0.0
        %4380 = vmatprep.subr.mxu0 0.0
        %4381 = vmatpush1.msra.mxu0 0.0
        %4382 = vmatprep.subr.mxu0 0.0
        %4383 = vmatpush1.msra.mxu0 0.0
        %4384 = vmatprep.subr.mxu0 0.0
        %4385 = vmatpush1.msra.mxu0 0.0
        %4386 = vmatprep.mubr.f32.mxu0 0.0
        %v4387 = vand.u32 %v2614, 4294901760
        %4388 = vmatmul.mubr.f32.gmra.mrb[0].mxu0 %v4387
        %v4389 = vpop.f32.mrb[0].mxu0
        %v4390 = vadd.f32 %v4125, %v4389
        %v4391 = vpop.f32.mrb[0].mxu0
        %4392 = vmatprep.mubr.f32.mxu0 0.0
        %v4393 = vand.u32 %v2617, 4294901760
        %4394 = vmatmul.mubr.f32.gmra.mrb[0].mxu0 %v4393
        %v4395 = vpop.f32.mrb[0].mxu0
        %v4396 = vadd.f32 %v4131, %v4395
        %v4397 = vpop.f32.mrb[0].mxu0
        %4398 = vmatprep.mubr.f32.mxu0 0.0
        %v4399 = vand.u32 %v2620, 4294901760
        %4400 = vmatmul.mubr.f32.gmra.mrb[0].mxu0 %v4399
        %v4401 = vpop.f32.mrb[0].mxu0
        %v4402 = vadd.f32 %v4137, %v4401
        %v4403 = vpop.f32.mrb[0].mxu0
        %4404 = vmatprep.mubr.f32.mxu0 0.0
        %v4405 = vand.u32 %v2623, 4294901760
        %4406 = vmatmul.mubr.f32.gmra.mrb[0].mxu0 %v4405
        %v4407 = vpop.f32.mrb[0].mxu0
        %v4408 = vadd.f32 %v4143, %v4407
        %v4409 = vpop.f32.mrb[0].mxu0
        %4410 = vmatprep.mubr.f32.mxu0 0.0
        %v4411 = vand.u32 %v2626, 4294901760
        %4412 = vmatmul.mubr.f32.gmra.mrb[0].mxu0 %v4411
        %v4413 = vpop.f32.mrb[0].mxu0
        %v4414 = vadd.f32 %v4149, %v4413
        %v4415 = vpop.f32.mrb[0].mxu0
        %4416 = vmatprep.mubr.f32.mxu0 0.0
        %v4417 = vand.u32 %v2629, 4294901760
        %4418 = vmatmul.mubr.f32.gmra.mrb[0].mxu0 %v4417
        %v4419 = vpop.f32.mrb[0].mxu0
        %v4420 = vadd.f32 %v4155, %v4419
        %v4421 = vpop.f32.mrb[0].mxu0
        %4422 = vmatprep.mubr.f32.mxu0 0.0
        %v4423 = vand.u32 %v2632, 4294901760
        %4424 = vmatmul.mubr.f32.gmra.mrb[0].mxu0 %v4423
        %v4425 = vpop.f32.mrb[0].mxu0
        %v4426 = vadd.f32 %v4161, %v4425
        %v4427 = vpop.f32.mrb[0].mxu0
        %4428 = vmatprep.mubr.f32.mxu0 0.0
        %v4429 = vand.u32 %v2635, 4294901760
        %4430 = vmatmul.mubr.f32.gmra.mrb[0].mxu0 %v4429
        %v4431 = vpop.f32.mrb[0].mxu0
        %v4432 = vadd.f32 %v4167, %v4431
        %v4433 = vpop.f32.mrb[0].mxu0
        %4434 = vmatprep.mubr.f32.mxu0 0.0
        %v4435 = vand.u32 %v2638, 4294901760
        %4436 = vmatmul.mubr.f32.gmra.mrb[0].mxu0 %v4435
        %v4437 = vpop.f32.mrb[0].mxu0
        %v4438 = vadd.f32 %v4173, %v4437
        %v4439 = vpop.f32.mrb[0].mxu0
        %4440 = vmatprep.mubr.f32.mxu0 0.0
        %v4441 = vand.u32 %v2641, 4294901760
        %4442 = vmatmul.mubr.f32.gmra.mrb[0].mxu0 %v4441
        %v4443 = vpop.f32.mrb[0].mxu0
        %v4444 = vadd.f32 %v4179, %v4443
        %v4445 = vpop.f32.mrb[0].mxu0
        %4446 = vmatprep.mubr.f32.mxu0 0.0
        %v4447 = vand.u32 %v2644, 4294901760
        %4448 = vmatmul.mubr.f32.gmra.mrb[0].mxu0 %v4447
        %v4449 = vpop.f32.mrb[0].mxu0
        %v4450 = vadd.f32 %v4185, %v4449
        %v4451 = vpop.f32.mrb[0].mxu0
        %4452 = vmatprep.mubr.f32.mxu0 0.0
        %v4453 = vand.u32 %v2647, 4294901760
        %4454 = vmatmul.mubr.f32.gmra.mrb[0].mxu0 %v4453
        %v4455 = vpop.f32.mrb[0].mxu0
        %v4456 = vadd.f32 %v4191, %v4455
        %v4457 = vpop.f32.mrb[0].mxu0
        %4458 = vmatprep.mubr.f32.mxu0 0.0
        %v4459 = vand.u32 %v2650, 4294901760
        %4460 = vmatmul.mubr.f32.gmra.mrb[0].mxu0 %v4459
        %v4461 = vpop.f32.mrb[0].mxu0
        %v4462 = vadd.f32 %v4197, %v4461
        %v4463 = vpop.f32.mrb[0].mxu0
        %4464 = vmatprep.mubr.f32.mxu0 0.0
        %v4465 = vand.u32 %v2653, 4294901760
        %4466 = vmatmul.mubr.f32.gmra.mrb[0].mxu0 %v4465
        %v4467 = vpop.f32.mrb[0].mxu0
        %v4468 = vadd.f32 %v4203, %v4467
        %v4469 = vpop.f32.mrb[0].mxu0
        %4470 = vmatprep.mubr.f32.mxu0 0.0
        %v4471 = vand.u32 %v2656, 4294901760
        %4472 = vmatmul.mubr.f32.gmra.mrb[0].mxu0 %v4471
        %v4473 = vpop.f32.mrb[0].mxu0
        %v4474 = vadd.f32 %v4209, %v4473
        %v4475 = vpop.f32.mrb[0].mxu0
        %4476 = vmatprep.mubr.f32.mxu0 0.0
        %v4477 = vand.u32 %v2659, 4294901760
        %4478 = vmatmul.mubr.f32.gmra.mrb[0].mxu0 %v4477
        %v4479 = vpop.f32.mrb[0].mxu0
        %v4480 = vadd.f32 %v4215, %v4479
        %v4481 = vpop.f32.mrb[0].mxu0
        %4482 = vmatprep.mubr.f32.mxu0 0.0
        %v4483 = vand.u32 %v2662, 4294901760
        %4484 = vmatmul.mubr.f32.gmra.mrb[0].mxu0 %v4483
        %v4485 = vpop.f32.mrb[0].mxu0
        %v4486 = vadd.f32 %v4221, %v4485
        %v4487 = vpop.f32.mrb[0].mxu0
        %4488 = vmatprep.mubr.f32.mxu0 0.0
        %v4489 = vand.u32 %v2665, 4294901760
        %4490 = vmatmul.mubr.f32.gmra.mrb[0].mxu0 %v4489
        %v4491 = vpop.f32.mrb[0].mxu0
        %v4492 = vadd.f32 %v4227, %v4491
        %v4493 = vpop.f32.mrb[0].mxu0
        %4494 = vmatprep.mubr.f32.mxu0 0.0
        %v4495 = vand.u32 %v2668, 4294901760
        %4496 = vmatmul.mubr.f32.gmra.mrb[0].mxu0 %v4495
        %v4497 = vpop.f32.mrb[0].mxu0
        %v4498 = vadd.f32 %v4233, %v4497
        %v4499 = vpop.f32.mrb[0].mxu0
        %4500 = vmatprep.mubr.f32.mxu0 0.0
        %v4501 = vand.u32 %v2671, 4294901760
        %4502 = vmatmul.mubr.f32.gmra.mrb[0].mxu0 %v4501
        %v4503 = vpop.f32.mrb[0].mxu0
        %v4504 = vadd.f32 %v4239, %v4503
        %v4505 = vpop.f32.mrb[0].mxu0
        %4506 = vmatprep.mubr.f32.mxu0 0.0
        %v4507 = vand.u32 %v2674, 4294901760
        %4508 = vmatmul.mubr.f32.gmra.mrb[0].mxu0 %v4507
        %v4509 = vpop.f32.mrb[0].mxu0
        %v4510 = vadd.f32 %v4245, %v4509
        %v4511 = vpop.f32.mrb[0].mxu0
        %4512 = vmatprep.mubr.f32.mxu0 0.0
        %v4513 = vand.u32 %v2677, 4294901760
        %4514 = vmatmul.mubr.f32.gmra.mrb[0].mxu0 %v4513
        %v4515 = vpop.f32.mrb[0].mxu0
        %v4516 = vadd.f32 %v4251, %v4515
        %v4517 = vpop.f32.mrb[0].mxu0
        %4518 = vmatprep.mubr.f32.mxu0 0.0
        %v4519 = vand.u32 %v2680, 4294901760
        %4520 = vmatmul.mubr.f32.gmra.mrb[0].mxu0 %v4519
        %v4521 = vpop.f32.mrb[0].mxu0
        %v4522 = vadd.f32 %v4257, %v4521
        %v4523 = vpop.f32.mrb[0].mxu0
        %4524 = vmatprep.mubr.f32.mxu0 0.0
        %v4525 = vand.u32 %v2683, 4294901760
        %4526 = vmatmul.mubr.f32.gmra.mrb[0].mxu0 %v4525
        %v4527 = vpop.f32.mrb[0].mxu0
        %v4528 = vadd.f32 %v4263, %v4527
        %v4529 = vpop.f32.mrb[0].mxu0
        %4530 = vmatprep.mubr.f32.mxu0 0.0
        %v4531 = vand.u32 %v2686, 4294901760
        %4532 = vmatmul.mubr.f32.gmra.mrb[0].mxu0 %v4531
        %v4533 = vpop.f32.mrb[0].mxu0
        %v4534 = vadd.f32 %v4269, %v4533
        %v4535 = vpop.f32.mrb[0].mxu0
        %4536 = vmatprep.mubr.f32.mxu0 0.0
        %v4537 = vand.u32 %v2689, 4294901760
        %4538 = vmatmul.mubr.f32.gmra.mrb[0].mxu0 %v4537
        %v4539 = vpop.f32.mrb[0].mxu0
        %v4540 = vadd.f32 %v4275, %v4539
        %v4541 = vpop.f32.mrb[0].mxu0
        %4542 = vmatprep.mubr.f32.mxu0 0.0
        %v4543 = vand.u32 %v2692, 4294901760
        %4544 = vmatmul.mubr.f32.gmra.mrb[0].mxu0 %v4543
        %v4545 = vpop.f32.mrb[0].mxu0
        %v4546 = vadd.f32 %v4281, %v4545
        %v4547 = vpop.f32.mrb[0].mxu0
        %4548 = vmatprep.mubr.f32.mxu0 0.0
        %v4549 = vand.u32 %v2695, 4294901760
        %4550 = vmatmul.mubr.f32.gmra.mrb[0].mxu0 %v4549
        %v4551 = vpop.f32.mrb[0].mxu0
        %v4552 = vadd.f32 %v4287, %v4551
        %v4553 = vpop.f32.mrb[0].mxu0
        %4554 = vmatprep.mubr.f32.mxu0 0.0
        %v4555 = vand.u32 %v2698, 4294901760
        %4556 = vmatmul.mubr.f32.gmra.mrb[0].mxu0 %v4555
        %v4557 = vpop.f32.mrb[0].mxu0
        %v4558 = vadd.f32 %v4293, %v4557
        %v4559 = vpop.f32.mrb[0].mxu0
        %4560 = vmatprep.mubr.f32.mxu0 0.0
        %v4561 = vand.u32 %v2701, 4294901760
        %4562 = vmatmul.mubr.f32.gmra.mrb[0].mxu0 %v4561
        %v4563 = vpop.f32.mrb[0].mxu0
        %v4564 = vadd.f32 %v4299, %v4563
        %v4565 = vpop.f32.mrb[0].mxu0
        %4566 = vmatprep.mubr.f32.mxu0 0.0
        %v4567 = vand.u32 %v2704, 4294901760
        %4568 = vmatmul.mubr.f32.gmra.mrb[0].mxu0 %v4567
        %v4569 = vpop.f32.mrb[0].mxu0
        %v4570 = vadd.f32 %v4305, %v4569
        %v4571 = vpop.f32.mrb[0].mxu0
        %4572 = vmatprep.mubr.f32.mxu0 0.0
        %v4573 = vand.u32 %v2707, 4294901760
        %4574 = vmatmul.mubr.f32.gmra.mrb[0].mxu0 %v4573
        %v4575 = vpop.f32.mrb[0].mxu0
        %v4576 = vadd.f32 %v4311, %v4575
        %v4577 = vpop.f32.mrb[0].mxu0
        %4578 = vdwg.mxu0
        %4579 = vst.msk [vmem:[%s293] sm:$0xff] %vm657, %v2383
        %4580 = vst.msk [vmem:[%s293 + $0x8] sm:$0xff] %vm657, %v2389
        %4581 = vst.msk [vmem:[%s293 + $0x10] sm:$0xff] %vm657, %v2395
        %4582 = vst.msk [vmem:[%s293 + $0x18] sm:$0xff] %vm657, %v2401
        %4583 = vst.msk [vmem:[%s293 + $0x20] sm:$0xff] %vm657, %v2407
        %4584 = vst.msk [vmem:[%s293 + $0x28] sm:$0xff] %vm657, %v2413
        %4585 = vst.msk [vmem:[%s293 + $0x30] sm:$0xff] %vm657, %v2419
        %4586 = vst.msk [vmem:[%s293 + $0x38] sm:$0xff] %vm657, %v2425
        %4587 = vst.msk [vmem:[%s293 + $0x40] sm:$0xff] %vm657, %v2431
        %4588 = vst.msk [vmem:[%s293 + $0x48] sm:$0xff] %vm657, %v2437
        %4589 = vst.msk [vmem:[%s293 + $0x50] sm:$0xff] %vm657, %v2443
        %4590 = vst.msk [vmem:[%s293 + $0x58] sm:$0xff] %vm657, %v2449
        %4591 = vst.msk [vmem:[%s293 + $0x60] sm:$0xff] %vm657, %v2455
        %4592 = vst.msk [vmem:[%s293 + $0x68] sm:$0xff] %vm657, %v2461
        %4593 = vst.msk [vmem:[%s293 + $0x70] sm:$0xff] %vm657, %v2467
        %4594 = vst.msk [vmem:[%s293 + $0x78] sm:$0xff] %vm657, %v2473
        %4595 = vst.msk [vmem:[%s293 + $0x80] sm:$0xff] %vm657, %v2479
        %4596 = vst.msk [vmem:[%s293 + $0x88] sm:$0xff] %vm657, %v2485
        %4597 = vst.msk [vmem:[%s293 + $0x90] sm:$0xff] %vm657, %v2491
        %4598 = vst.msk [vmem:[%s293 + $0x98] sm:$0xff] %vm657, %v2497
        %4599 = vst.msk [vmem:[%s293 + $0xa0] sm:$0xff] %vm657, %v2503
        %4600 = vst.msk [vmem:[%s293 + $0xa8] sm:$0xff] %vm657, %v2509
        %4601 = vst.msk [vmem:[%s293 + $0xb0] sm:$0xff] %vm657, %v2515
        %4602 = vst.msk [vmem:[%s293 + $0xb8] sm:$0xff] %vm657, %v2521
        %4603 = vst.msk [vmem:[%s293 + $0xc0] sm:$0xff] %vm657, %v2527
        %4604 = vst.msk [vmem:[%s293 + $0xc8] sm:$0xff] %vm657, %v2533
        %4605 = vst.msk [vmem:[%s293 + $0xd0] sm:$0xff] %vm657, %v2539
        %4606 = vst.msk [vmem:[%s293 + $0xd8] sm:$0xff] %vm657, %v2545
        %4607 = vst.msk [vmem:[%s293 + $0xe0] sm:$0xff] %vm657, %v2551
        %4608 = vst.msk [vmem:[%s293 + $0xe8] sm:$0xff] %vm657, %v2557
        %4609 = vst.msk [vmem:[%s293 + $0xf0] sm:$0xff] %vm657, %v2563
        %4610 = vst.msk [vmem:[%s293 + $0xf8] sm:$0xff] %vm657, %v2569
        %4611 = vst.msk [vmem:[%s299] sm:$0xff] %vm657, %v4390
        %4612 = vst.msk [vmem:[%s299 + $0x8] sm:$0xff] %vm657, %v4396
        %4613 = vst.msk [vmem:[%s299 + $0x10] sm:$0xff] %vm657, %v4402
        %4614 = vst.msk [vmem:[%s299 + $0x18] sm:$0xff] %vm657, %v4408
        %4615 = vst.msk [vmem:[%s299 + $0x20] sm:$0xff] %vm657, %v4414
        %4616 = vst.msk [vmem:[%s299 + $0x28] sm:$0xff] %vm657, %v4420
        %4617 = vst.msk [vmem:[%s299 + $0x30] sm:$0xff] %vm657, %v4426
        %4618 = vst.msk [vmem:[%s299 + $0x38] sm:$0xff] %vm657, %v4432
        %4619 = vst.msk [vmem:[%s299 + $0x40] sm:$0xff] %vm657, %v4438
        %4620 = vst.msk [vmem:[%s299 + $0x48] sm:$0xff] %vm657, %v4444
        %4621 = vst.msk [vmem:[%s299 + $0x50] sm:$0xff] %vm657, %v4450
        %4622 = vst.msk [vmem:[%s299 + $0x58] sm:$0xff] %vm657, %v4456
        %4623 = vst.msk [vmem:[%s299 + $0x60] sm:$0xff] %vm657, %v4462
        %4624 = vst.msk [vmem:[%s299 + $0x68] sm:$0xff] %vm657, %v4468
        %4625 = vst.msk [vmem:[%s299 + $0x70] sm:$0xff] %vm657, %v4474
        %4626 = vst.msk [vmem:[%s299 + $0x78] sm:$0xff] %vm657, %v4480
        %4627 = vst.msk [vmem:[%s299 + $0x80] sm:$0xff] %vm657, %v4486
        %4628 = vst.msk [vmem:[%s299 + $0x88] sm:$0xff] %vm657, %v4492
        %4629 = vst.msk [vmem:[%s299 + $0x90] sm:$0xff] %vm657, %v4498
        %4630 = vst.msk [vmem:[%s299 + $0x98] sm:$0xff] %vm657, %v4504
        %4631 = vst.msk [vmem:[%s299 + $0xa0] sm:$0xff] %vm657, %v4510
        %4632 = vst.msk [vmem:[%s299 + $0xa8] sm:$0xff] %vm657, %v4516
        %4633 = vst.msk [vmem:[%s299 + $0xb0] sm:$0xff] %vm657, %v4522
        %4634 = vst.msk [vmem:[%s299 + $0xb8] sm:$0xff] %vm657, %v4528
        %4635 = vst.msk [vmem:[%s299 + $0xc0] sm:$0xff] %vm657, %v4534
        %4636 = vst.msk [vmem:[%s299 + $0xc8] sm:$0xff] %vm657, %v4540
        %4637 = vst.msk [vmem:[%s299 + $0xd0] sm:$0xff] %vm657, %v4546
        %4638 = vst.msk [vmem:[%s299 + $0xd8] sm:$0xff] %vm657, %v4552
        %4639 = vst.msk [vmem:[%s299 + $0xe0] sm:$0xff] %vm657, %v4558
        %4640 = vst.msk [vmem:[%s299 + $0xe8] sm:$0xff] %vm657, %v4564
        %4641 = vst.msk [vmem:[%s299 + $0xf0] sm:$0xff] %vm657, %v4570
        %4642 = vst.msk [vmem:[%s299 + $0xf8] sm:$0xff] %vm657, %v4576
        %v4643 = vsel %vm657, %v2383, 0.0
        %v4644 = vsel %vm657, %v2389, 0.0
        %v4645 = vadd.f32 %v4643, %v4644
        %v4646 = vsel %vm657, %v2395, 0.0
        %v4647 = vadd.f32 %v4645, %v4646
        %v4648 = vsel %vm657, %v2401, 0.0
        %v4649 = vadd.f32 %v4647, %v4648
        %v4650 = vsel %vm657, %v2407, 0.0
        %v4651 = vadd.f32 %v4649, %v4650
        %v4652 = vsel %vm657, %v2413, 0.0
        %v4653 = vadd.f32 %v4651, %v4652
        %v4654 = vsel %vm657, %v2419, 0.0
        %v4655 = vadd.f32 %v4653, %v4654
        %v4656 = vsel %vm657, %v2425, 0.0
        %v4657 = vadd.f32 %v4655, %v4656
        %v4658 = vsel %vm657, %v2431, 0.0
        %v4659 = vadd.f32 %v4657, %v4658
        %v4660 = vsel %vm657, %v2437, 0.0
        %v4661 = vadd.f32 %v4659, %v4660
        %v4662 = vsel %vm657, %v2443, 0.0
        %v4663 = vadd.f32 %v4661, %v4662
        %v4664 = vsel %vm657, %v2449, 0.0
        %v4665 = vadd.f32 %v4663, %v4664
        %v4666 = vsel %vm657, %v2455, 0.0
        %v4667 = vadd.f32 %v4665, %v4666
        %v4668 = vsel %vm657, %v2461, 0.0
        %v4669 = vadd.f32 %v4667, %v4668
        %v4670 = vsel %vm657, %v2467, 0.0
        %v4671 = vadd.f32 %v4669, %v4670
        %v4672 = vsel %vm657, %v2473, 0.0
        %v4673 = vadd.f32 %v4671, %v4672
        %v4674 = vsel %vm657, %v2479, 0.0
        %v4675 = vadd.f32 %v4673, %v4674
        %v4676 = vsel %vm657, %v2485, 0.0
        %v4677 = vadd.f32 %v4675, %v4676
        %v4678 = vsel %vm657, %v2491, 0.0
        %v4679 = vadd.f32 %v4677, %v4678
        %v4680 = vsel %vm657, %v2497, 0.0
        %v4681 = vadd.f32 %v4679, %v4680
        %v4682 = vsel %vm657, %v2503, 0.0
        %v4683 = vadd.f32 %v4681, %v4682
        %v4684 = vsel %vm657, %v2509, 0.0
        %v4685 = vadd.f32 %v4683, %v4684
        %v4686 = vsel %vm657, %v2515, 0.0
        %v4687 = vadd.f32 %v4685, %v4686
        %v4688 = vsel %vm657, %v2521, 0.0
        %v4689 = vadd.f32 %v4687, %v4688
        %v4690 = vsel %vm657, %v2527, 0.0
        %v4691 = vadd.f32 %v4689, %v4690
        %v4692 = vsel %vm657, %v2533, 0.0
        %v4693 = vadd.f32 %v4691, %v4692
        %v4694 = vsel %vm657, %v2539, 0.0
        %v4695 = vadd.f32 %v4693, %v4694
        %v4696 = vsel %vm657, %v2545, 0.0
        %v4697 = vadd.f32 %v4695, %v4696
        %v4698 = vsel %vm657, %v2551, 0.0
        %v4699 = vadd.f32 %v4697, %v4698
        %v4700 = vsel %vm657, %v2557, 0.0
        %v4701 = vadd.f32 %v4699, %v4700
        %v4702 = vsel %vm657, %v2563, 0.0
        %v4703 = vadd.f32 %v4701, %v4702
        %v4704 = vsel %vm657, %v2569, 0.0
        %v4705 = vadd.f32 %v4703, %v4704
        %v4706 = vrot.slane %v4705, 4
        %v4707 = vadd.f32 %v4705, %v4706
        %v4708 = vrot.slane %v4707, 2
        %v4709 = vadd.f32 %v4707, %v4708
        %v4710 = vrot.slane %v4709, 1
        %v4711 = vadd.f32 %v4709, %v4710
        %vm4712 = vcmask 253952
        %4713 = vst.msk [vmem:[%s276] sm:$0x1] %vm4712, %v4711
        %v4714 = vmul.f32 %v2383, %v2383
        %v4715 = vmul.f32 %v2389, %v2389
        %v4716 = vmul.f32 %v2395, %v2395
        %v4717 = vmul.f32 %v2401, %v2401
        %v4718 = vmul.f32 %v2407, %v2407
        %v4719 = vmul.f32 %v2413, %v2413
        %v4720 = vmul.f32 %v2419, %v2419
        %v4721 = vmul.f32 %v2425, %v2425
        %v4722 = vmul.f32 %v2431, %v2431
        %v4723 = vmul.f32 %v2437, %v2437
        %v4724 = vmul.f32 %v2443, %v2443
        %v4725 = vmul.f32 %v2449, %v2449
        %v4726 = vmul.f32 %v2455, %v2455
        %v4727 = vmul.f32 %v2461, %v2461
        %v4728 = vmul.f32 %v2467, %v2467
        %v4729 = vmul.f32 %v2473, %v2473
        %v4730 = vmul.f32 %v2479, %v2479
        %v4731 = vmul.f32 %v2485, %v2485
        %v4732 = vmul.f32 %v2491, %v2491
        %v4733 = vmul.f32 %v2497, %v2497
        %v4734 = vmul.f32 %v2503, %v2503
        %v4735 = vmul.f32 %v2509, %v2509
        %v4736 = vmul.f32 %v2515, %v2515
        %v4737 = vmul.f32 %v2521, %v2521
        %v4738 = vmul.f32 %v2527, %v2527
        %v4739 = vmul.f32 %v2533, %v2533
        %v4740 = vmul.f32 %v2539, %v2539
        %v4741 = vmul.f32 %v2545, %v2545
        %v4742 = vmul.f32 %v2551, %v2551
        %v4743 = vmul.f32 %v2557, %v2557
        %v4744 = vmul.f32 %v2563, %v2563
        %v4745 = vmul.f32 %v2569, %v2569
        %v4746 = vsel %vm657, %v4714, 0.0
        %v4747 = vsel %vm657, %v4715, 0.0
        %v4748 = vadd.f32 %v4746, %v4747
        %v4749 = vsel %vm657, %v4716, 0.0
        %v4750 = vadd.f32 %v4748, %v4749
        %v4751 = vsel %vm657, %v4717, 0.0
        %v4752 = vadd.f32 %v4750, %v4751
        %v4753 = vsel %vm657, %v4718, 0.0
        %v4754 = vadd.f32 %v4752, %v4753
        %v4755 = vsel %vm657, %v4719, 0.0
        %v4756 = vadd.f32 %v4754, %v4755
        %v4757 = vsel %vm657, %v4720, 0.0
        %v4758 = vadd.f32 %v4756, %v4757
        %v4759 = vsel %vm657, %v4721, 0.0
        %v4760 = vadd.f32 %v4758, %v4759
        %v4761 = vsel %vm657, %v4722, 0.0
        %v4762 = vadd.f32 %v4760, %v4761
        %v4763 = vsel %vm657, %v4723, 0.0
        %v4764 = vadd.f32 %v4762, %v4763
        %v4765 = vsel %vm657, %v4724, 0.0
        %v4766 = vadd.f32 %v4764, %v4765
        %v4767 = vsel %vm657, %v4725, 0.0
        %v4768 = vadd.f32 %v4766, %v4767
        %v4769 = vsel %vm657, %v4726, 0.0
        %v4770 = vadd.f32 %v4768, %v4769
        %v4771 = vsel %vm657, %v4727, 0.0
        %v4772 = vadd.f32 %v4770, %v4771
        %v4773 = vsel %vm657, %v4728, 0.0
        %v4774 = vadd.f32 %v4772, %v4773
        %v4775 = vsel %vm657, %v4729, 0.0
        %v4776 = vadd.f32 %v4774, %v4775
        %v4777 = vsel %vm657, %v4730, 0.0
        %v4778 = vadd.f32 %v4776, %v4777
        %v4779 = vsel %vm657, %v4731, 0.0
        %v4780 = vadd.f32 %v4778, %v4779
        %v4781 = vsel %vm657, %v4732, 0.0
        %v4782 = vadd.f32 %v4780, %v4781
        %v4783 = vsel %vm657, %v4733, 0.0
        %v4784 = vadd.f32 %v4782, %v4783
        %v4785 = vsel %vm657, %v4734, 0.0
        %v4786 = vadd.f32 %v4784, %v4785
        %v4787 = vsel %vm657, %v4735, 0.0
        %v4788 = vadd.f32 %v4786, %v4787
        %v4789 = vsel %vm657, %v4736, 0.0
        %v4790 = vadd.f32 %v4788, %v4789
        %v4791 = vsel %vm657, %v4737, 0.0
        %v4792 = vadd.f32 %v4790, %v4791
        %v4793 = vsel %vm657, %v4738, 0.0
        %v4794 = vadd.f32 %v4792, %v4793
        %v4795 = vsel %vm657, %v4739, 0.0
        %v4796 = vadd.f32 %v4794, %v4795
        %v4797 = vsel %vm657, %v4740, 0.0
        %v4798 = vadd.f32 %v4796, %v4797
        %v4799 = vsel %vm657, %v4741, 0.0
        %v4800 = vadd.f32 %v4798, %v4799
        %v4801 = vsel %vm657, %v4742, 0.0
        %v4802 = vadd.f32 %v4800, %v4801
        %v4803 = vsel %vm657, %v4743, 0.0
        %v4804 = vadd.f32 %v4802, %v4803
        %v4805 = vsel %vm657, %v4744, 0.0
        %v4806 = vadd.f32 %v4804, %v4805
        %v4807 = vsel %vm657, %v4745, 0.0
        %v4808 = vadd.f32 %v4806, %v4807
        %v4809 = vrot.slane %v4808, 4
        %v4810 = vadd.f32 %v4808, %v4809
        %v4811 = vrot.slane %v4810, 2
        %v4812 = vadd.f32 %v4810, %v4811
        %v4813 = vrot.slane %v4812, 1
        %v4814 = vadd.f32 %v4812, %v4813
        %4815 = vst.msk [vmem:[%s276 + $0x1] sm:$0x1] %vm4712, %v4814
        %v4816 = vsel %vm657, %v4390, 0.0
        %v4817 = vsel %vm657, %v4396, 0.0
        %v4818 = vadd.f32 %v4816, %v4817
        %v4819 = vsel %vm657, %v4402, 0.0
        %v4820 = vadd.f32 %v4818, %v4819
        %v4821 = vsel %vm657, %v4408, 0.0
        %v4822 = vadd.f32 %v4820, %v4821
        %v4823 = vsel %vm657, %v4414, 0.0
        %v4824 = vadd.f32 %v4822, %v4823
        %v4825 = vsel %vm657, %v4420, 0.0
        %v4826 = vadd.f32 %v4824, %v4825
        %v4827 = vsel %vm657, %v4426, 0.0
        %v4828 = vadd.f32 %v4826, %v4827
        %v4829 = vsel %vm657, %v4432, 0.0
        %v4830 = vadd.f32 %v4828, %v4829
        %v4831 = vsel %vm657, %v4438, 0.0
        %v4832 = vadd.f32 %v4830, %v4831
        %v4833 = vsel %vm657, %v4444, 0.0
        %v4834 = vadd.f32 %v4832, %v4833
        %v4835 = vsel %vm657, %v4450, 0.0
        %v4836 = vadd.f32 %v4834, %v4835
        %v4837 = vsel %vm657, %v4456, 0.0
        %v4838 = vadd.f32 %v4836, %v4837
        %v4839 = vsel %vm657, %v4462, 0.0
        %v4840 = vadd.f32 %v4838, %v4839
        %v4841 = vsel %vm657, %v4468, 0.0
        %v4842 = vadd.f32 %v4840, %v4841
        %v4843 = vsel %vm657, %v4474, 0.0
        %v4844 = vadd.f32 %v4842, %v4843
        %v4845 = vsel %vm657, %v4480, 0.0
        %v4846 = vadd.f32 %v4844, %v4845
        %v4847 = vsel %vm657, %v4486, 0.0
        %v4848 = vadd.f32 %v4846, %v4847
        %v4849 = vsel %vm657, %v4492, 0.0
        %v4850 = vadd.f32 %v4848, %v4849
        %v4851 = vsel %vm657, %v4498, 0.0
        %v4852 = vadd.f32 %v4850, %v4851
        %v4853 = vsel %vm657, %v4504, 0.0
        %v4854 = vadd.f32 %v4852, %v4853
        %v4855 = vsel %vm657, %v4510, 0.0
        %v4856 = vadd.f32 %v4854, %v4855
        %v4857 = vsel %vm657, %v4516, 0.0
        %v4858 = vadd.f32 %v4856, %v4857
        %v4859 = vsel %vm657, %v4522, 0.0
        %v4860 = vadd.f32 %v4858, %v4859
        %v4861 = vsel %vm657, %v4528, 0.0
        %v4862 = vadd.f32 %v4860, %v4861
        %v4863 = vsel %vm657, %v4534, 0.0
        %v4864 = vadd.f32 %v4862, %v4863
        %v4865 = vsel %vm657, %v4540, 0.0
        %v4866 = vadd.f32 %v4864, %v4865
        %v4867 = vsel %vm657, %v4546, 0.0
        %v4868 = vadd.f32 %v4866, %v4867
        %v4869 = vsel %vm657, %v4552, 0.0
        %v4870 = vadd.f32 %v4868, %v4869
        %v4871 = vsel %vm657, %v4558, 0.0
        %v4872 = vadd.f32 %v4870, %v4871
        %v4873 = vsel %vm657, %v4564, 0.0
        %v4874 = vadd.f32 %v4872, %v4873
        %v4875 = vsel %vm657, %v4570, 0.0
        %v4876 = vadd.f32 %v4874, %v4875
        %v4877 = vsel %vm657, %v4576, 0.0
        %v4878 = vadd.f32 %v4876, %v4877
        %v4879 = vrot.slane %v4878, 4
        %v4880 = vadd.f32 %v4878, %v4879
        %v4881 = vrot.slane %v4880, 2
        %v4882 = vadd.f32 %v4880, %v4881
        %v4883 = vrot.slane %v4882, 1
        %v4884 = vadd.f32 %v4882, %v4883
        %4885 = vst.msk [vmem:[%s276 + $0x2] sm:$0x1] %vm4712, %v4884
        %v4886 = vmul.f32 %v4390, %v4390
        %v4887 = vmul.f32 %v4396, %v4396
        %v4888 = vmul.f32 %v4402, %v4402
        %v4889 = vmul.f32 %v4408, %v4408
        %v4890 = vmul.f32 %v4414, %v4414
        %v4891 = vmul.f32 %v4420, %v4420
        %v4892 = vmul.f32 %v4426, %v4426
        %v4893 = vmul.f32 %v4432, %v4432
        %v4894 = vmul.f32 %v4438, %v4438
        %v4895 = vmul.f32 %v4444, %v4444
        %v4896 = vmul.f32 %v4450, %v4450
        %v4897 = vmul.f32 %v4456, %v4456
        %v4898 = vmul.f32 %v4462, %v4462
        %v4899 = vmul.f32 %v4468, %v4468
        %v4900 = vmul.f32 %v4474, %v4474
        %v4901 = vmul.f32 %v4480, %v4480
        %v4902 = vmul.f32 %v4486, %v4486
        %v4903 = vmul.f32 %v4492, %v4492
        %v4904 = vmul.f32 %v4498, %v4498
        %v4905 = vmul.f32 %v4504, %v4504
        %v4906 = vmul.f32 %v4510, %v4510
        %v4907 = vmul.f32 %v4516, %v4516
        %v4908 = vmul.f32 %v4522, %v4522
        %v4909 = vmul.f32 %v4528, %v4528
        %v4910 = vmul.f32 %v4534, %v4534
        %v4911 = vmul.f32 %v4540, %v4540
        %v4912 = vmul.f32 %v4546, %v4546
        %v4913 = vmul.f32 %v4552, %v4552
        %v4914 = vmul.f32 %v4558, %v4558
        %v4915 = vmul.f32 %v4564, %v4564
        %v4916 = vmul.f32 %v4570, %v4570
        %v4917 = vmul.f32 %v4576, %v4576
        %v4918 = vsel %vm657, %v4886, 0.0
        %v4919 = vsel %vm657, %v4887, 0.0
        %v4920 = vadd.f32 %v4918, %v4919
        %v4921 = vsel %vm657, %v4888, 0.0
        %v4922 = vadd.f32 %v4920, %v4921
        %v4923 = vsel %vm657, %v4889, 0.0
        %v4924 = vadd.f32 %v4922, %v4923
        %v4925 = vsel %vm657, %v4890, 0.0
        %v4926 = vadd.f32 %v4924, %v4925
        %v4927 = vsel %vm657, %v4891, 0.0
        %v4928 = vadd.f32 %v4926, %v4927
        %v4929 = vsel %vm657, %v4892, 0.0
        %v4930 = vadd.f32 %v4928, %v4929
        %v4931 = vsel %vm657, %v4893, 0.0
        %v4932 = vadd.f32 %v4930, %v4931
        %v4933 = vsel %vm657, %v4894, 0.0
        %v4934 = vadd.f32 %v4932, %v4933
        %v4935 = vsel %vm657, %v4895, 0.0
        %v4936 = vadd.f32 %v4934, %v4935
        %v4937 = vsel %vm657, %v4896, 0.0
        %v4938 = vadd.f32 %v4936, %v4937
        %v4939 = vsel %vm657, %v4897, 0.0
        %v4940 = vadd.f32 %v4938, %v4939
        %v4941 = vsel %vm657, %v4898, 0.0
        %v4942 = vadd.f32 %v4940, %v4941
        %v4943 = vsel %vm657, %v4899, 0.0
        %v4944 = vadd.f32 %v4942, %v4943
        %v4945 = vsel %vm657, %v4900, 0.0
        %v4946 = vadd.f32 %v4944, %v4945
        %v4947 = vsel %vm657, %v4901, 0.0
        %v4948 = vadd.f32 %v4946, %v4947
        %v4949 = vsel %vm657, %v4902, 0.0
        %v4950 = vadd.f32 %v4948, %v4949
        %v4951 = vsel %vm657, %v4903, 0.0
        %v4952 = vadd.f32 %v4950, %v4951
        %v4953 = vsel %vm657, %v4904, 0.0
        %v4954 = vadd.f32 %v4952, %v4953
        %v4955 = vsel %vm657, %v4905, 0.0
        %v4956 = vadd.f32 %v4954, %v4955
        %v4957 = vsel %vm657, %v4906, 0.0
        %v4958 = vadd.f32 %v4956, %v4957
        %v4959 = vsel %vm657, %v4907, 0.0
        %v4960 = vadd.f32 %v4958, %v4959
        %v4961 = vsel %vm657, %v4908, 0.0
        %v4962 = vadd.f32 %v4960, %v4961
        %v4963 = vsel %vm657, %v4909, 0.0
        %v4964 = vadd.f32 %v4962, %v4963
        %v4965 = vsel %vm657, %v4910, 0.0
        %v4966 = vadd.f32 %v4964, %v4965
        %v4967 = vsel %vm657, %v4911, 0.0
        %v4968 = vadd.f32 %v4966, %v4967
        %v4969 = vsel %vm657, %v4912, 0.0
        %v4970 = vadd.f32 %v4968, %v4969
        %v4971 = vsel %vm657, %v4913, 0.0
        %v4972 = vadd.f32 %v4970, %v4971
        %v4973 = vsel %vm657, %v4914, 0.0
        %v4974 = vadd.f32 %v4972, %v4973
        %v4975 = vsel %vm657, %v4915, 0.0
        %v4976 = vadd.f32 %v4974, %v4975
        %v4977 = vsel %vm657, %v4916, 0.0
        %v4978 = vadd.f32 %v4976, %v4977
        %v4979 = vsel %vm657, %v4917, 0.0
        %v4980 = vadd.f32 %v4978, %v4979
        %v4981 = vrot.slane %v4980, 4
        %v4982 = vadd.f32 %v4980, %v4981
        %v4983 = vrot.slane %v4982, 2
        %v4984 = vadd.f32 %v4982, %v4983
        %v4985 = vrot.slane %v4984, 1
        %v4986 = vadd.f32 %v4984, %v4985
        %4987 = vst.msk [vmem:[%s276 + $0x3] sm:$0x1] %vm4712, %v4986
        %s4988 = smul.u32 32, %s21
        %p4989 = scmp.lt.s32.totalorder %s4988, 63
        %s4990 = scalar_select %p4989, %s4988, 63
        %s4991 = smul.addr %s4990, 8
        %s4992 = scalar_lea.vmem %s4, %s4991
        %s4993 = smul.u32 32, %s21
        %p4994 = scmp.lt.s32.totalorder %s4993, 63
        %s4995 = scalar_select %p4994, %s4993, 63
        %s4996 = smul.addr %s4995, 8
        %s4997 = scalar_lea.vmem %s5, %s4996
        %s4998 = sand.u32 %s175, 1
        %s4999 = scalar_lea.sflag [#allocation3], %s4998
        %s5000 = sand.u32 %s175, 1
        %s5001 = smul.addr %s5000, 4
        %s5002 = scalar_lea.vmem [#allocation2], %s5001
        // Predicated region
        $region37: #{tpu_custom_call.1} parent=35 // pred_check
          %p5003 = pneg %p133
        $region38: #{tpu_custom_call.1} parent=35 // pred_check_branch
          %5005 = sbr.rel (%p5003) target = $region40
        $region39: #{tpu_custom_call.1} parent=35 // pred_region
          %s5006 = smul.u32 32, %s21
        $region40: #{tpu_custom_call.1} parent=35 // pred_fallthru
          _
        // Predicated region
        $region41: #{tpu_custom_call.1} parent=35 // pred_check
          %p5007 = pneg %p159
        $region42: #{tpu_custom_call.1} parent=35 // pred_check_branch
          %5009 = sbr.rel (%p5007) target = $region44
        $region43: #{tpu_custom_call.1} parent=35 // pred_region
          %s5010 = smul.u32 32, %s21
        $region44: #{tpu_custom_call.1} parent=35 // pred_fallthru
          _
        // Predicated region
        $region45: #{tpu_custom_call.1} parent=35 // pred_check
          %p5011 = pneg %p185
        $region46: #{tpu_custom_call.1} parent=35 // pred_check_branch
          %5013 = sbr.rel (%p5011) target = $region48
        $region47: #{tpu_custom_call.1} parent=35 // pred_region
          %s5015 = ssub.s32 64, 64
          %5016 = vsyncadd %s4999, %s5015
          %s5017 = smul.addr %s21, 64
          %s5018 = scalar_lea.hbm %s6, %s5017
          %s5020 = sshll.u32 %s5002, 4
          %s5021 = int_to_ptr.vmem [resolvable:$true] %s5020
          %5023 = dma.vmem_to_hbm [thread:$0]  %s5021, 64, %s5018, %s4999
        $region48: #{tpu_custom_call.1} parent=35 // pred_fallthru
          _
      $region36: #{tpu_custom_call.1} parent=5 // pred_fallthru
        _
      %p5024 = scmp.le.s32.totalorder 2, %s16
      // Predicated region
      $region49: #{tpu_custom_call.1} parent=5 // pred_check
        %p5025 = pneg %p5024
      $region50: #{tpu_custom_call.1} parent=5 // pred_check_branch
        %5027 = sbr.rel (%p5025) target = $region52
      $region51: #{tpu_custom_call.1} parent=5 // pred_region
        %s5028 = ssub.s32 %s16, 2
        // Predicated region
        $region53: #{tpu_custom_call.1} parent=51 // pred_check
          %p5029 = pneg %p139
        $region54: #{tpu_custom_call.1} parent=51 // pred_check_branch
          %5031 = sbr.rel (%p5029) target = $region56
        $region55: #{tpu_custom_call.1} parent=51 // pred_region
          %s5032 = smul.u32 32, %s22
          %p5033 = scmp.lt.s32.totalorder %s5032, 63
          %s5034 = scalar_select %p5033, %s5032, 63
          %s5035 = smul.addr %s5034, 8
          %s5036 = scalar_lea.vmem %s4, %s5035
        $region56: #{tpu_custom_call.1} parent=51 // pred_fallthru
          _
        // Predicated region
        $region57: #{tpu_custom_call.1} parent=51 // pred_check
          %p5037 = pneg %p165
        $region58: #{tpu_custom_call.1} parent=51 // pred_check_branch
          %5039 = sbr.rel (%p5037) target = $region60
        $region59: #{tpu_custom_call.1} parent=51 // pred_region
          %s5040 = smul.u32 32, %s22
          %p5041 = scmp.lt.s32.totalorder %s5040, 63
          %s5042 = scalar_select %p5041, %s5040, 63
          %s5043 = smul.addr %s5042, 8
          %s5044 = scalar_lea.vmem %s5, %s5043
        $region60: #{tpu_custom_call.1} parent=51 // pred_fallthru
          _
        // Predicated region
        $region61: #{tpu_custom_call.1} parent=51 // pred_check
          %p5045 = pneg %p191
        $region62: #{tpu_custom_call.1} parent=51 // pred_check_branch
          %5047 = sbr.rel (%p5045) target = $region64
        $region63: #{tpu_custom_call.1} parent=51 // pred_region
          %s5048 = sand.u32 %s176, 1
          %s5049 = scalar_lea.sflag [#allocation3], %s5048
          %s5050 = sand.u32 %s176, 1
          %s5051 = smul.addr %s5050, 4
          %s5052 = scalar_lea.vmem [#allocation2], %s5051
          %5053 = dma.done %s5049, 64
        $region64: #{tpu_custom_call.1} parent=51 // pred_fallthru
          _
      $region52: #{tpu_custom_call.1} parent=5 // pred_fallthru
        _
    $region6: #{tpu_custom_call.1} parent=1 // loop_footer
      %s20 = sadd.s32 1, %s16
    $region7: #{tpu_custom_call.1} parent=1 // loop_footer_branch
      %15 = sbr.rel target = $region3
    $region8: #{tpu_custom_call.1} parent=1 // loop_exit
      _
    %5054 = vsyncpa [#allocation3], 1
    %s5055 = scalar_lea.sflag [#allocation3], 1
    %5056 = vsyncpa %s5055, 1

</llo_original>
